<compile_context>
chip_gen: v7x
topology: tpu7x:2x2x1
jax: 0.10.0
libtpu: 0.0.40
codegen_flags: <defaults>
</compile_context>

<pallas_src>
import jax
import jax.numpy as jnp
from jax.experimental import pallas as pl
from jax.experimental.pallas import tpu as pltpu


# ----------------------------------------------------------------------------
# Fused Pallas kernel: 3 BiLSTM layers + dense sum + final Linear
# ----------------------------------------------------------------------------

def _fused_bilstm_dense_kernel(
    x1_ref,                      # (T*B, D)   bf16  time-major embedded input
    w1_ref, b1_ref, u1_ref,      # (D, 8H) bf16, (1, 8H) f32, (2H, 8H) bf16
    w2_ref, b2_ref, u2_ref,      # (2H, 8H) bf16, (1, 8H) f32, (2H, 8H) bf16
    w3_ref, b3_ref, u3_ref,      # (4H, 8H) bf16, (1, 8H) f32, (2H, 8H) bf16
    fcw_ref, fcb_ref,            # (2H, C) bf16, (1, C) f32
    logit_ref,                   # (B, C) f32 output
    slab_ref,                    # (T*B, 4H) f32 VMEM scratch: [h1f|h1b|h2f|h2b]
):
    f32, bf16 = jnp.float32, jnp.bfloat16
    B, _ = logit_ref.shape
    TB, four_h = slab_ref.shape
    H = four_h // 4
    T = TB // B
    G = 8 * H                                       # combined fwd+bwd gate width

    # Lane masks (computed once, hoisted off the recurrence).
    col_g = jax.lax.broadcasted_iota(jnp.int32, (B, G), 1)
    fwd_gate_mask = (col_g % (2 * H)) < H           # fwd half of each 2H gate group
    col_h = jax.lax.broadcasted_iota(jnp.int32, (B, 2 * H), 1)
    fwd_half_mask = col_h < H                       # fwd half of [h_f | h_b]

    def bidir_layer(proj, u, out_col):
        """Fused forward+backward LSTM recurrence.

        proj: (T*B, 8H) f32 batched gate pre-activations (bias folded in),
              gate columns grouped [i_f i_b | f_f f_b | g_f g_b | o_f o_b].
        u:    (2H, 8H) bf16 block-diagonal recurrent weight for [h_f | h_b].
        out_col: lane offset in the slab where [h_f(t) | h_b(t)] is stored
                 (None for the last layer, whose sequence is not reused).
        Returns (B, 2H) f32 = [h_f(T-1) | h_b(T-1)]  (== out[:, -1, :]).
        """
        h = jnp.zeros((B, 2 * H), f32)
        c = jnp.zeros((B, 2 * H), f32)
        h_first = None
        for s in range(T):                          # fully unrolled, T static
            # fwd consumes time s, bwd consumes time T-1-s (independent chains)
            p_f = proj[s * B:(s + 1) * B, :]
            p_b = proj[(T - 1 - s) * B:(T - s) * B, :]
            gin = jnp.where(fwd_gate_mask, p_f, p_b)
            gates = gin + jnp.dot(h.astype(bf16), u, preferred_element_type=f32)
            i_g = jax.nn.sigmoid(gates[:, 0:2 * H])
            f_g = jax.nn.sigmoid(gates[:, 2 * H:4 * H])
            g_g = jnp.tanh(gates[:, 4 * H:6 * H])
            o_g = jax.nn.sigmoid(gates[:, 6 * H:8 * H])
            c = f_g * c + i_g * g_g
            h = o_g * jnp.tanh(c)
            if out_col is not None:                 # lane-pack into the VMEM slab
                slab_ref[s * B:(s + 1) * B, out_col:out_col + H] = h[:, 0:H]
                slab_ref[(T - 1 - s) * B:(T - s) * B,
                         out_col + H:out_col + 2 * H] = h[:, H:2 * H]
            if s == 0:
                h_first = h
        # final fwd state h_f(T-1) is in `h` (step T-1); the bwd state for the
        # last *time* index, h_b(T-1), was produced at the first loop step.
        return jnp.where(fwd_half_mask, h, h_first)

    # ---- layer 1: one batched input projection over all T*B rows ----
    proj1 = jnp.dot(x1_ref[...], w1_ref[...],
                    preferred_element_type=f32) + b1_ref[...]
    last1 = bidir_layer(proj1, u1_ref[...], 0)

    # ---- layer 2: input = out1 = slab[:, 0:2H] ----
    x2 = slab_ref[:, 0:2 * H].astype(bf16)
    proj2 = jnp.dot(x2, w2_ref[...], preferred_element_type=f32) + b2_ref[...]
    last2 = bidir_layer(proj2, u2_ref[...], 2 * H)

    # ---- layer 3: input = concat([out1, out2]) = the whole slab ----
    x3 = slab_ref[...].astype(bf16)
    proj3 = jnp.dot(x3, w3_ref[...], preferred_element_type=f32) + b3_ref[...]
    last3 = bidir_layer(proj3, u3_ref[...], None)

    # ---- out = out1 + out2 + out3, take last timestep, final Linear ----
    s_last = last1 + last2 + last3                  # (B, 2H) f32
    logits = jnp.dot(s_last.astype(bf16), fcw_ref[...],
                     preferred_element_type=f32) + fcb_ref[...]
    logit_ref[...] = logits.astype(logit_ref.dtype)


# ----------------------------------------------------------------------------
# Wrapper: weight re-layout (done once, under jit) + single pallas_call
# ----------------------------------------------------------------------------

def _group_gate_cols(a_f, a_b, H):
    """(F,4H) fwd + (F,4H) bwd -> (F,8H), columns grouped by gate:
       [i_f i_b | f_f f_b | g_f g_b | o_f o_b], each block H wide."""
    F = a_f.shape[0]
    return jnp.stack(
        [a_f.reshape(F, 4, H), a_b.reshape(F, 4, H)], axis=2).reshape(F, 8 * H)


def _block_diag_whh(w_f, w_b, H):
    """(H,4H) fwd + (H,4H) bwd -> (2H,8H) block-diagonal recurrent weight
       acting on the lane-stacked state [h_f | h_b]."""
    z = jnp.zeros((H, 4, H), w_f.dtype)
    top = jnp.stack([w_f.reshape(H, 4, H), z], axis=2).reshape(H, 8 * H)
    bot = jnp.stack([z, w_b.reshape(H, 4, H)], axis=2).reshape(H, 8 * H)
    return jnp.concatenate([top, bot], axis=0)


def bilstm_dense_forward(params, x_ids):
    B, T = x_ids.shape
    H = params["lstm1"]["w_hh_f"].shape[0]
    C = params["fc_w"].shape[1]
    f32, bf16 = jnp.float32, jnp.bfloat16

    # Embedding gather only (no full-vocab projection); time-major (T*B, D).
    x_tm = jnp.transpose(params["embed"][x_ids], (1, 0, 2))
    x_tm = x_tm.reshape(T * B, -1).astype(bf16)

    def prep(p):
        w = _group_gate_cols(p["w_ih_f"], p["w_ih_b"], H).astype(bf16)
        b = _group_gate_cols(p["b_f"], p["b_b"], H).astype(f32)
        u = _block_diag_whh(p["w_hh_f"], p["w_hh_b"], H).astype(bf16)
        return w, b, u

    w1, b1, u1 = prep(params["lstm1"])
    w2, b2, u2 = prep(params["lstm2"])
    w3, b3, u3 = prep(params["lstm3"])
    fcw = params["fc_w"].astype(bf16)
    fcb = params["fc_b"].reshape(1, C).astype(f32)

    args = (x_tm, w1, b1, u1, w2, b2, u2, w3, b3, u3, fcw, fcb)
    return pl.pallas_call(
        _fused_bilstm_dense_kernel,
        out_shape=jax.ShapeDtypeStruct((B, C), f32),
        in_specs=[pl.BlockSpec(memory_space=pltpu.MemorySpace.VMEM)
                  for _ in args],
        out_specs=pl.BlockSpec(memory_space=pltpu.MemorySpace.VMEM),
        scratch_shapes=[pltpu.VMEM((T * B, 4 * H), f32)],
    )(*args)


# ----------------------------------------------------------------------------
# Deterministic parameter init (shapes follow the PyTorch module, N=1)
# ----------------------------------------------------------------------------

def _init_bilstm_params(key, d_in, H):
    ks = jax.random.split(key, 6)
    k = 1.0 / jnp.sqrt(H)
    u = lambda kk, shape: jax.random.uniform(kk, shape, jnp.float32, -k, k)
    return {
        "w_ih_f": u(ks[0], (d_in, 4 * H)),
        "w_hh_f": u(ks[1], (H, 4 * H)),
        "b_f":    u(ks[2], (1, 4 * H)),     # corresponds to PyTorch b_ih + b_hh
        "w_ih_b": u(ks[3], (d_in, 4 * H)),
        "w_hh_b": u(ks[4], (H, 4 * H)),
        "b_b":    u(ks[5], (1, 4 * H)),
    }


def init_params(key, V, D, H, C):
    ks = jax.random.split(key, 6)
    return {
        "embed": jax.random.normal(ks[0], (V, D), jnp.float32) * 0.1,
        "lstm1": _init_bilstm_params(ks[1], D, H),
        "lstm2": _init_bilstm_params(ks[2], 2 * H, H),
        "lstm3": _init_bilstm_params(ks[3], 4 * H, H),
        "fc_w":  jax.random.normal(ks[4], (2 * H, C), jnp.float32) * 0.1,
        "fc_b":  jax.random.normal(ks[5], (C,), jnp.float32) * 0.1,
    }


# ----------------------------------------------------------------------------
# Pure-JAX reference (lax.scan), parameterized by the matmul precision policy
# ----------------------------------------------------------------------------

def _ref_lstm_direction(x_tbd, w_ih, w_hh, b, mm):
    T, B, _ = x_tbd.shape
    H = w_hh.shape[0]

    def step(carry, x_t):
        h, c = carry
        gates = mm(x_t, w_ih) + mm(h, w_hh) + b
        i = jax.nn.sigmoid(gates[:, :H])
        f = jax.nn.sigmoid(gates[:, H:2 * H])
        g = jnp.tanh(gates[:, 2 * H:3 * H])
        o = jax.nn.sigmoid(gates[:, 3 * H:])
        c = f * c + i * g
        h = o * jnp.tanh(c)
        return (h, c), h

    init = (jnp.zeros((B, H), jnp.float32), jnp.zeros((B, H), jnp.float32))
    _, hs = jax.lax.scan(step, init, x_tbd)
    return hs


def _ref_bilstm(x_btd, p, mm):
    xt = jnp.transpose(x_btd, (1, 0, 2))
    hf = _ref_lstm_direction(xt, p["w_ih_f"], p["w_hh_f"], p["b_f"], mm)
    hb = jnp.flip(_ref_lstm_direction(jnp.flip(xt, 0),
                                      p["w_ih_b"], p["w_hh_b"], p["b_b"], mm), 0)
    return jnp.transpose(jnp.concatenate([hf, hb], -1), (1, 0, 2))


def _ref_forward(params, x_ids, mm):
    emb = params["embed"][x_ids]
    out1 = _ref_bilstm(emb, params["lstm1"], mm)
    out2 = _ref_bilstm(out1, params["lstm2"], mm)
    out3 = _ref_bilstm(jnp.concatenate([out1, out2], 2), params["lstm3"], mm)
    out = out1 + out2 + out3
    return mm(out[:, -1, :], params["fc_w"]) + params["fc_b"]


# ----------------------------------------------------------------------------

if __name__ == "__main__":
    V, D, H, C = 50, 16, 32, 4        # embed_num, embed_dim, hidden_size, class_num
    B, T = 2, 8                       # batch, sequence length

    key = jax.random.PRNGKey(0)
    k_param, k_data = jax.random.split(key)
    params = init_params(k_param, V, D, H, C)
    x_ids = jax.random.randint(k_data, (B, T), 0, V, dtype=jnp.int32)

    logits = jax.jit(bilstm_dense_forward)(params, x_ids)
    logits = jax.block_until_ready(logits)
    assert logits.shape == (B, C)

    # Tight check vs a precision-matched reference (bf16 matmul operands, f32
    # accumulation / elementwise — the same policy the kernel uses).
    mm_bf16 = lambda a, b: jnp.dot(a.astype(jnp.bfloat16), b.astype(jnp.bfloat16),
                                   preferred_element_type=jnp.float32)
    ref_matched = _ref_forward(params, x_ids, mm_bf16)
    assert jnp.allclose(logits, ref_matched, atol=2e-3, rtol=2e-3), (logits, ref_matched)

    # Loose check vs the full-f32 reference (difference = bf16 matmul rounding only).
    mm_f32 = lambda a, b: jnp.dot(a, b, preferred_element_type=jnp.float32)
    ref_f32 = _ref_forward(params, x_ids, mm_f32)
    assert jnp.allclose(logits, ref_f32, atol=5e-2, rtol=5e-2), (logits, ref_f32)

    print("KERNEL_OK")
</pallas_src>

<mosaic_0001>
module attributes {stable_mosaic.version = 11 : i64} {
  func.func @_fused_bilstm_dense_kernel(%arg0: memref<16x16xbf16, #tpu.memory_space<vmem>>, %arg1: memref<16x256xbf16, #tpu.memory_space<vmem>>, %arg2: memref<1x256xf32, #tpu.memory_space<vmem>>, %arg3: memref<64x256xbf16, #tpu.memory_space<vmem>>, %arg4: memref<64x256xbf16, #tpu.memory_space<vmem>>, %arg5: memref<1x256xf32, #tpu.memory_space<vmem>>, %arg6: memref<64x256xbf16, #tpu.memory_space<vmem>>, %arg7: memref<128x256xbf16, #tpu.memory_space<vmem>>, %arg8: memref<1x256xf32, #tpu.memory_space<vmem>>, %arg9: memref<64x256xbf16, #tpu.memory_space<vmem>>, %arg10: memref<64x4xbf16, #tpu.memory_space<vmem>>, %arg11: memref<1x4xf32, #tpu.memory_space<vmem>>, %arg12: memref<2x4xf32, #tpu.memory_space<vmem>>, %arg13: memref<16x128xf32, #tpu.memory_space<vmem>>) attributes {dimension_semantics = [], scalar_prefetch = 0 : i64, scratch_operands = 1 : i64, tpu.core_type = #tpu.core_type<tc>} {
    %0 = tpu.iota {dimensions = array<i32: 1>} : vector<2x256xi32>
    %c64_i32 = arith.constant 64 : i32
    %c0_i32 = arith.constant 0 : i32
    %1 = arith.cmpi eq, %c64_i32, %c0_i32 : i32
    %c1_i32 = arith.constant 1 : i32
    %2 = arith.select %1, %c1_i32, %c64_i32 : i32
    %3 = vector.broadcast %2 : i32 to vector<2x256xi32>
    %4 = arith.remsi %0, %3 : vector<2x256xi32>
    %c0_i32_0 = arith.constant 0 : i32
    %5 = vector.broadcast %c0_i32_0 : i32 to vector<2x256xi32>
    %6 = arith.cmpi ne, %4, %5 : vector<2x256xi32>
    %c0_i32_1 = arith.constant 0 : i32
    %7 = vector.broadcast %c0_i32_1 : i32 to vector<2x256xi32>
    %8 = arith.cmpi slt, %4, %7 : vector<2x256xi32>
    %c0_i32_2 = arith.constant 0 : i32
    %9 = arith.cmpi slt, %2, %c0_i32_2 : i32
    %10 = vector.broadcast %9 : i1 to vector<2x256xi1>
    %11 = vector.broadcast %10 : vector<2x256xi1> to vector<2x256xi1>
    %12 = arith.xori %8, %11 : vector<2x256xi1>
    %13 = arith.andi %12, %6 : vector<2x256xi1>
    %14 = vector.broadcast %2 : i32 to vector<2x256xi32>
    %15 = arith.addi %4, %14 : vector<2x256xi32>
    %16 = arith.select %13, %15, %4 : vector<2x256xi1>, vector<2x256xi32>
    %c32_i32 = arith.constant 32 : i32
    %17 = vector.broadcast %c32_i32 : i32 to vector<2x256xi32>
    %18 = arith.cmpi slt, %16, %17 : vector<2x256xi32>
    %19 = tpu.iota {dimensions = array<i32: 1>} : vector<2x64xi32>
    %c32_i32_3 = arith.constant 32 : i32
    %20 = vector.broadcast %c32_i32_3 : i32 to vector<2x64xi32>
    %21 = arith.cmpi slt, %19, %20 : vector<2x64xi32>
    %c0 = arith.constant 0 : index
    %c0_4 = arith.constant 0 : index
    %22 = vector.load %arg0[%c0, %c0_4] : memref<16x16xbf16, #tpu.memory_space<vmem>>, vector<16x16xbf16>
    %c0_5 = arith.constant 0 : index
    %c0_6 = arith.constant 0 : index
    %23 = vector.load %arg1[%c0_5, %c0_6] : memref<16x256xbf16, #tpu.memory_space<vmem>>, vector<16x256xbf16>
    %cst = arith.constant dense<0.000000e+00> : vector<16x256xf32>
    %24 = tpu.matmul %22, %23, %cst {dimension_numbers = #tpu.dot_dimension_numbers<[1], [0], [0], [1], [0, 0, 1, 1], [], []>} : vector<16x16xbf16>, vector<16x256xbf16>, vector<16x256xf32> -> vector<16x256xf32>
    %c0_7 = arith.constant 0 : index
    %c0_8 = arith.constant 0 : index
    %25 = vector.load %arg2[%c0_7, %c0_8] : memref<1x256xf32, #tpu.memory_space<vmem>>, vector<1x256xf32>
    %26 = vector.broadcast %25 : vector<1x256xf32> to vector<16x256xf32>
    %27 = arith.addf %24, %26 : vector<16x256xf32>
    %c0_9 = arith.constant 0 : index
    %c0_10 = arith.constant 0 : index
    %28 = vector.load %arg3[%c0_9, %c0_10] : memref<64x256xbf16, #tpu.memory_space<vmem>>, vector<64x256xbf16>
    %cst_11 = arith.constant 0.000000e+00 : f32
    %29 = vector.broadcast %cst_11 : f32 to vector<2x64xf32>
    %cst_12 = arith.constant 0.000000e+00 : f32
    %30 = vector.broadcast %cst_12 : f32 to vector<2x64xf32>
    %31 = vector.extract_strided_slice %27 {offsets = [0, 0], sizes = [2, 256], strides = [1, 1]} : vector<16x256xf32> to vector<2x256xf32>
    %32 = vector.extract_strided_slice %27 {offsets = [14, 0], sizes = [2, 256], strides = [1, 1]} : vector<16x256xf32> to vector<2x256xf32>
    %33 = arith.select %18, %31, %32 : vector<2x256xi1>, vector<2x256xf32>
    %34 = arith.truncf %29 : vector<2x64xf32> to vector<2x64xbf16>
    %cst_13 = arith.constant dense<0.000000e+00> : vector<2x256xf32>
    %35 = tpu.matmul %34, %28, %cst_13 {dimension_numbers = #tpu.dot_dimension_numbers<[1], [0], [0], [1], [0, 0, 1, 1], [], []>} : vector<2x64xbf16>, vector<64x256xbf16>, vector<2x256xf32> -> vector<2x256xf32>
    %36 = arith.addf %33, %35 : vector<2x256xf32>
    %37 = vector.extract_strided_slice %36 {offsets = [0, 0], sizes = [2, 64], strides = [1, 1]} : vector<2x256xf32> to vector<2x64xf32>
    %38 = arith.negf %37 : vector<2x64xf32>
    %39 = math.exp %38 : vector<2x64xf32>
    %cst_14 = arith.constant 1.000000e+00 : f32
    %40 = vector.broadcast %cst_14 : f32 to vector<2x64xf32>
    %41 = arith.addf %40, %39 : vector<2x64xf32>
    %42 = arith.divf %40, %41 : vector<2x64xf32>
    %43 = vector.extract_strided_slice %36 {offsets = [0, 64], sizes = [2, 64], strides = [1, 1]} : vector<2x256xf32> to vector<2x64xf32>
    %44 = arith.negf %43 : vector<2x64xf32>
    %45 = math.exp %44 : vector<2x64xf32>
    %cst_15 = arith.constant 1.000000e+00 : f32
    %46 = vector.broadcast %cst_15 : f32 to vector<2x64xf32>
    %47 = arith.addf %46, %45 : vector<2x64xf32>
    %48 = arith.divf %46, %47 : vector<2x64xf32>
    %49 = vector.extract_strided_slice %36 {offsets = [0, 128], sizes = [2, 64], strides = [1, 1]} : vector<2x256xf32> to vector<2x64xf32>
    %50 = math.tanh %49 : vector<2x64xf32>
    %51 = vector.extract_strided_slice %36 {offsets = [0, 192], sizes = [2, 64], strides = [1, 1]} : vector<2x256xf32> to vector<2x64xf32>
    %52 = arith.negf %51 : vector<2x64xf32>
    %53 = math.exp %52 : vector<2x64xf32>
    %cst_16 = arith.constant 1.000000e+00 : f32
    %54 = vector.broadcast %cst_16 : f32 to vector<2x64xf32>
    %55 = arith.addf %54, %53 : vector<2x64xf32>
    %56 = arith.divf %54, %55 : vector<2x64xf32>
    %57 = arith.mulf %48, %30 : vector<2x64xf32>
    %58 = arith.mulf %42, %50 : vector<2x64xf32>
    %59 = arith.addf %57, %58 : vector<2x64xf32>
    %60 = math.tanh %59 : vector<2x64xf32>
    %61 = arith.mulf %56, %60 : vector<2x64xf32>
    %62 = vector.extract_strided_slice %61 {offsets = [0, 0], sizes = [2, 32], strides = [1, 1]} : vector<2x64xf32> to vector<2x32xf32>
    %c0_17 = arith.constant 0 : index
    %c0_18 = arith.constant 0 : index
    %63 = vector.load %arg13[%c0_17, %c0_18] : memref<16x128xf32, #tpu.memory_space<vmem>>, vector<2x32xf32>
    tpu.vector_store %arg13[%c0_17, %c0_18], %62 {strides = array<i32>} : memref<16x128xf32, #tpu.memory_space<vmem>>, vector<2x32xf32>,
    %64 = vector.extract_strided_slice %61 {offsets = [0, 32], sizes = [2, 32], strides = [1, 1]} : vector<2x64xf32> to vector<2x32xf32>
    %c14 = arith.constant 14 : index
    %c32 = arith.constant 32 : index
    %65 = vector.load %arg13[%c14, %c32] : memref<16x128xf32, #tpu.memory_space<vmem>>, vector<2x32xf32>
    tpu.vector_store %arg13[%c14, %c32], %64 {strides = array<i32>} : memref<16x128xf32, #tpu.memory_space<vmem>>, vector<2x32xf32>,
    %66 = vector.extract_strided_slice %27 {offsets = [2, 0], sizes = [2, 256], strides = [1, 1]} : vector<16x256xf32> to vector<2x256xf32>
    %67 = vector.extract_strided_slice %27 {offsets = [12, 0], sizes = [2, 256], strides = [1, 1]} : vector<16x256xf32> to vector<2x256xf32>
    %68 = arith.select %18, %66, %67 : vector<2x256xi1>, vector<2x256xf32>
    %69 = arith.truncf %61 : vector<2x64xf32> to vector<2x64xbf16>
    %cst_19 = arith.constant dense<0.000000e+00> : vector<2x256xf32>
    %70 = tpu.matmul %69, %28, %cst_19 {dimension_numbers = #tpu.dot_dimension_numbers<[1], [0], [0], [1], [0, 0, 1, 1], [], []>} : vector<2x64xbf16>, vector<64x256xbf16>, vector<2x256xf32> -> vector<2x256xf32>
    %71 = arith.addf %68, %70 : vector<2x256xf32>
    %72 = vector.extract_strided_slice %71 {offsets = [0, 0], sizes = [2, 64], strides = [1, 1]} : vector<2x256xf32> to vector<2x64xf32>
    %73 = arith.negf %72 : vector<2x64xf32>
    %74 = math.exp %73 : vector<2x64xf32>
    %cst_20 = arith.constant 1.000000e+00 : f32
    %75 = vector.broadcast %cst_20 : f32 to vector<2x64xf32>
    %76 = arith.addf %75, %74 : vector<2x64xf32>
    %77 = arith.divf %75, %76 : vector<2x64xf32>
    %78 = vector.extract_strided_slice %71 {offsets = [0, 64], sizes = [2, 64], strides = [1, 1]} : vector<2x256xf32> to vector<2x64xf32>
    %79 = arith.negf %78 : vector<2x64xf32>
    %80 = math.exp %79 : vector<2x64xf32>
    %cst_21 = arith.constant 1.000000e+00 : f32
    %81 = vector.broadcast %cst_21 : f32 to vector<2x64xf32>
    %82 = arith.addf %81, %80 : vector<2x64xf32>
    %83 = arith.divf %81, %82 : vector<2x64xf32>
    %84 = vector.extract_strided_slice %71 {offsets = [0, 128], sizes = [2, 64], strides = [1, 1]} : vector<2x256xf32> to vector<2x64xf32>
    %85 = math.tanh %84 : vector<2x64xf32>
    %86 = vector.extract_strided_slice %71 {offsets = [0, 192], sizes = [2, 64], strides = [1, 1]} : vector<2x256xf32> to vector<2x64xf32>
    %87 = arith.negf %86 : vector<2x64xf32>
    %88 = math.exp %87 : vector<2x64xf32>
    %cst_22 = arith.constant 1.000000e+00 : f32
    %89 = vector.broadcast %cst_22 : f32 to vector<2x64xf32>
    %90 = arith.addf %89, %88 : vector<2x64xf32>
    %91 = arith.divf %89, %90 : vector<2x64xf32>
    %92 = arith.mulf %83, %59 : vector<2x64xf32>
    %93 = arith.mulf %77, %85 : vector<2x64xf32>
    %94 = arith.addf %92, %93 : vector<2x64xf32>
    %95 = math.tanh %94 : vector<2x64xf32>
    %96 = arith.mulf %91, %95 : vector<2x64xf32>
    %97 = vector.extract_strided_slice %96 {offsets = [0, 0], sizes = [2, 32], strides = [1, 1]} : vector<2x64xf32> to vector<2x32xf32>
    %c2 = arith.constant 2 : index
    %c0_23 = arith.constant 0 : index
    %98 = vector.load %arg13[%c2, %c0_23] : memref<16x128xf32, #tpu.memory_space<vmem>>, vector<2x32xf32>
    tpu.vector_store %arg13[%c2, %c0_23], %97 {strides = array<i32>} : memref<16x128xf32, #tpu.memory_space<vmem>>, vector<2x32xf32>,
    %99 = vector.extract_strided_slice %96 {offsets = [0, 32], sizes = [2, 32], strides = [1, 1]} : vector<2x64xf32> to vector<2x32xf32>
    %c12 = arith.constant 12 : index
    %c32_24 = arith.constant 32 : index
    %100 = vector.load %arg13[%c12, %c32_24] : memref<16x128xf32, #tpu.memory_space<vmem>>, vector<2x32xf32>
    tpu.vector_store %arg13[%c12, %c32_24], %99 {strides = array<i32>} : memref<16x128xf32, #tpu.memory_space<vmem>>, vector<2x32xf32>,
    %101 = vector.extract_strided_slice %27 {offsets = [4, 0], sizes = [2, 256], strides = [1, 1]} : vector<16x256xf32> to vector<2x256xf32>
    %102 = vector.extract_strided_slice %27 {offsets = [10, 0], sizes = [2, 256], strides = [1, 1]} : vector<16x256xf32> to vector<2x256xf32>
    %103 = arith.select %18, %101, %102 : vector<2x256xi1>, vector<2x256xf32>
    %104 = arith.truncf %96 : vector<2x64xf32> to vector<2x64xbf16>
    %cst_25 = arith.constant dense<0.000000e+00> : vector<2x256xf32>
    %105 = tpu.matmul %104, %28, %cst_25 {dimension_numbers = #tpu.dot_dimension_numbers<[1], [0], [0], [1], [0, 0, 1, 1], [], []>} : vector<2x64xbf16>, vector<64x256xbf16>, vector<2x256xf32> -> vector<2x256xf32>
    %106 = arith.addf %103, %105 : vector<2x256xf32>
    %107 = vector.extract_strided_slice %106 {offsets = [0, 0], sizes = [2, 64], strides = [1, 1]} : vector<2x256xf32> to vector<2x64xf32>
    %108 = arith.negf %107 : vector<2x64xf32>
    %109 = math.exp %108 : vector<2x64xf32>
    %cst_26 = arith.constant 1.000000e+00 : f32
    %110 = vector.broadcast %cst_26 : f32 to vector<2x64xf32>
    %111 = arith.addf %110, %109 : vector<2x64xf32>
    %112 = arith.divf %110, %111 : vector<2x64xf32>
    %113 = vector.extract_strided_slice %106 {offsets = [0, 64], sizes = [2, 64], strides = [1, 1]} : vector<2x256xf32> to vector<2x64xf32>
    %114 = arith.negf %113 : vector<2x64xf32>
    %115 = math.exp %114 : vector<2x64xf32>
    %cst_27 = arith.constant 1.000000e+00 : f32
    %116 = vector.broadcast %cst_27 : f32 to vector<2x64xf32>
    %117 = arith.addf %116, %115 : vector<2x64xf32>
    %118 = arith.divf %116, %117 : vector<2x64xf32>
    %119 = vector.extract_strided_slice %106 {offsets = [0, 128], sizes = [2, 64], strides = [1, 1]} : vector<2x256xf32> to vector<2x64xf32>
    %120 = math.tanh %119 : vector<2x64xf32>
    %121 = vector.extract_strided_slice %106 {offsets = [0, 192], sizes = [2, 64], strides = [1, 1]} : vector<2x256xf32> to vector<2x64xf32>
    %122 = arith.negf %121 : vector<2x64xf32>
    %123 = math.exp %122 : vector<2x64xf32>
    %cst_28 = arith.constant 1.000000e+00 : f32
    %124 = vector.broadcast %cst_28 : f32 to vector<2x64xf32>
    %125 = arith.addf %124, %123 : vector<2x64xf32>
    %126 = arith.divf %124, %125 : vector<2x64xf32>
    %127 = arith.mulf %118, %94 : vector<2x64xf32>
    %128 = arith.mulf %112, %120 : vector<2x64xf32>
    %129 = arith.addf %127, %128 : vector<2x64xf32>
    %130 = math.tanh %129 : vector<2x64xf32>
    %131 = arith.mulf %126, %130 : vector<2x64xf32>
    %132 = vector.extract_strided_slice %131 {offsets = [0, 0], sizes = [2, 32], strides = [1, 1]} : vector<2x64xf32> to vector<2x32xf32>
    %c4 = arith.constant 4 : index
    %c0_29 = arith.constant 0 : index
    %133 = vector.load %arg13[%c4, %c0_29] : memref<16x128xf32, #tpu.memory_space<vmem>>, vector<2x32xf32>
    tpu.vector_store %arg13[%c4, %c0_29], %132 {strides = array<i32>} : memref<16x128xf32, #tpu.memory_space<vmem>>, vector<2x32xf32>,
    %134 = vector.extract_strided_slice %131 {offsets = [0, 32], sizes = [2, 32], strides = [1, 1]} : vector<2x64xf32> to vector<2x32xf32>
    %c10 = arith.constant 10 : index
    %c32_30 = arith.constant 32 : index
    %135 = vector.load %arg13[%c10, %c32_30] : memref<16x128xf32, #tpu.memory_space<vmem>>, vector<2x32xf32>
    tpu.vector_store %arg13[%c10, %c32_30], %134 {strides = array<i32>} : memref<16x128xf32, #tpu.memory_space<vmem>>, vector<2x32xf32>,
    %136 = vector.extract_strided_slice %27 {offsets = [6, 0], sizes = [2, 256], strides = [1, 1]} : vector<16x256xf32> to vector<2x256xf32>
    %137 = vector.extract_strided_slice %27 {offsets = [8, 0], sizes = [2, 256], strides = [1, 1]} : vector<16x256xf32> to vector<2x256xf32>
    %138 = arith.select %18, %136, %137 : vector<2x256xi1>, vector<2x256xf32>
    %139 = arith.truncf %131 : vector<2x64xf32> to vector<2x64xbf16>
    %cst_31 = arith.constant dense<0.000000e+00> : vector<2x256xf32>
    %140 = tpu.matmul %139, %28, %cst_31 {dimension_numbers = #tpu.dot_dimension_numbers<[1], [0], [0], [1], [0, 0, 1, 1], [], []>} : vector<2x64xbf16>, vector<64x256xbf16>, vector<2x256xf32> -> vector<2x256xf32>
    %141 = arith.addf %138, %140 : vector<2x256xf32>
    %142 = vector.extract_strided_slice %141 {offsets = [0, 0], sizes = [2, 64], strides = [1, 1]} : vector<2x256xf32> to vector<2x64xf32>
    %143 = arith.negf %142 : vector<2x64xf32>
    %144 = math.exp %143 : vector<2x64xf32>
    %cst_32 = arith.constant 1.000000e+00 : f32
    %145 = vector.broadcast %cst_32 : f32 to vector<2x64xf32>
    %146 = arith.addf %145, %144 : vector<2x64xf32>
    %147 = arith.divf %145, %146 : vector<2x64xf32>
    %148 = vector.extract_strided_slice %141 {offsets = [0, 64], sizes = [2, 64], strides = [1, 1]} : vector<2x256xf32> to vector<2x64xf32>
    %149 = arith.negf %148 : vector<2x64xf32>
    %150 = math.exp %149 : vector<2x64xf32>
    %cst_33 = arith.constant 1.000000e+00 : f32
    %151 = vector.broadcast %cst_33 : f32 to vector<2x64xf32>
    %152 = arith.addf %151, %150 : vector<2x64xf32>
    %153 = arith.divf %151, %152 : vector<2x64xf32>
    %154 = vector.extract_strided_slice %141 {offsets = [0, 128], sizes = [2, 64], strides = [1, 1]} : vector<2x256xf32> to vector<2x64xf32>
    %155 = math.tanh %154 : vector<2x64xf32>
    %156 = vector.extract_strided_slice %141 {offsets = [0, 192], sizes = [2, 64], strides = [1, 1]} : vector<2x256xf32> to vector<2x64xf32>
    %157 = arith.negf %156 : vector<2x64xf32>
    %158 = math.exp %157 : vector<2x64xf32>
    %cst_34 = arith.constant 1.000000e+00 : f32
    %159 = vector.broadcast %cst_34 : f32 to vector<2x64xf32>
    %160 = arith.addf %159, %158 : vector<2x64xf32>
    %161 = arith.divf %159, %160 : vector<2x64xf32>
    %162 = arith.mulf %153, %129 : vector<2x64xf32>
    %163 = arith.mulf %147, %155 : vector<2x64xf32>
    %164 = arith.addf %162, %163 : vector<2x64xf32>
    %165 = math.tanh %164 : vector<2x64xf32>
    %166 = arith.mulf %161, %165 : vector<2x64xf32>
    %167 = vector.extract_strided_slice %166 {offsets = [0, 0], sizes = [2, 32], strides = [1, 1]} : vector<2x64xf32> to vector<2x32xf32>
    %c6 = arith.constant 6 : index
    %c0_35 = arith.constant 0 : index
    %168 = vector.load %arg13[%c6, %c0_35] : memref<16x128xf32, #tpu.memory_space<vmem>>, vector<2x32xf32>
    tpu.vector_store %arg13[%c6, %c0_35], %167 {strides = array<i32>} : memref<16x128xf32, #tpu.memory_space<vmem>>, vector<2x32xf32>,
    %169 = vector.extract_strided_slice %166 {offsets = [0, 32], sizes = [2, 32], strides = [1, 1]} : vector<2x64xf32> to vector<2x32xf32>
    %c8 = arith.constant 8 : index
    %c32_36 = arith.constant 32 : index
    %170 = vector.load %arg13[%c8, %c32_36] : memref<16x128xf32, #tpu.memory_space<vmem>>, vector<2x32xf32>
    tpu.vector_store %arg13[%c8, %c32_36], %169 {strides = array<i32>} : memref<16x128xf32, #tpu.memory_space<vmem>>, vector<2x32xf32>,
    %171 = vector.extract_strided_slice %27 {offsets = [8, 0], sizes = [2, 256], strides = [1, 1]} : vector<16x256xf32> to vector<2x256xf32>
    %172 = vector.extract_strided_slice %27 {offsets = [6, 0], sizes = [2, 256], strides = [1, 1]} : vector<16x256xf32> to vector<2x256xf32>
    %173 = arith.select %18, %171, %172 : vector<2x256xi1>, vector<2x256xf32>
    %174 = arith.truncf %166 : vector<2x64xf32> to vector<2x64xbf16>
    %cst_37 = arith.constant dense<0.000000e+00> : vector<2x256xf32>
    %175 = tpu.matmul %174, %28, %cst_37 {dimension_numbers = #tpu.dot_dimension_numbers<[1], [0], [0], [1], [0, 0, 1, 1], [], []>} : vector<2x64xbf16>, vector<64x256xbf16>, vector<2x256xf32> -> vector<2x256xf32>
    %176 = arith.addf %173, %175 : vector<2x256xf32>
    %177 = vector.extract_strided_slice %176 {offsets = [0, 0], sizes = [2, 64], strides = [1, 1]} : vector<2x256xf32> to vector<2x64xf32>
    %178 = arith.negf %177 : vector<2x64xf32>
    %179 = math.exp %178 : vector<2x64xf32>
    %cst_38 = arith.constant 1.000000e+00 : f32
    %180 = vector.broadcast %cst_38 : f32 to vector<2x64xf32>
    %181 = arith.addf %180, %179 : vector<2x64xf32>
    %182 = arith.divf %180, %181 : vector<2x64xf32>
    %183 = vector.extract_strided_slice %176 {offsets = [0, 64], sizes = [2, 64], strides = [1, 1]} : vector<2x256xf32> to vector<2x64xf32>
    %184 = arith.negf %183 : vector<2x64xf32>
    %185 = math.exp %184 : vector<2x64xf32>
    %cst_39 = arith.constant 1.000000e+00 : f32
    %186 = vector.broadcast %cst_39 : f32 to vector<2x64xf32>
    %187 = arith.addf %186, %185 : vector<2x64xf32>
    %188 = arith.divf %186, %187 : vector<2x64xf32>
    %189 = vector.extract_strided_slice %176 {offsets = [0, 128], sizes = [2, 64], strides = [1, 1]} : vector<2x256xf32> to vector<2x64xf32>
    %190 = math.tanh %189 : vector<2x64xf32>
    %191 = vector.extract_strided_slice %176 {offsets = [0, 192], sizes = [2, 64], strides = [1, 1]} : vector<2x256xf32> to vector<2x64xf32>
    %192 = arith.negf %191 : vector<2x64xf32>
    %193 = math.exp %192 : vector<2x64xf32>
    %cst_40 = arith.constant 1.000000e+00 : f32
    %194 = vector.broadcast %cst_40 : f32 to vector<2x64xf32>
    %195 = arith.addf %194, %193 : vector<2x64xf32>
    %196 = arith.divf %194, %195 : vector<2x64xf32>
    %197 = arith.mulf %188, %164 : vector<2x64xf32>
    %198 = arith.mulf %182, %190 : vector<2x64xf32>
    %199 = arith.addf %197, %198 : vector<2x64xf32>
    %200 = math.tanh %199 : vector<2x64xf32>
    %201 = arith.mulf %196, %200 : vector<2x64xf32>
    %202 = vector.extract_strided_slice %201 {offsets = [0, 0], sizes = [2, 32], strides = [1, 1]} : vector<2x64xf32> to vector<2x32xf32>
    %c8_41 = arith.constant 8 : index
    %c0_42 = arith.constant 0 : index
    %203 = vector.load %arg13[%c8_41, %c0_42] : memref<16x128xf32, #tpu.memory_space<vmem>>, vector<2x32xf32>
    tpu.vector_store %arg13[%c8_41, %c0_42], %202 {strides = array<i32>} : memref<16x128xf32, #tpu.memory_space<vmem>>, vector<2x32xf32>,
    %204 = vector.extract_strided_slice %201 {offsets = [0, 32], sizes = [2, 32], strides = [1, 1]} : vector<2x64xf32> to vector<2x32xf32>
    %c6_43 = arith.constant 6 : index
    %c32_44 = arith.constant 32 : index
    %205 = vector.load %arg13[%c6_43, %c32_44] : memref<16x128xf32, #tpu.memory_space<vmem>>, vector<2x32xf32>
    tpu.vector_store %arg13[%c6_43, %c32_44], %204 {strides = array<i32>} : memref<16x128xf32, #tpu.memory_space<vmem>>, vector<2x32xf32>,
    %206 = vector.extract_strided_slice %27 {offsets = [10, 0], sizes = [2, 256], strides = [1, 1]} : vector<16x256xf32> to vector<2x256xf32>
    %207 = vector.extract_strided_slice %27 {offsets = [4, 0], sizes = [2, 256], strides = [1, 1]} : vector<16x256xf32> to vector<2x256xf32>
    %208 = arith.select %18, %206, %207 : vector<2x256xi1>, vector<2x256xf32>
    %209 = arith.truncf %201 : vector<2x64xf32> to vector<2x64xbf16>
    %cst_45 = arith.constant dense<0.000000e+00> : vector<2x256xf32>
    %210 = tpu.matmul %209, %28, %cst_45 {dimension_numbers = #tpu.dot_dimension_numbers<[1], [0], [0], [1], [0, 0, 1, 1], [], []>} : vector<2x64xbf16>, vector<64x256xbf16>, vector<2x256xf32> -> vector<2x256xf32>
    %211 = arith.addf %208, %210 : vector<2x256xf32>
    %212 = vector.extract_strided_slice %211 {offsets = [0, 0], sizes = [2, 64], strides = [1, 1]} : vector<2x256xf32> to vector<2x64xf32>
    %213 = arith.negf %212 : vector<2x64xf32>
    %214 = math.exp %213 : vector<2x64xf32>
    %cst_46 = arith.constant 1.000000e+00 : f32
    %215 = vector.broadcast %cst_46 : f32 to vector<2x64xf32>
    %216 = arith.addf %215, %214 : vector<2x64xf32>
    %217 = arith.divf %215, %216 : vector<2x64xf32>
    %218 = vector.extract_strided_slice %211 {offsets = [0, 64], sizes = [2, 64], strides = [1, 1]} : vector<2x256xf32> to vector<2x64xf32>
    %219 = arith.negf %218 : vector<2x64xf32>
    %220 = math.exp %219 : vector<2x64xf32>
    %cst_47 = arith.constant 1.000000e+00 : f32
    %221 = vector.broadcast %cst_47 : f32 to vector<2x64xf32>
    %222 = arith.addf %221, %220 : vector<2x64xf32>
    %223 = arith.divf %221, %222 : vector<2x64xf32>
    %224 = vector.extract_strided_slice %211 {offsets = [0, 128], sizes = [2, 64], strides = [1, 1]} : vector<2x256xf32> to vector<2x64xf32>
    %225 = math.tanh %224 : vector<2x64xf32>
    %226 = vector.extract_strided_slice %211 {offsets = [0, 192], sizes = [2, 64], strides = [1, 1]} : vector<2x256xf32> to vector<2x64xf32>
    %227 = arith.negf %226 : vector<2x64xf32>
    %228 = math.exp %227 : vector<2x64xf32>
    %cst_48 = arith.constant 1.000000e+00 : f32
    %229 = vector.broadcast %cst_48 : f32 to vector<2x64xf32>
    %230 = arith.addf %229, %228 : vector<2x64xf32>
    %231 = arith.divf %229, %230 : vector<2x64xf32>
    %232 = arith.mulf %223, %199 : vector<2x64xf32>
    %233 = arith.mulf %217, %225 : vector<2x64xf32>
    %234 = arith.addf %232, %233 : vector<2x64xf32>
    %235 = math.tanh %234 : vector<2x64xf32>
    %236 = arith.mulf %231, %235 : vector<2x64xf32>
    %237 = vector.extract_strided_slice %236 {offsets = [0, 0], sizes = [2, 32], strides = [1, 1]} : vector<2x64xf32> to vector<2x32xf32>
    %c10_49 = arith.constant 10 : index
    %c0_50 = arith.constant 0 : index
    %238 = vector.load %arg13[%c10_49, %c0_50] : memref<16x128xf32, #tpu.memory_space<vmem>>, vector<2x32xf32>
    tpu.vector_store %arg13[%c10_49, %c0_50], %237 {strides = array<i32>} : memref<16x128xf32, #tpu.memory_space<vmem>>, vector<2x32xf32>,
    %239 = vector.extract_strided_slice %236 {offsets = [0, 32], sizes = [2, 32], strides = [1, 1]} : vector<2x64xf32> to vector<2x32xf32>
    %c4_51 = arith.constant 4 : index
    %c32_52 = arith.constant 32 : index
    %240 = vector.load %arg13[%c4_51, %c32_52] : memref<16x128xf32, #tpu.memory_space<vmem>>, vector<2x32xf32>
    tpu.vector_store %arg13[%c4_51, %c32_52], %239 {strides = array<i32>} : memref<16x128xf32, #tpu.memory_space<vmem>>, vector<2x32xf32>,
    %241 = vector.extract_strided_slice %27 {offsets = [12, 0], sizes = [2, 256], strides = [1, 1]} : vector<16x256xf32> to vector<2x256xf32>
    %242 = vector.extract_strided_slice %27 {offsets = [2, 0], sizes = [2, 256], strides = [1, 1]} : vector<16x256xf32> to vector<2x256xf32>
    %243 = arith.select %18, %241, %242 : vector<2x256xi1>, vector<2x256xf32>
    %244 = arith.truncf %236 : vector<2x64xf32> to vector<2x64xbf16>
    %cst_53 = arith.constant dense<0.000000e+00> : vector<2x256xf32>
    %245 = tpu.matmul %244, %28, %cst_53 {dimension_numbers = #tpu.dot_dimension_numbers<[1], [0], [0], [1], [0, 0, 1, 1], [], []>} : vector<2x64xbf16>, vector<64x256xbf16>, vector<2x256xf32> -> vector<2x256xf32>
    %246 = arith.addf %243, %245 : vector<2x256xf32>
    %247 = vector.extract_strided_slice %246 {offsets = [0, 0], sizes = [2, 64], strides = [1, 1]} : vector<2x256xf32> to vector<2x64xf32>
    %248 = arith.negf %247 : vector<2x64xf32>
    %249 = math.exp %248 : vector<2x64xf32>
    %cst_54 = arith.constant 1.000000e+00 : f32
    %250 = vector.broadcast %cst_54 : f32 to vector<2x64xf32>
    %251 = arith.addf %250, %249 : vector<2x64xf32>
    %252 = arith.divf %250, %251 : vector<2x64xf32>
    %253 = vector.extract_strided_slice %246 {offsets = [0, 64], sizes = [2, 64], strides = [1, 1]} : vector<2x256xf32> to vector<2x64xf32>
    %254 = arith.negf %253 : vector<2x64xf32>
    %255 = math.exp %254 : vector<2x64xf32>
    %cst_55 = arith.constant 1.000000e+00 : f32
    %256 = vector.broadcast %cst_55 : f32 to vector<2x64xf32>
    %257 = arith.addf %256, %255 : vector<2x64xf32>
    %258 = arith.divf %256, %257 : vector<2x64xf32>
    %259 = vector.extract_strided_slice %246 {offsets = [0, 128], sizes = [2, 64], strides = [1, 1]} : vector<2x256xf32> to vector<2x64xf32>
    %260 = math.tanh %259 : vector<2x64xf32>
    %261 = vector.extract_strided_slice %246 {offsets = [0, 192], sizes = [2, 64], strides = [1, 1]} : vector<2x256xf32> to vector<2x64xf32>
    %262 = arith.negf %261 : vector<2x64xf32>
    %263 = math.exp %262 : vector<2x64xf32>
    %cst_56 = arith.constant 1.000000e+00 : f32
    %264 = vector.broadcast %cst_56 : f32 to vector<2x64xf32>
    %265 = arith.addf %264, %263 : vector<2x64xf32>
    %266 = arith.divf %264, %265 : vector<2x64xf32>
    %267 = arith.mulf %258, %234 : vector<2x64xf32>
    %268 = arith.mulf %252, %260 : vector<2x64xf32>
    %269 = arith.addf %267, %268 : vector<2x64xf32>
    %270 = math.tanh %269 : vector<2x64xf32>
    %271 = arith.mulf %266, %270 : vector<2x64xf32>
    %272 = vector.extract_strided_slice %271 {offsets = [0, 0], sizes = [2, 32], strides = [1, 1]} : vector<2x64xf32> to vector<2x32xf32>
    %c12_57 = arith.constant 12 : index
    %c0_58 = arith.constant 0 : index
    %273 = vector.load %arg13[%c12_57, %c0_58] : memref<16x128xf32, #tpu.memory_space<vmem>>, vector<2x32xf32>
    tpu.vector_store %arg13[%c12_57, %c0_58], %272 {strides = array<i32>} : memref<16x128xf32, #tpu.memory_space<vmem>>, vector<2x32xf32>,
    %274 = vector.extract_strided_slice %271 {offsets = [0, 32], sizes = [2, 32], strides = [1, 1]} : vector<2x64xf32> to vector<2x32xf32>
    %c2_59 = arith.constant 2 : index
    %c32_60 = arith.constant 32 : index
    %275 = vector.load %arg13[%c2_59, %c32_60] : memref<16x128xf32, #tpu.memory_space<vmem>>, vector<2x32xf32>
    tpu.vector_store %arg13[%c2_59, %c32_60], %274 {strides = array<i32>} : memref<16x128xf32, #tpu.memory_space<vmem>>, vector<2x32xf32>,
    %276 = vector.extract_strided_slice %27 {offsets = [14, 0], sizes = [2, 256], strides = [1, 1]} : vector<16x256xf32> to vector<2x256xf32>
    %277 = vector.extract_strided_slice %27 {offsets = [0, 0], sizes = [2, 256], strides = [1, 1]} : vector<16x256xf32> to vector<2x256xf32>
    %278 = arith.select %18, %276, %277 : vector<2x256xi1>, vector<2x256xf32>
    %279 = arith.truncf %271 : vector<2x64xf32> to vector<2x64xbf16>
    %cst_61 = arith.constant dense<0.000000e+00> : vector<2x256xf32>
    %280 = tpu.matmul %279, %28, %cst_61 {dimension_numbers = #tpu.dot_dimension_numbers<[1], [0], [0], [1], [0, 0, 1, 1], [], []>} : vector<2x64xbf16>, vector<64x256xbf16>, vector<2x256xf32> -> vector<2x256xf32>
    %281 = arith.addf %278, %280 : vector<2x256xf32>
    %282 = vector.extract_strided_slice %281 {offsets = [0, 0], sizes = [2, 64], strides = [1, 1]} : vector<2x256xf32> to vector<2x64xf32>
    %283 = arith.negf %282 : vector<2x64xf32>
    %284 = math.exp %283 : vector<2x64xf32>
    %cst_62 = arith.constant 1.000000e+00 : f32
    %285 = vector.broadcast %cst_62 : f32 to vector<2x64xf32>
    %286 = arith.addf %285, %284 : vector<2x64xf32>
    %287 = arith.divf %285, %286 : vector<2x64xf32>
    %288 = vector.extract_strided_slice %281 {offsets = [0, 64], sizes = [2, 64], strides = [1, 1]} : vector<2x256xf32> to vector<2x64xf32>
    %289 = arith.negf %288 : vector<2x64xf32>
    %290 = math.exp %289 : vector<2x64xf32>
    %cst_63 = arith.constant 1.000000e+00 : f32
    %291 = vector.broadcast %cst_63 : f32 to vector<2x64xf32>
    %292 = arith.addf %291, %290 : vector<2x64xf32>
    %293 = arith.divf %291, %292 : vector<2x64xf32>
    %294 = vector.extract_strided_slice %281 {offsets = [0, 128], sizes = [2, 64], strides = [1, 1]} : vector<2x256xf32> to vector<2x64xf32>
    %295 = math.tanh %294 : vector<2x64xf32>
    %296 = vector.extract_strided_slice %281 {offsets = [0, 192], sizes = [2, 64], strides = [1, 1]} : vector<2x256xf32> to vector<2x64xf32>
    %297 = arith.negf %296 : vector<2x64xf32>
    %298 = math.exp %297 : vector<2x64xf32>
    %cst_64 = arith.constant 1.000000e+00 : f32
    %299 = vector.broadcast %cst_64 : f32 to vector<2x64xf32>
    %300 = arith.addf %299, %298 : vector<2x64xf32>
    %301 = arith.divf %299, %300 : vector<2x64xf32>
    %302 = arith.mulf %293, %269 : vector<2x64xf32>
    %303 = arith.mulf %287, %295 : vector<2x64xf32>
    %304 = arith.addf %302, %303 : vector<2x64xf32>
    %305 = math.tanh %304 : vector<2x64xf32>
    %306 = arith.mulf %301, %305 : vector<2x64xf32>
    %307 = vector.extract_strided_slice %306 {offsets = [0, 0], sizes = [2, 32], strides = [1, 1]} : vector<2x64xf32> to vector<2x32xf32>
    %c14_65 = arith.constant 14 : index
    %c0_66 = arith.constant 0 : index
    %308 = vector.load %arg13[%c14_65, %c0_66] : memref<16x128xf32, #tpu.memory_space<vmem>>, vector<2x32xf32>
    tpu.vector_store %arg13[%c14_65, %c0_66], %307 {strides = array<i32>} : memref<16x128xf32, #tpu.memory_space<vmem>>, vector<2x32xf32>,
    %309 = vector.extract_strided_slice %306 {offsets = [0, 32], sizes = [2, 32], strides = [1, 1]} : vector<2x64xf32> to vector<2x32xf32>
    %c0_67 = arith.constant 0 : index
    %c32_68 = arith.constant 32 : index
    %310 = vector.load %arg13[%c0_67, %c32_68] : memref<16x128xf32, #tpu.memory_space<vmem>>, vector<2x32xf32>
    tpu.vector_store %arg13[%c0_67, %c32_68], %309 {strides = array<i32>} : memref<16x128xf32, #tpu.memory_space<vmem>>, vector<2x32xf32>,
    %311 = arith.select %21, %306, %61 : vector<2x64xi1>, vector<2x64xf32>
    %c0_69 = arith.constant 0 : index
    %c0_70 = arith.constant 0 : index
    %312 = vector.load %arg13[%c0_69, %c0_70] : memref<16x128xf32, #tpu.memory_space<vmem>>, vector<16x64xf32>
    %313 = arith.truncf %312 : vector<16x64xf32> to vector<16x64xbf16>
    %c0_71 = arith.constant 0 : index
    %c0_72 = arith.constant 0 : index
    %314 = vector.load %arg4[%c0_71, %c0_72] : memref<64x256xbf16, #tpu.memory_space<vmem>>, vector<64x256xbf16>
    %cst_73 = arith.constant dense<0.000000e+00> : vector<16x256xf32>
    %315 = tpu.matmul %313, %314, %cst_73 {dimension_numbers = #tpu.dot_dimension_numbers<[1], [0], [0], [1], [0, 0, 1, 1], [], []>} : vector<16x64xbf16>, vector<64x256xbf16>, vector<16x256xf32> -> vector<16x256xf32>
    %c0_74 = arith.constant 0 : index
    %c0_75 = arith.constant 0 : index
    %316 = vector.load %arg5[%c0_74, %c0_75] : memref<1x256xf32, #tpu.memory_space<vmem>>, vector<1x256xf32>
    %317 = vector.broadcast %316 : vector<1x256xf32> to vector<16x256xf32>
    %318 = arith.addf %315, %317 : vector<16x256xf32>
    %c0_76 = arith.constant 0 : index
    %c0_77 = arith.constant 0 : index
    %319 = vector.load %arg6[%c0_76, %c0_77] : memref<64x256xbf16, #tpu.memory_space<vmem>>, vector<64x256xbf16>
    %cst_78 = arith.constant 0.000000e+00 : f32
    %320 = vector.broadcast %cst_78 : f32 to vector<2x64xf32>
    %cst_79 = arith.constant 0.000000e+00 : f32
    %321 = vector.broadcast %cst_79 : f32 to vector<2x64xf32>
    %322 = vector.extract_strided_slice %318 {offsets = [0, 0], sizes = [2, 256], strides = [1, 1]} : vector<16x256xf32> to vector<2x256xf32>
    %323 = vector.extract_strided_slice %318 {offsets = [14, 0], sizes = [2, 256], strides = [1, 1]} : vector<16x256xf32> to vector<2x256xf32>
    %324 = arith.select %18, %322, %323 : vector<2x256xi1>, vector<2x256xf32>
    %325 = arith.truncf %320 : vector<2x64xf32> to vector<2x64xbf16>
    %cst_80 = arith.constant dense<0.000000e+00> : vector<2x256xf32>
    %326 = tpu.matmul %325, %319, %cst_80 {dimension_numbers = #tpu.dot_dimension_numbers<[1], [0], [0], [1], [0, 0, 1, 1], [], []>} : vector<2x64xbf16>, vector<64x256xbf16>, vector<2x256xf32> -> vector<2x256xf32>
    %327 = arith.addf %324, %326 : vector<2x256xf32>
    %328 = vector.extract_strided_slice %327 {offsets = [0, 0], sizes = [2, 64], strides = [1, 1]} : vector<2x256xf32> to vector<2x64xf32>
    %329 = arith.negf %328 : vector<2x64xf32>
    %330 = math.exp %329 : vector<2x64xf32>
    %cst_81 = arith.constant 1.000000e+00 : f32
    %331 = vector.broadcast %cst_81 : f32 to vector<2x64xf32>
    %332 = arith.addf %331, %330 : vector<2x64xf32>
    %333 = arith.divf %331, %332 : vector<2x64xf32>
    %334 = vector.extract_strided_slice %327 {offsets = [0, 64], sizes = [2, 64], strides = [1, 1]} : vector<2x256xf32> to vector<2x64xf32>
    %335 = arith.negf %334 : vector<2x64xf32>
    %336 = math.exp %335 : vector<2x64xf32>
    %cst_82 = arith.constant 1.000000e+00 : f32
    %337 = vector.broadcast %cst_82 : f32 to vector<2x64xf32>
    %338 = arith.addf %337, %336 : vector<2x64xf32>
    %339 = arith.divf %337, %338 : vector<2x64xf32>
    %340 = vector.extract_strided_slice %327 {offsets = [0, 128], sizes = [2, 64], strides = [1, 1]} : vector<2x256xf32> to vector<2x64xf32>
    %341 = math.tanh %340 : vector<2x64xf32>
    %342 = vector.extract_strided_slice %327 {offsets = [0, 192], sizes = [2, 64], strides = [1, 1]} : vector<2x256xf32> to vector<2x64xf32>
    %343 = arith.negf %342 : vector<2x64xf32>
    %344 = math.exp %343 : vector<2x64xf32>
    %cst_83 = arith.constant 1.000000e+00 : f32
    %345 = vector.broadcast %cst_83 : f32 to vector<2x64xf32>
    %346 = arith.addf %345, %344 : vector<2x64xf32>
    %347 = arith.divf %345, %346 : vector<2x64xf32>
    %348 = arith.mulf %339, %321 : vector<2x64xf32>
    %349 = arith.mulf %333, %341 : vector<2x64xf32>
    %350 = arith.addf %348, %349 : vector<2x64xf32>
    %351 = math.tanh %350 : vector<2x64xf32>
    %352 = arith.mulf %347, %351 : vector<2x64xf32>
    %353 = vector.extract_strided_slice %352 {offsets = [0, 0], sizes = [2, 32], strides = [1, 1]} : vector<2x64xf32> to vector<2x32xf32>
    %c0_84 = arith.constant 0 : index
    %c64 = arith.constant 64 : index
    %354 = vector.load %arg13[%c0_84, %c64] : memref<16x128xf32, #tpu.memory_space<vmem>>, vector<2x32xf32>
    tpu.vector_store %arg13[%c0_84, %c64], %353 {strides = array<i32>} : memref<16x128xf32, #tpu.memory_space<vmem>>, vector<2x32xf32>,
    %355 = vector.extract_strided_slice %352 {offsets = [0, 32], sizes = [2, 32], strides = [1, 1]} : vector<2x64xf32> to vector<2x32xf32>
    %c14_85 = arith.constant 14 : index
    %c96 = arith.constant 96 : index
    %356 = vector.load %arg13[%c14_85, %c96] : memref<16x128xf32, #tpu.memory_space<vmem>>, vector<2x32xf32>
    tpu.vector_store %arg13[%c14_85, %c96], %355 {strides = array<i32>} : memref<16x128xf32, #tpu.memory_space<vmem>>, vector<2x32xf32>,
    %357 = vector.extract_strided_slice %318 {offsets = [2, 0], sizes = [2, 256], strides = [1, 1]} : vector<16x256xf32> to vector<2x256xf32>
    %358 = vector.extract_strided_slice %318 {offsets = [12, 0], sizes = [2, 256], strides = [1, 1]} : vector<16x256xf32> to vector<2x256xf32>
    %359 = arith.select %18, %357, %358 : vector<2x256xi1>, vector<2x256xf32>
    %360 = arith.truncf %352 : vector<2x64xf32> to vector<2x64xbf16>
    %cst_86 = arith.constant dense<0.000000e+00> : vector<2x256xf32>
    %361 = tpu.matmul %360, %319, %cst_86 {dimension_numbers = #tpu.dot_dimension_numbers<[1], [0], [0], [1], [0, 0, 1, 1], [], []>} : vector<2x64xbf16>, vector<64x256xbf16>, vector<2x256xf32> -> vector<2x256xf32>
    %362 = arith.addf %359, %361 : vector<2x256xf32>
    %363 = vector.extract_strided_slice %362 {offsets = [0, 0], sizes = [2, 64], strides = [1, 1]} : vector<2x256xf32> to vector<2x64xf32>
    %364 = arith.negf %363 : vector<2x64xf32>
    %365 = math.exp %364 : vector<2x64xf32>
    %cst_87 = arith.constant 1.000000e+00 : f32
    %366 = vector.broadcast %cst_87 : f32 to vector<2x64xf32>
    %367 = arith.addf %366, %365 : vector<2x64xf32>
    %368 = arith.divf %366, %367 : vector<2x64xf32>
    %369 = vector.extract_strided_slice %362 {offsets = [0, 64], sizes = [2, 64], strides = [1, 1]} : vector<2x256xf32> to vector<2x64xf32>
    %370 = arith.negf %369 : vector<2x64xf32>
    %371 = math.exp %370 : vector<2x64xf32>
    %cst_88 = arith.constant 1.000000e+00 : f32
    %372 = vector.broadcast %cst_88 : f32 to vector<2x64xf32>
    %373 = arith.addf %372, %371 : vector<2x64xf32>
    %374 = arith.divf %372, %373 : vector<2x64xf32>
    %375 = vector.extract_strided_slice %362 {offsets = [0, 128], sizes = [2, 64], strides = [1, 1]} : vector<2x256xf32> to vector<2x64xf32>
    %376 = math.tanh %375 : vector<2x64xf32>
    %377 = vector.extract_strided_slice %362 {offsets = [0, 192], sizes = [2, 64], strides = [1, 1]} : vector<2x256xf32> to vector<2x64xf32>
    %378 = arith.negf %377 : vector<2x64xf32>
    %379 = math.exp %378 : vector<2x64xf32>
    %cst_89 = arith.constant 1.000000e+00 : f32
    %380 = vector.broadcast %cst_89 : f32 to vector<2x64xf32>
    %381 = arith.addf %380, %379 : vector<2x64xf32>
    %382 = arith.divf %380, %381 : vector<2x64xf32>
    %383 = arith.mulf %374, %350 : vector<2x64xf32>
    %384 = arith.mulf %368, %376 : vector<2x64xf32>
    %385 = arith.addf %383, %384 : vector<2x64xf32>
    %386 = math.tanh %385 : vector<2x64xf32>
    %387 = arith.mulf %382, %386 : vector<2x64xf32>
    %388 = vector.extract_strided_slice %387 {offsets = [0, 0], sizes = [2, 32], strides = [1, 1]} : vector<2x64xf32> to vector<2x32xf32>
    %c2_90 = arith.constant 2 : index
    %c64_91 = arith.constant 64 : index
    %389 = vector.load %arg13[%c2_90, %c64_91] : memref<16x128xf32, #tpu.memory_space<vmem>>, vector<2x32xf32>
    tpu.vector_store %arg13[%c2_90, %c64_91], %388 {strides = array<i32>} : memref<16x128xf32, #tpu.memory_space<vmem>>, vector<2x32xf32>,
    %390 = vector.extract_strided_slice %387 {offsets = [0, 32], sizes = [2, 32], strides = [1, 1]} : vector<2x64xf32> to vector<2x32xf32>
    %c12_92 = arith.constant 12 : index
    %c96_93 = arith.constant 96 : index
    %391 = vector.load %arg13[%c12_92, %c96_93] : memref<16x128xf32, #tpu.memory_space<vmem>>, vector<2x32xf32>
    tpu.vector_store %arg13[%c12_92, %c96_93], %390 {strides = array<i32>} : memref<16x128xf32, #tpu.memory_space<vmem>>, vector<2x32xf32>,
    %392 = vector.extract_strided_slice %318 {offsets = [4, 0], sizes = [2, 256], strides = [1, 1]} : vector<16x256xf32> to vector<2x256xf32>
    %393 = vector.extract_strided_slice %318 {offsets = [10, 0], sizes = [2, 256], strides = [1, 1]} : vector<16x256xf32> to vector<2x256xf32>
    %394 = arith.select %18, %392, %393 : vector<2x256xi1>, vector<2x256xf32>
    %395 = arith.truncf %387 : vector<2x64xf32> to vector<2x64xbf16>
    %cst_94 = arith.constant dense<0.000000e+00> : vector<2x256xf32>
    %396 = tpu.matmul %395, %319, %cst_94 {dimension_numbers = #tpu.dot_dimension_numbers<[1], [0], [0], [1], [0, 0, 1, 1], [], []>} : vector<2x64xbf16>, vector<64x256xbf16>, vector<2x256xf32> -> vector<2x256xf32>
    %397 = arith.addf %394, %396 : vector<2x256xf32>
    %398 = vector.extract_strided_slice %397 {offsets = [0, 0], sizes = [2, 64], strides = [1, 1]} : vector<2x256xf32> to vector<2x64xf32>
    %399 = arith.negf %398 : vector<2x64xf32>
    %400 = math.exp %399 : vector<2x64xf32>
    %cst_95 = arith.constant 1.000000e+00 : f32
    %401 = vector.broadcast %cst_95 : f32 to vector<2x64xf32>
    %402 = arith.addf %401, %400 : vector<2x64xf32>
    %403 = arith.divf %401, %402 : vector<2x64xf32>
    %404 = vector.extract_strided_slice %397 {offsets = [0, 64], sizes = [2, 64], strides = [1, 1]} : vector<2x256xf32> to vector<2x64xf32>
    %405 = arith.negf %404 : vector<2x64xf32>
    %406 = math.exp %405 : vector<2x64xf32>
    %cst_96 = arith.constant 1.000000e+00 : f32
    %407 = vector.broadcast %cst_96 : f32 to vector<2x64xf32>
    %408 = arith.addf %407, %406 : vector<2x64xf32>
    %409 = arith.divf %407, %408 : vector<2x64xf32>
    %410 = vector.extract_strided_slice %397 {offsets = [0, 128], sizes = [2, 64], strides = [1, 1]} : vector<2x256xf32> to vector<2x64xf32>
    %411 = math.tanh %410 : vector<2x64xf32>
    %412 = vector.extract_strided_slice %397 {offsets = [0, 192], sizes = [2, 64], strides = [1, 1]} : vector<2x256xf32> to vector<2x64xf32>
    %413 = arith.negf %412 : vector<2x64xf32>
    %414 = math.exp %413 : vector<2x64xf32>
    %cst_97 = arith.constant 1.000000e+00 : f32
    %415 = vector.broadcast %cst_97 : f32 to vector<2x64xf32>
    %416 = arith.addf %415, %414 : vector<2x64xf32>
    %417 = arith.divf %415, %416 : vector<2x64xf32>
    %418 = arith.mulf %409, %385 : vector<2x64xf32>
    %419 = arith.mulf %403, %411 : vector<2x64xf32>
    %420 = arith.addf %418, %419 : vector<2x64xf32>
    %421 = math.tanh %420 : vector<2x64xf32>
    %422 = arith.mulf %417, %421 : vector<2x64xf32>
    %423 = vector.extract_strided_slice %422 {offsets = [0, 0], sizes = [2, 32], strides = [1, 1]} : vector<2x64xf32> to vector<2x32xf32>
    %c4_98 = arith.constant 4 : index
    %c64_99 = arith.constant 64 : index
    %424 = vector.load %arg13[%c4_98, %c64_99] : memref<16x128xf32, #tpu.memory_space<vmem>>, vector<2x32xf32>
    tpu.vector_store %arg13[%c4_98, %c64_99], %423 {strides = array<i32>} : memref<16x128xf32, #tpu.memory_space<vmem>>, vector<2x32xf32>,
    %425 = vector.extract_strided_slice %422 {offsets = [0, 32], sizes = [2, 32], strides = [1, 1]} : vector<2x64xf32> to vector<2x32xf32>
    %c10_100 = arith.constant 10 : index
    %c96_101 = arith.constant 96 : index
    %426 = vector.load %arg13[%c10_100, %c96_101] : memref<16x128xf32, #tpu.memory_space<vmem>>, vector<2x32xf32>
    tpu.vector_store %arg13[%c10_100, %c96_101], %425 {strides = array<i32>} : memref<16x128xf32, #tpu.memory_space<vmem>>, vector<2x32xf32>,
    %427 = vector.extract_strided_slice %318 {offsets = [6, 0], sizes = [2, 256], strides = [1, 1]} : vector<16x256xf32> to vector<2x256xf32>
    %428 = vector.extract_strided_slice %318 {offsets = [8, 0], sizes = [2, 256], strides = [1, 1]} : vector<16x256xf32> to vector<2x256xf32>
    %429 = arith.select %18, %427, %428 : vector<2x256xi1>, vector<2x256xf32>
    %430 = arith.truncf %422 : vector<2x64xf32> to vector<2x64xbf16>
    %cst_102 = arith.constant dense<0.000000e+00> : vector<2x256xf32>
    %431 = tpu.matmul %430, %319, %cst_102 {dimension_numbers = #tpu.dot_dimension_numbers<[1], [0], [0], [1], [0, 0, 1, 1], [], []>} : vector<2x64xbf16>, vector<64x256xbf16>, vector<2x256xf32> -> vector<2x256xf32>
    %432 = arith.addf %429, %431 : vector<2x256xf32>
    %433 = vector.extract_strided_slice %432 {offsets = [0, 0], sizes = [2, 64], strides = [1, 1]} : vector<2x256xf32> to vector<2x64xf32>
    %434 = arith.negf %433 : vector<2x64xf32>
    %435 = math.exp %434 : vector<2x64xf32>
    %cst_103 = arith.constant 1.000000e+00 : f32
    %436 = vector.broadcast %cst_103 : f32 to vector<2x64xf32>
    %437 = arith.addf %436, %435 : vector<2x64xf32>
    %438 = arith.divf %436, %437 : vector<2x64xf32>
    %439 = vector.extract_strided_slice %432 {offsets = [0, 64], sizes = [2, 64], strides = [1, 1]} : vector<2x256xf32> to vector<2x64xf32>
    %440 = arith.negf %439 : vector<2x64xf32>
    %441 = math.exp %440 : vector<2x64xf32>
    %cst_104 = arith.constant 1.000000e+00 : f32
    %442 = vector.broadcast %cst_104 : f32 to vector<2x64xf32>
    %443 = arith.addf %442, %441 : vector<2x64xf32>
    %444 = arith.divf %442, %443 : vector<2x64xf32>
    %445 = vector.extract_strided_slice %432 {offsets = [0, 128], sizes = [2, 64], strides = [1, 1]} : vector<2x256xf32> to vector<2x64xf32>
    %446 = math.tanh %445 : vector<2x64xf32>
    %447 = vector.extract_strided_slice %432 {offsets = [0, 192], sizes = [2, 64], strides = [1, 1]} : vector<2x256xf32> to vector<2x64xf32>
    %448 = arith.negf %447 : vector<2x64xf32>
    %449 = math.exp %448 : vector<2x64xf32>
    %cst_105 = arith.constant 1.000000e+00 : f32
    %450 = vector.broadcast %cst_105 : f32 to vector<2x64xf32>
    %451 = arith.addf %450, %449 : vector<2x64xf32>
    %452 = arith.divf %450, %451 : vector<2x64xf32>
    %453 = arith.mulf %444, %420 : vector<2x64xf32>
    %454 = arith.mulf %438, %446 : vector<2x64xf32>
    %455 = arith.addf %453, %454 : vector<2x64xf32>
    %456 = math.tanh %455 : vector<2x64xf32>
    %457 = arith.mulf %452, %456 : vector<2x64xf32>
    %458 = vector.extract_strided_slice %457 {offsets = [0, 0], sizes = [2, 32], strides = [1, 1]} : vector<2x64xf32> to vector<2x32xf32>
    %c6_106 = arith.constant 6 : index
    %c64_107 = arith.constant 64 : index
    %459 = vector.load %arg13[%c6_106, %c64_107] : memref<16x128xf32, #tpu.memory_space<vmem>>, vector<2x32xf32>
    tpu.vector_store %arg13[%c6_106, %c64_107], %458 {strides = array<i32>} : memref<16x128xf32, #tpu.memory_space<vmem>>, vector<2x32xf32>,
    %460 = vector.extract_strided_slice %457 {offsets = [0, 32], sizes = [2, 32], strides = [1, 1]} : vector<2x64xf32> to vector<2x32xf32>
    %c8_108 = arith.constant 8 : index
    %c96_109 = arith.constant 96 : index
    %461 = vector.load %arg13[%c8_108, %c96_109] : memref<16x128xf32, #tpu.memory_space<vmem>>, vector<2x32xf32>
    tpu.vector_store %arg13[%c8_108, %c96_109], %460 {strides = array<i32>} : memref<16x128xf32, #tpu.memory_space<vmem>>, vector<2x32xf32>,
    %462 = vector.extract_strided_slice %318 {offsets = [8, 0], sizes = [2, 256], strides = [1, 1]} : vector<16x256xf32> to vector<2x256xf32>
    %463 = vector.extract_strided_slice %318 {offsets = [6, 0], sizes = [2, 256], strides = [1, 1]} : vector<16x256xf32> to vector<2x256xf32>
    %464 = arith.select %18, %462, %463 : vector<2x256xi1>, vector<2x256xf32>
    %465 = arith.truncf %457 : vector<2x64xf32> to vector<2x64xbf16>
    %cst_110 = arith.constant dense<0.000000e+00> : vector<2x256xf32>
    %466 = tpu.matmul %465, %319, %cst_110 {dimension_numbers = #tpu.dot_dimension_numbers<[1], [0], [0], [1], [0, 0, 1, 1], [], []>} : vector<2x64xbf16>, vector<64x256xbf16>, vector<2x256xf32> -> vector<2x256xf32>
    %467 = arith.addf %464, %466 : vector<2x256xf32>
    %468 = vector.extract_strided_slice %467 {offsets = [0, 0], sizes = [2, 64], strides = [1, 1]} : vector<2x256xf32> to vector<2x64xf32>
    %469 = arith.negf %468 : vector<2x64xf32>
    %470 = math.exp %469 : vector<2x64xf32>
    %cst_111 = arith.constant 1.000000e+00 : f32
    %471 = vector.broadcast %cst_111 : f32 to vector<2x64xf32>
    %472 = arith.addf %471, %470 : vector<2x64xf32>
    %473 = arith.divf %471, %472 : vector<2x64xf32>
    %474 = vector.extract_strided_slice %467 {offsets = [0, 64], sizes = [2, 64], strides = [1, 1]} : vector<2x256xf32> to vector<2x64xf32>
    %475 = arith.negf %474 : vector<2x64xf32>
    %476 = math.exp %475 : vector<2x64xf32>
    %cst_112 = arith.constant 1.000000e+00 : f32
    %477 = vector.broadcast %cst_112 : f32 to vector<2x64xf32>
    %478 = arith.addf %477, %476 : vector<2x64xf32>
    %479 = arith.divf %477, %478 : vector<2x64xf32>
    %480 = vector.extract_strided_slice %467 {offsets = [0, 128], sizes = [2, 64], strides = [1, 1]} : vector<2x256xf32> to vector<2x64xf32>
    %481 = math.tanh %480 : vector<2x64xf32>
    %482 = vector.extract_strided_slice %467 {offsets = [0, 192], sizes = [2, 64], strides = [1, 1]} : vector<2x256xf32> to vector<2x64xf32>
    %483 = arith.negf %482 : vector<2x64xf32>
    %484 = math.exp %483 : vector<2x64xf32>
    %cst_113 = arith.constant 1.000000e+00 : f32
    %485 = vector.broadcast %cst_113 : f32 to vector<2x64xf32>
    %486 = arith.addf %485, %484 : vector<2x64xf32>
    %487 = arith.divf %485, %486 : vector<2x64xf32>
    %488 = arith.mulf %479, %455 : vector<2x64xf32>
    %489 = arith.mulf %473, %481 : vector<2x64xf32>
    %490 = arith.addf %488, %489 : vector<2x64xf32>
    %491 = math.tanh %490 : vector<2x64xf32>
    %492 = arith.mulf %487, %491 : vector<2x64xf32>
    %493 = vector.extract_strided_slice %492 {offsets = [0, 0], sizes = [2, 32], strides = [1, 1]} : vector<2x64xf32> to vector<2x32xf32>
    %c8_114 = arith.constant 8 : index
    %c64_115 = arith.constant 64 : index
    %494 = vector.load %arg13[%c8_114, %c64_115] : memref<16x128xf32, #tpu.memory_space<vmem>>, vector<2x32xf32>
    tpu.vector_store %arg13[%c8_114, %c64_115], %493 {strides = array<i32>} : memref<16x128xf32, #tpu.memory_space<vmem>>, vector<2x32xf32>,
    %495 = vector.extract_strided_slice %492 {offsets = [0, 32], sizes = [2, 32], strides = [1, 1]} : vector<2x64xf32> to vector<2x32xf32>
    %c6_116 = arith.constant 6 : index
    %c96_117 = arith.constant 96 : index
    %496 = vector.load %arg13[%c6_116, %c96_117] : memref<16x128xf32, #tpu.memory_space<vmem>>, vector<2x32xf32>
    tpu.vector_store %arg13[%c6_116, %c96_117], %495 {strides = array<i32>} : memref<16x128xf32, #tpu.memory_space<vmem>>, vector<2x32xf32>,
    %497 = vector.extract_strided_slice %318 {offsets = [10, 0], sizes = [2, 256], strides = [1, 1]} : vector<16x256xf32> to vector<2x256xf32>
    %498 = vector.extract_strided_slice %318 {offsets = [4, 0], sizes = [2, 256], strides = [1, 1]} : vector<16x256xf32> to vector<2x256xf32>
    %499 = arith.select %18, %497, %498 : vector<2x256xi1>, vector<2x256xf32>
    %500 = arith.truncf %492 : vector<2x64xf32> to vector<2x64xbf16>
    %cst_118 = arith.constant dense<0.000000e+00> : vector<2x256xf32>
    %501 = tpu.matmul %500, %319, %cst_118 {dimension_numbers = #tpu.dot_dimension_numbers<[1], [0], [0], [1], [0, 0, 1, 1], [], []>} : vector<2x64xbf16>, vector<64x256xbf16>, vector<2x256xf32> -> vector<2x256xf32>
    %502 = arith.addf %499, %501 : vector<2x256xf32>
    %503 = vector.extract_strided_slice %502 {offsets = [0, 0], sizes = [2, 64], strides = [1, 1]} : vector<2x256xf32> to vector<2x64xf32>
    %504 = arith.negf %503 : vector<2x64xf32>
    %505 = math.exp %504 : vector<2x64xf32>
    %cst_119 = arith.constant 1.000000e+00 : f32
    %506 = vector.broadcast %cst_119 : f32 to vector<2x64xf32>
    %507 = arith.addf %506, %505 : vector<2x64xf32>
    %508 = arith.divf %506, %507 : vector<2x64xf32>
    %509 = vector.extract_strided_slice %502 {offsets = [0, 64], sizes = [2, 64], strides = [1, 1]} : vector<2x256xf32> to vector<2x64xf32>
    %510 = arith.negf %509 : vector<2x64xf32>
    %511 = math.exp %510 : vector<2x64xf32>
    %cst_120 = arith.constant 1.000000e+00 : f32
    %512 = vector.broadcast %cst_120 : f32 to vector<2x64xf32>
    %513 = arith.addf %512, %511 : vector<2x64xf32>
    %514 = arith.divf %512, %513 : vector<2x64xf32>
    %515 = vector.extract_strided_slice %502 {offsets = [0, 128], sizes = [2, 64], strides = [1, 1]} : vector<2x256xf32> to vector<2x64xf32>
    %516 = math.tanh %515 : vector<2x64xf32>
    %517 = vector.extract_strided_slice %502 {offsets = [0, 192], sizes = [2, 64], strides = [1, 1]} : vector<2x256xf32> to vector<2x64xf32>
    %518 = arith.negf %517 : vector<2x64xf32>
    %519 = math.exp %518 : vector<2x64xf32>
    %cst_121 = arith.constant 1.000000e+00 : f32
    %520 = vector.broadcast %cst_121 : f32 to vector<2x64xf32>
    %521 = arith.addf %520, %519 : vector<2x64xf32>
    %522 = arith.divf %520, %521 : vector<2x64xf32>
    %523 = arith.mulf %514, %490 : vector<2x64xf32>
    %524 = arith.mulf %508, %516 : vector<2x64xf32>
    %525 = arith.addf %523, %524 : vector<2x64xf32>
    %526 = math.tanh %525 : vector<2x64xf32>
    %527 = arith.mulf %522, %526 : vector<2x64xf32>
    %528 = vector.extract_strided_slice %527 {offsets = [0, 0], sizes = [2, 32], strides = [1, 1]} : vector<2x64xf32> to vector<2x32xf32>
    %c10_122 = arith.constant 10 : index
    %c64_123 = arith.constant 64 : index
    %529 = vector.load %arg13[%c10_122, %c64_123] : memref<16x128xf32, #tpu.memory_space<vmem>>, vector<2x32xf32>
    tpu.vector_store %arg13[%c10_122, %c64_123], %528 {strides = array<i32>} : memref<16x128xf32, #tpu.memory_space<vmem>>, vector<2x32xf32>,
    %530 = vector.extract_strided_slice %527 {offsets = [0, 32], sizes = [2, 32], strides = [1, 1]} : vector<2x64xf32> to vector<2x32xf32>
    %c4_124 = arith.constant 4 : index
    %c96_125 = arith.constant 96 : index
    %531 = vector.load %arg13[%c4_124, %c96_125] : memref<16x128xf32, #tpu.memory_space<vmem>>, vector<2x32xf32>
    tpu.vector_store %arg13[%c4_124, %c96_125], %530 {strides = array<i32>} : memref<16x128xf32, #tpu.memory_space<vmem>>, vector<2x32xf32>,
    %532 = vector.extract_strided_slice %318 {offsets = [12, 0], sizes = [2, 256], strides = [1, 1]} : vector<16x256xf32> to vector<2x256xf32>
    %533 = vector.extract_strided_slice %318 {offsets = [2, 0], sizes = [2, 256], strides = [1, 1]} : vector<16x256xf32> to vector<2x256xf32>
    %534 = arith.select %18, %532, %533 : vector<2x256xi1>, vector<2x256xf32>
    %535 = arith.truncf %527 : vector<2x64xf32> to vector<2x64xbf16>
    %cst_126 = arith.constant dense<0.000000e+00> : vector<2x256xf32>
    %536 = tpu.matmul %535, %319, %cst_126 {dimension_numbers = #tpu.dot_dimension_numbers<[1], [0], [0], [1], [0, 0, 1, 1], [], []>} : vector<2x64xbf16>, vector<64x256xbf16>, vector<2x256xf32> -> vector<2x256xf32>
    %537 = arith.addf %534, %536 : vector<2x256xf32>
    %538 = vector.extract_strided_slice %537 {offsets = [0, 0], sizes = [2, 64], strides = [1, 1]} : vector<2x256xf32> to vector<2x64xf32>
    %539 = arith.negf %538 : vector<2x64xf32>
    %540 = math.exp %539 : vector<2x64xf32>
    %cst_127 = arith.constant 1.000000e+00 : f32
    %541 = vector.broadcast %cst_127 : f32 to vector<2x64xf32>
    %542 = arith.addf %541, %540 : vector<2x64xf32>
    %543 = arith.divf %541, %542 : vector<2x64xf32>
    %544 = vector.extract_strided_slice %537 {offsets = [0, 64], sizes = [2, 64], strides = [1, 1]} : vector<2x256xf32> to vector<2x64xf32>
    %545 = arith.negf %544 : vector<2x64xf32>
    %546 = math.exp %545 : vector<2x64xf32>
    %cst_128 = arith.constant 1.000000e+00 : f32
    %547 = vector.broadcast %cst_128 : f32 to vector<2x64xf32>
    %548 = arith.addf %547, %546 : vector<2x64xf32>
    %549 = arith.divf %547, %548 : vector<2x64xf32>
    %550 = vector.extract_strided_slice %537 {offsets = [0, 128], sizes = [2, 64], strides = [1, 1]} : vector<2x256xf32> to vector<2x64xf32>
    %551 = math.tanh %550 : vector<2x64xf32>
    %552 = vector.extract_strided_slice %537 {offsets = [0, 192], sizes = [2, 64], strides = [1, 1]} : vector<2x256xf32> to vector<2x64xf32>
    %553 = arith.negf %552 : vector<2x64xf32>
    %554 = math.exp %553 : vector<2x64xf32>
    %cst_129 = arith.constant 1.000000e+00 : f32
    %555 = vector.broadcast %cst_129 : f32 to vector<2x64xf32>
    %556 = arith.addf %555, %554 : vector<2x64xf32>
    %557 = arith.divf %555, %556 : vector<2x64xf32>
    %558 = arith.mulf %549, %525 : vector<2x64xf32>
    %559 = arith.mulf %543, %551 : vector<2x64xf32>
    %560 = arith.addf %558, %559 : vector<2x64xf32>
    %561 = math.tanh %560 : vector<2x64xf32>
    %562 = arith.mulf %557, %561 : vector<2x64xf32>
    %563 = vector.extract_strided_slice %562 {offsets = [0, 0], sizes = [2, 32], strides = [1, 1]} : vector<2x64xf32> to vector<2x32xf32>
    %c12_130 = arith.constant 12 : index
    %c64_131 = arith.constant 64 : index
    %564 = vector.load %arg13[%c12_130, %c64_131] : memref<16x128xf32, #tpu.memory_space<vmem>>, vector<2x32xf32>
    tpu.vector_store %arg13[%c12_130, %c64_131], %563 {strides = array<i32>} : memref<16x128xf32, #tpu.memory_space<vmem>>, vector<2x32xf32>,
    %565 = vector.extract_strided_slice %562 {offsets = [0, 32], sizes = [2, 32], strides = [1, 1]} : vector<2x64xf32> to vector<2x32xf32>
    %c2_132 = arith.constant 2 : index
    %c96_133 = arith.constant 96 : index
    %566 = vector.load %arg13[%c2_132, %c96_133] : memref<16x128xf32, #tpu.memory_space<vmem>>, vector<2x32xf32>
    tpu.vector_store %arg13[%c2_132, %c96_133], %565 {strides = array<i32>} : memref<16x128xf32, #tpu.memory_space<vmem>>, vector<2x32xf32>,
    %567 = vector.extract_strided_slice %318 {offsets = [14, 0], sizes = [2, 256], strides = [1, 1]} : vector<16x256xf32> to vector<2x256xf32>
    %568 = vector.extract_strided_slice %318 {offsets = [0, 0], sizes = [2, 256], strides = [1, 1]} : vector<16x256xf32> to vector<2x256xf32>
    %569 = arith.select %18, %567, %568 : vector<2x256xi1>, vector<2x256xf32>
    %570 = arith.truncf %562 : vector<2x64xf32> to vector<2x64xbf16>
    %cst_134 = arith.constant dense<0.000000e+00> : vector<2x256xf32>
    %571 = tpu.matmul %570, %319, %cst_134 {dimension_numbers = #tpu.dot_dimension_numbers<[1], [0], [0], [1], [0, 0, 1, 1], [], []>} : vector<2x64xbf16>, vector<64x256xbf16>, vector<2x256xf32> -> vector<2x256xf32>
    %572 = arith.addf %569, %571 : vector<2x256xf32>
    %573 = vector.extract_strided_slice %572 {offsets = [0, 0], sizes = [2, 64], strides = [1, 1]} : vector<2x256xf32> to vector<2x64xf32>
    %574 = arith.negf %573 : vector<2x64xf32>
    %575 = math.exp %574 : vector<2x64xf32>
    %cst_135 = arith.constant 1.000000e+00 : f32
    %576 = vector.broadcast %cst_135 : f32 to vector<2x64xf32>
    %577 = arith.addf %576, %575 : vector<2x64xf32>
    %578 = arith.divf %576, %577 : vector<2x64xf32>
    %579 = vector.extract_strided_slice %572 {offsets = [0, 64], sizes = [2, 64], strides = [1, 1]} : vector<2x256xf32> to vector<2x64xf32>
    %580 = arith.negf %579 : vector<2x64xf32>
    %581 = math.exp %580 : vector<2x64xf32>
    %cst_136 = arith.constant 1.000000e+00 : f32
    %582 = vector.broadcast %cst_136 : f32 to vector<2x64xf32>
    %583 = arith.addf %582, %581 : vector<2x64xf32>
    %584 = arith.divf %582, %583 : vector<2x64xf32>
    %585 = vector.extract_strided_slice %572 {offsets = [0, 128], sizes = [2, 64], strides = [1, 1]} : vector<2x256xf32> to vector<2x64xf32>
    %586 = math.tanh %585 : vector<2x64xf32>
    %587 = vector.extract_strided_slice %572 {offsets = [0, 192], sizes = [2, 64], strides = [1, 1]} : vector<2x256xf32> to vector<2x64xf32>
    %588 = arith.negf %587 : vector<2x64xf32>
    %589 = math.exp %588 : vector<2x64xf32>
    %cst_137 = arith.constant 1.000000e+00 : f32
    %590 = vector.broadcast %cst_137 : f32 to vector<2x64xf32>
    %591 = arith.addf %590, %589 : vector<2x64xf32>
    %592 = arith.divf %590, %591 : vector<2x64xf32>
    %593 = arith.mulf %584, %560 : vector<2x64xf32>
    %594 = arith.mulf %578, %586 : vector<2x64xf32>
    %595 = arith.addf %593, %594 : vector<2x64xf32>
    %596 = math.tanh %595 : vector<2x64xf32>
    %597 = arith.mulf %592, %596 : vector<2x64xf32>
    %598 = vector.extract_strided_slice %597 {offsets = [0, 0], sizes = [2, 32], strides = [1, 1]} : vector<2x64xf32> to vector<2x32xf32>
    %c14_138 = arith.constant 14 : index
    %c64_139 = arith.constant 64 : index
    %599 = vector.load %arg13[%c14_138, %c64_139] : memref<16x128xf32, #tpu.memory_space<vmem>>, vector<2x32xf32>
    tpu.vector_store %arg13[%c14_138, %c64_139], %598 {strides = array<i32>} : memref<16x128xf32, #tpu.memory_space<vmem>>, vector<2x32xf32>,
    %600 = vector.extract_strided_slice %597 {offsets = [0, 32], sizes = [2, 32], strides = [1, 1]} : vector<2x64xf32> to vector<2x32xf32>
    %c0_140 = arith.constant 0 : index
    %c96_141 = arith.constant 96 : index
    %601 = vector.load %arg13[%c0_140, %c96_141] : memref<16x128xf32, #tpu.memory_space<vmem>>, vector<2x32xf32>
    tpu.vector_store %arg13[%c0_140, %c96_141], %600 {strides = array<i32>} : memref<16x128xf32, #tpu.memory_space<vmem>>, vector<2x32xf32>,
    %602 = arith.select %21, %597, %352 : vector<2x64xi1>, vector<2x64xf32>
    %c0_142 = arith.constant 0 : index
    %c0_143 = arith.constant 0 : index
    %603 = vector.load %arg13[%c0_142, %c0_143] : memref<16x128xf32, #tpu.memory_space<vmem>>, vector<16x128xf32>
    %604 = arith.truncf %603 : vector<16x128xf32> to vector<16x128xbf16>
    %c0_144 = arith.constant 0 : index
    %c0_145 = arith.constant 0 : index
    %605 = vector.load %arg7[%c0_144, %c0_145] : memref<128x256xbf16, #tpu.memory_space<vmem>>, vector<128x256xbf16>
    %cst_146 = arith.constant dense<0.000000e+00> : vector<16x256xf32>
    %606 = tpu.matmul %604, %605, %cst_146 {dimension_numbers = #tpu.dot_dimension_numbers<[1], [0], [0], [1], [0, 0, 1, 1], [], []>} : vector<16x128xbf16>, vector<128x256xbf16>, vector<16x256xf32> -> vector<16x256xf32>
    %c0_147 = arith.constant 0 : index
    %c0_148 = arith.constant 0 : index
    %607 = vector.load %arg8[%c0_147, %c0_148] : memref<1x256xf32, #tpu.memory_space<vmem>>, vector<1x256xf32>
    %608 = vector.broadcast %607 : vector<1x256xf32> to vector<16x256xf32>
    %609 = arith.addf %606, %608 : vector<16x256xf32>
    %c0_149 = arith.constant 0 : index
    %c0_150 = arith.constant 0 : index
    %610 = vector.load %arg9[%c0_149, %c0_150] : memref<64x256xbf16, #tpu.memory_space<vmem>>, vector<64x256xbf16>
    %cst_151 = arith.constant 0.000000e+00 : f32
    %611 = vector.broadcast %cst_151 : f32 to vector<2x64xf32>
    %cst_152 = arith.constant 0.000000e+00 : f32
    %612 = vector.broadcast %cst_152 : f32 to vector<2x64xf32>
    %613 = vector.extract_strided_slice %609 {offsets = [0, 0], sizes = [2, 256], strides = [1, 1]} : vector<16x256xf32> to vector<2x256xf32>
    %614 = vector.extract_strided_slice %609 {offsets = [14, 0], sizes = [2, 256], strides = [1, 1]} : vector<16x256xf32> to vector<2x256xf32>
    %615 = arith.select %18, %613, %614 : vector<2x256xi1>, vector<2x256xf32>
    %616 = arith.truncf %611 : vector<2x64xf32> to vector<2x64xbf16>
    %cst_153 = arith.constant dense<0.000000e+00> : vector<2x256xf32>
    %617 = tpu.matmul %616, %610, %cst_153 {dimension_numbers = #tpu.dot_dimension_numbers<[1], [0], [0], [1], [0, 0, 1, 1], [], []>} : vector<2x64xbf16>, vector<64x256xbf16>, vector<2x256xf32> -> vector<2x256xf32>
    %618 = arith.addf %615, %617 : vector<2x256xf32>
    %619 = vector.extract_strided_slice %618 {offsets = [0, 0], sizes = [2, 64], strides = [1, 1]} : vector<2x256xf32> to vector<2x64xf32>
    %620 = arith.negf %619 : vector<2x64xf32>
    %621 = math.exp %620 : vector<2x64xf32>
    %cst_154 = arith.constant 1.000000e+00 : f32
    %622 = vector.broadcast %cst_154 : f32 to vector<2x64xf32>
    %623 = arith.addf %622, %621 : vector<2x64xf32>
    %624 = arith.divf %622, %623 : vector<2x64xf32>
    %625 = vector.extract_strided_slice %618 {offsets = [0, 64], sizes = [2, 64], strides = [1, 1]} : vector<2x256xf32> to vector<2x64xf32>
    %626 = arith.negf %625 : vector<2x64xf32>
    %627 = math.exp %626 : vector<2x64xf32>
    %cst_155 = arith.constant 1.000000e+00 : f32
    %628 = vector.broadcast %cst_155 : f32 to vector<2x64xf32>
    %629 = arith.addf %628, %627 : vector<2x64xf32>
    %630 = arith.divf %628, %629 : vector<2x64xf32>
    %631 = vector.extract_strided_slice %618 {offsets = [0, 128], sizes = [2, 64], strides = [1, 1]} : vector<2x256xf32> to vector<2x64xf32>
    %632 = math.tanh %631 : vector<2x64xf32>
    %633 = vector.extract_strided_slice %618 {offsets = [0, 192], sizes = [2, 64], strides = [1, 1]} : vector<2x256xf32> to vector<2x64xf32>
    %634 = arith.negf %633 : vector<2x64xf32>
    %635 = math.exp %634 : vector<2x64xf32>
    %cst_156 = arith.constant 1.000000e+00 : f32
    %636 = vector.broadcast %cst_156 : f32 to vector<2x64xf32>
    %637 = arith.addf %636, %635 : vector<2x64xf32>
    %638 = arith.divf %636, %637 : vector<2x64xf32>
    %639 = arith.mulf %630, %612 : vector<2x64xf32>
    %640 = arith.mulf %624, %632 : vector<2x64xf32>
    %641 = arith.addf %639, %640 : vector<2x64xf32>
    %642 = math.tanh %641 : vector<2x64xf32>
    %643 = arith.mulf %638, %642 : vector<2x64xf32>
    %644 = vector.extract_strided_slice %609 {offsets = [2, 0], sizes = [2, 256], strides = [1, 1]} : vector<16x256xf32> to vector<2x256xf32>
    %645 = vector.extract_strided_slice %609 {offsets = [12, 0], sizes = [2, 256], strides = [1, 1]} : vector<16x256xf32> to vector<2x256xf32>
    %646 = arith.select %18, %644, %645 : vector<2x256xi1>, vector<2x256xf32>
    %647 = arith.truncf %643 : vector<2x64xf32> to vector<2x64xbf16>
    %cst_157 = arith.constant dense<0.000000e+00> : vector<2x256xf32>
    %648 = tpu.matmul %647, %610, %cst_157 {dimension_numbers = #tpu.dot_dimension_numbers<[1], [0], [0], [1], [0, 0, 1, 1], [], []>} : vector<2x64xbf16>, vector<64x256xbf16>, vector<2x256xf32> -> vector<2x256xf32>
    %649 = arith.addf %646, %648 : vector<2x256xf32>
    %650 = vector.extract_strided_slice %649 {offsets = [0, 0], sizes = [2, 64], strides = [1, 1]} : vector<2x256xf32> to vector<2x64xf32>
    %651 = arith.negf %650 : vector<2x64xf32>
    %652 = math.exp %651 : vector<2x64xf32>
    %cst_158 = arith.constant 1.000000e+00 : f32
    %653 = vector.broadcast %cst_158 : f32 to vector<2x64xf32>
    %654 = arith.addf %653, %652 : vector<2x64xf32>
    %655 = arith.divf %653, %654 : vector<2x64xf32>
    %656 = vector.extract_strided_slice %649 {offsets = [0, 64], sizes = [2, 64], strides = [1, 1]} : vector<2x256xf32> to vector<2x64xf32>
    %657 = arith.negf %656 : vector<2x64xf32>
    %658 = math.exp %657 : vector<2x64xf32>
    %cst_159 = arith.constant 1.000000e+00 : f32
    %659 = vector.broadcast %cst_159 : f32 to vector<2x64xf32>
    %660 = arith.addf %659, %658 : vector<2x64xf32>
    %661 = arith.divf %659, %660 : vector<2x64xf32>
    %662 = vector.extract_strided_slice %649 {offsets = [0, 128], sizes = [2, 64], strides = [1, 1]} : vector<2x256xf32> to vector<2x64xf32>
    %663 = math.tanh %662 : vector<2x64xf32>
    %664 = vector.extract_strided_slice %649 {offsets = [0, 192], sizes = [2, 64], strides = [1, 1]} : vector<2x256xf32> to vector<2x64xf32>
    %665 = arith.negf %664 : vector<2x64xf32>
    %666 = math.exp %665 : vector<2x64xf32>
    %cst_160 = arith.constant 1.000000e+00 : f32
    %667 = vector.broadcast %cst_160 : f32 to vector<2x64xf32>
    %668 = arith.addf %667, %666 : vector<2x64xf32>
    %669 = arith.divf %667, %668 : vector<2x64xf32>
    %670 = arith.mulf %661, %641 : vector<2x64xf32>
    %671 = arith.mulf %655, %663 : vector<2x64xf32>
    %672 = arith.addf %670, %671 : vector<2x64xf32>
    %673 = math.tanh %672 : vector<2x64xf32>
    %674 = arith.mulf %669, %673 : vector<2x64xf32>
    %675 = vector.extract_strided_slice %609 {offsets = [4, 0], sizes = [2, 256], strides = [1, 1]} : vector<16x256xf32> to vector<2x256xf32>
    %676 = vector.extract_strided_slice %609 {offsets = [10, 0], sizes = [2, 256], strides = [1, 1]} : vector<16x256xf32> to vector<2x256xf32>
    %677 = arith.select %18, %675, %676 : vector<2x256xi1>, vector<2x256xf32>
    %678 = arith.truncf %674 : vector<2x64xf32> to vector<2x64xbf16>
    %cst_161 = arith.constant dense<0.000000e+00> : vector<2x256xf32>
    %679 = tpu.matmul %678, %610, %cst_161 {dimension_numbers = #tpu.dot_dimension_numbers<[1], [0], [0], [1], [0, 0, 1, 1], [], []>} : vector<2x64xbf16>, vector<64x256xbf16>, vector<2x256xf32> -> vector<2x256xf32>
    %680 = arith.addf %677, %679 : vector<2x256xf32>
    %681 = vector.extract_strided_slice %680 {offsets = [0, 0], sizes = [2, 64], strides = [1, 1]} : vector<2x256xf32> to vector<2x64xf32>
    %682 = arith.negf %681 : vector<2x64xf32>
    %683 = math.exp %682 : vector<2x64xf32>
    %cst_162 = arith.constant 1.000000e+00 : f32
    %684 = vector.broadcast %cst_162 : f32 to vector<2x64xf32>
    %685 = arith.addf %684, %683 : vector<2x64xf32>
    %686 = arith.divf %684, %685 : vector<2x64xf32>
    %687 = vector.extract_strided_slice %680 {offsets = [0, 64], sizes = [2, 64], strides = [1, 1]} : vector<2x256xf32> to vector<2x64xf32>
    %688 = arith.negf %687 : vector<2x64xf32>
    %689 = math.exp %688 : vector<2x64xf32>
    %cst_163 = arith.constant 1.000000e+00 : f32
    %690 = vector.broadcast %cst_163 : f32 to vector<2x64xf32>
    %691 = arith.addf %690, %689 : vector<2x64xf32>
    %692 = arith.divf %690, %691 : vector<2x64xf32>
    %693 = vector.extract_strided_slice %680 {offsets = [0, 128], sizes = [2, 64], strides = [1, 1]} : vector<2x256xf32> to vector<2x64xf32>
    %694 = math.tanh %693 : vector<2x64xf32>
    %695 = vector.extract_strided_slice %680 {offsets = [0, 192], sizes = [2, 64], strides = [1, 1]} : vector<2x256xf32> to vector<2x64xf32>
    %696 = arith.negf %695 : vector<2x64xf32>
    %697 = math.exp %696 : vector<2x64xf32>
    %cst_164 = arith.constant 1.000000e+00 : f32
    %698 = vector.broadcast %cst_164 : f32 to vector<2x64xf32>
    %699 = arith.addf %698, %697 : vector<2x64xf32>
    %700 = arith.divf %698, %699 : vector<2x64xf32>
    %701 = arith.mulf %692, %672 : vector<2x64xf32>
    %702 = arith.mulf %686, %694 : vector<2x64xf32>
    %703 = arith.addf %701, %702 : vector<2x64xf32>
    %704 = math.tanh %703 : vector<2x64xf32>
    %705 = arith.mulf %700, %704 : vector<2x64xf32>
    %706 = vector.extract_strided_slice %609 {offsets = [6, 0], sizes = [2, 256], strides = [1, 1]} : vector<16x256xf32> to vector<2x256xf32>
    %707 = vector.extract_strided_slice %609 {offsets = [8, 0], sizes = [2, 256], strides = [1, 1]} : vector<16x256xf32> to vector<2x256xf32>
    %708 = arith.select %18, %706, %707 : vector<2x256xi1>, vector<2x256xf32>
    %709 = arith.truncf %705 : vector<2x64xf32> to vector<2x64xbf16>
    %cst_165 = arith.constant dense<0.000000e+00> : vector<2x256xf32>
    %710 = tpu.matmul %709, %610, %cst_165 {dimension_numbers = #tpu.dot_dimension_numbers<[1], [0], [0], [1], [0, 0, 1, 1], [], []>} : vector<2x64xbf16>, vector<64x256xbf16>, vector<2x256xf32> -> vector<2x256xf32>
    %711 = arith.addf %708, %710 : vector<2x256xf32>
    %712 = vector.extract_strided_slice %711 {offsets = [0, 0], sizes = [2, 64], strides = [1, 1]} : vector<2x256xf32> to vector<2x64xf32>
    %713 = arith.negf %712 : vector<2x64xf32>
    %714 = math.exp %713 : vector<2x64xf32>
    %cst_166 = arith.constant 1.000000e+00 : f32
    %715 = vector.broadcast %cst_166 : f32 to vector<2x64xf32>
    %716 = arith.addf %715, %714 : vector<2x64xf32>
    %717 = arith.divf %715, %716 : vector<2x64xf32>
    %718 = vector.extract_strided_slice %711 {offsets = [0, 64], sizes = [2, 64], strides = [1, 1]} : vector<2x256xf32> to vector<2x64xf32>
    %719 = arith.negf %718 : vector<2x64xf32>
    %720 = math.exp %719 : vector<2x64xf32>
    %cst_167 = arith.constant 1.000000e+00 : f32
    %721 = vector.broadcast %cst_167 : f32 to vector<2x64xf32>
    %722 = arith.addf %721, %720 : vector<2x64xf32>
    %723 = arith.divf %721, %722 : vector<2x64xf32>
    %724 = vector.extract_strided_slice %711 {offsets = [0, 128], sizes = [2, 64], strides = [1, 1]} : vector<2x256xf32> to vector<2x64xf32>
    %725 = math.tanh %724 : vector<2x64xf32>
    %726 = vector.extract_strided_slice %711 {offsets = [0, 192], sizes = [2, 64], strides = [1, 1]} : vector<2x256xf32> to vector<2x64xf32>
    %727 = arith.negf %726 : vector<2x64xf32>
    %728 = math.exp %727 : vector<2x64xf32>
    %cst_168 = arith.constant 1.000000e+00 : f32
    %729 = vector.broadcast %cst_168 : f32 to vector<2x64xf32>
    %730 = arith.addf %729, %728 : vector<2x64xf32>
    %731 = arith.divf %729, %730 : vector<2x64xf32>
    %732 = arith.mulf %723, %703 : vector<2x64xf32>
    %733 = arith.mulf %717, %725 : vector<2x64xf32>
    %734 = arith.addf %732, %733 : vector<2x64xf32>
    %735 = math.tanh %734 : vector<2x64xf32>
    %736 = arith.mulf %731, %735 : vector<2x64xf32>
    %737 = vector.extract_strided_slice %609 {offsets = [8, 0], sizes = [2, 256], strides = [1, 1]} : vector<16x256xf32> to vector<2x256xf32>
    %738 = vector.extract_strided_slice %609 {offsets = [6, 0], sizes = [2, 256], strides = [1, 1]} : vector<16x256xf32> to vector<2x256xf32>
    %739 = arith.select %18, %737, %738 : vector<2x256xi1>, vector<2x256xf32>
    %740 = arith.truncf %736 : vector<2x64xf32> to vector<2x64xbf16>
    %cst_169 = arith.constant dense<0.000000e+00> : vector<2x256xf32>
    %741 = tpu.matmul %740, %610, %cst_169 {dimension_numbers = #tpu.dot_dimension_numbers<[1], [0], [0], [1], [0, 0, 1, 1], [], []>} : vector<2x64xbf16>, vector<64x256xbf16>, vector<2x256xf32> -> vector<2x256xf32>
    %742 = arith.addf %739, %741 : vector<2x256xf32>
    %743 = vector.extract_strided_slice %742 {offsets = [0, 0], sizes = [2, 64], strides = [1, 1]} : vector<2x256xf32> to vector<2x64xf32>
    %744 = arith.negf %743 : vector<2x64xf32>
    %745 = math.exp %744 : vector<2x64xf32>
    %cst_170 = arith.constant 1.000000e+00 : f32
    %746 = vector.broadcast %cst_170 : f32 to vector<2x64xf32>
    %747 = arith.addf %746, %745 : vector<2x64xf32>
    %748 = arith.divf %746, %747 : vector<2x64xf32>
    %749 = vector.extract_strided_slice %742 {offsets = [0, 64], sizes = [2, 64], strides = [1, 1]} : vector<2x256xf32> to vector<2x64xf32>
    %750 = arith.negf %749 : vector<2x64xf32>
    %751 = math.exp %750 : vector<2x64xf32>
    %cst_171 = arith.constant 1.000000e+00 : f32
    %752 = vector.broadcast %cst_171 : f32 to vector<2x64xf32>
    %753 = arith.addf %752, %751 : vector<2x64xf32>
    %754 = arith.divf %752, %753 : vector<2x64xf32>
    %755 = vector.extract_strided_slice %742 {offsets = [0, 128], sizes = [2, 64], strides = [1, 1]} : vector<2x256xf32> to vector<2x64xf32>
    %756 = math.tanh %755 : vector<2x64xf32>
    %757 = vector.extract_strided_slice %742 {offsets = [0, 192], sizes = [2, 64], strides = [1, 1]} : vector<2x256xf32> to vector<2x64xf32>
    %758 = arith.negf %757 : vector<2x64xf32>
    %759 = math.exp %758 : vector<2x64xf32>
    %cst_172 = arith.constant 1.000000e+00 : f32
    %760 = vector.broadcast %cst_172 : f32 to vector<2x64xf32>
    %761 = arith.addf %760, %759 : vector<2x64xf32>
    %762 = arith.divf %760, %761 : vector<2x64xf32>
    %763 = arith.mulf %754, %734 : vector<2x64xf32>
    %764 = arith.mulf %748, %756 : vector<2x64xf32>
    %765 = arith.addf %763, %764 : vector<2x64xf32>
    %766 = math.tanh %765 : vector<2x64xf32>
    %767 = arith.mulf %762, %766 : vector<2x64xf32>
    %768 = vector.extract_strided_slice %609 {offsets = [10, 0], sizes = [2, 256], strides = [1, 1]} : vector<16x256xf32> to vector<2x256xf32>
    %769 = vector.extract_strided_slice %609 {offsets = [4, 0], sizes = [2, 256], strides = [1, 1]} : vector<16x256xf32> to vector<2x256xf32>
    %770 = arith.select %18, %768, %769 : vector<2x256xi1>, vector<2x256xf32>
    %771 = arith.truncf %767 : vector<2x64xf32> to vector<2x64xbf16>
    %cst_173 = arith.constant dense<0.000000e+00> : vector<2x256xf32>
    %772 = tpu.matmul %771, %610, %cst_173 {dimension_numbers = #tpu.dot_dimension_numbers<[1], [0], [0], [1], [0, 0, 1, 1], [], []>} : vector<2x64xbf16>, vector<64x256xbf16>, vector<2x256xf32> -> vector<2x256xf32>
    %773 = arith.addf %770, %772 : vector<2x256xf32>
    %774 = vector.extract_strided_slice %773 {offsets = [0, 0], sizes = [2, 64], strides = [1, 1]} : vector<2x256xf32> to vector<2x64xf32>
    %775 = arith.negf %774 : vector<2x64xf32>
    %776 = math.exp %775 : vector<2x64xf32>
    %cst_174 = arith.constant 1.000000e+00 : f32
    %777 = vector.broadcast %cst_174 : f32 to vector<2x64xf32>
    %778 = arith.addf %777, %776 : vector<2x64xf32>
    %779 = arith.divf %777, %778 : vector<2x64xf32>
    %780 = vector.extract_strided_slice %773 {offsets = [0, 64], sizes = [2, 64], strides = [1, 1]} : vector<2x256xf32> to vector<2x64xf32>
    %781 = arith.negf %780 : vector<2x64xf32>
    %782 = math.exp %781 : vector<2x64xf32>
    %cst_175 = arith.constant 1.000000e+00 : f32
    %783 = vector.broadcast %cst_175 : f32 to vector<2x64xf32>
    %784 = arith.addf %783, %782 : vector<2x64xf32>
    %785 = arith.divf %783, %784 : vector<2x64xf32>
    %786 = vector.extract_strided_slice %773 {offsets = [0, 128], sizes = [2, 64], strides = [1, 1]} : vector<2x256xf32> to vector<2x64xf32>
    %787 = math.tanh %786 : vector<2x64xf32>
    %788 = vector.extract_strided_slice %773 {offsets = [0, 192], sizes = [2, 64], strides = [1, 1]} : vector<2x256xf32> to vector<2x64xf32>
    %789 = arith.negf %788 : vector<2x64xf32>
    %790 = math.exp %789 : vector<2x64xf32>
    %cst_176 = arith.constant 1.000000e+00 : f32
    %791 = vector.broadcast %cst_176 : f32 to vector<2x64xf32>
    %792 = arith.addf %791, %790 : vector<2x64xf32>
    %793 = arith.divf %791, %792 : vector<2x64xf32>
    %794 = arith.mulf %785, %765 : vector<2x64xf32>
    %795 = arith.mulf %779, %787 : vector<2x64xf32>
    %796 = arith.addf %794, %795 : vector<2x64xf32>
    %797 = math.tanh %796 : vector<2x64xf32>
    %798 = arith.mulf %793, %797 : vector<2x64xf32>
    %799 = vector.extract_strided_slice %609 {offsets = [12, 0], sizes = [2, 256], strides = [1, 1]} : vector<16x256xf32> to vector<2x256xf32>
    %800 = vector.extract_strided_slice %609 {offsets = [2, 0], sizes = [2, 256], strides = [1, 1]} : vector<16x256xf32> to vector<2x256xf32>
    %801 = arith.select %18, %799, %800 : vector<2x256xi1>, vector<2x256xf32>
    %802 = arith.truncf %798 : vector<2x64xf32> to vector<2x64xbf16>
    %cst_177 = arith.constant dense<0.000000e+00> : vector<2x256xf32>
    %803 = tpu.matmul %802, %610, %cst_177 {dimension_numbers = #tpu.dot_dimension_numbers<[1], [0], [0], [1], [0, 0, 1, 1], [], []>} : vector<2x64xbf16>, vector<64x256xbf16>, vector<2x256xf32> -> vector<2x256xf32>
    %804 = arith.addf %801, %803 : vector<2x256xf32>
    %805 = vector.extract_strided_slice %804 {offsets = [0, 0], sizes = [2, 64], strides = [1, 1]} : vector<2x256xf32> to vector<2x64xf32>
    %806 = arith.negf %805 : vector<2x64xf32>
    %807 = math.exp %806 : vector<2x64xf32>
    %cst_178 = arith.constant 1.000000e+00 : f32
    %808 = vector.broadcast %cst_178 : f32 to vector<2x64xf32>
    %809 = arith.addf %808, %807 : vector<2x64xf32>
    %810 = arith.divf %808, %809 : vector<2x64xf32>
    %811 = vector.extract_strided_slice %804 {offsets = [0, 64], sizes = [2, 64], strides = [1, 1]} : vector<2x256xf32> to vector<2x64xf32>
    %812 = arith.negf %811 : vector<2x64xf32>
    %813 = math.exp %812 : vector<2x64xf32>
    %cst_179 = arith.constant 1.000000e+00 : f32
    %814 = vector.broadcast %cst_179 : f32 to vector<2x64xf32>
    %815 = arith.addf %814, %813 : vector<2x64xf32>
    %816 = arith.divf %814, %815 : vector<2x64xf32>
    %817 = vector.extract_strided_slice %804 {offsets = [0, 128], sizes = [2, 64], strides = [1, 1]} : vector<2x256xf32> to vector<2x64xf32>
    %818 = math.tanh %817 : vector<2x64xf32>
    %819 = vector.extract_strided_slice %804 {offsets = [0, 192], sizes = [2, 64], strides = [1, 1]} : vector<2x256xf32> to vector<2x64xf32>
    %820 = arith.negf %819 : vector<2x64xf32>
    %821 = math.exp %820 : vector<2x64xf32>
    %cst_180 = arith.constant 1.000000e+00 : f32
    %822 = vector.broadcast %cst_180 : f32 to vector<2x64xf32>
    %823 = arith.addf %822, %821 : vector<2x64xf32>
    %824 = arith.divf %822, %823 : vector<2x64xf32>
    %825 = arith.mulf %816, %796 : vector<2x64xf32>
    %826 = arith.mulf %810, %818 : vector<2x64xf32>
    %827 = arith.addf %825, %826 : vector<2x64xf32>
    %828 = math.tanh %827 : vector<2x64xf32>
    %829 = arith.mulf %824, %828 : vector<2x64xf32>
    %830 = vector.extract_strided_slice %609 {offsets = [14, 0], sizes = [2, 256], strides = [1, 1]} : vector<16x256xf32> to vector<2x256xf32>
    %831 = vector.extract_strided_slice %609 {offsets = [0, 0], sizes = [2, 256], strides = [1, 1]} : vector<16x256xf32> to vector<2x256xf32>
    %832 = arith.select %18, %830, %831 : vector<2x256xi1>, vector<2x256xf32>
    %833 = arith.truncf %829 : vector<2x64xf32> to vector<2x64xbf16>
    %cst_181 = arith.constant dense<0.000000e+00> : vector<2x256xf32>
    %834 = tpu.matmul %833, %610, %cst_181 {dimension_numbers = #tpu.dot_dimension_numbers<[1], [0], [0], [1], [0, 0, 1, 1], [], []>} : vector<2x64xbf16>, vector<64x256xbf16>, vector<2x256xf32> -> vector<2x256xf32>
    %835 = arith.addf %832, %834 : vector<2x256xf32>
    %836 = vector.extract_strided_slice %835 {offsets = [0, 0], sizes = [2, 64], strides = [1, 1]} : vector<2x256xf32> to vector<2x64xf32>
    %837 = arith.negf %836 : vector<2x64xf32>
    %838 = math.exp %837 : vector<2x64xf32>
    %cst_182 = arith.constant 1.000000e+00 : f32
    %839 = vector.broadcast %cst_182 : f32 to vector<2x64xf32>
    %840 = arith.addf %839, %838 : vector<2x64xf32>
    %841 = arith.divf %839, %840 : vector<2x64xf32>
    %842 = vector.extract_strided_slice %835 {offsets = [0, 64], sizes = [2, 64], strides = [1, 1]} : vector<2x256xf32> to vector<2x64xf32>
    %843 = arith.negf %842 : vector<2x64xf32>
    %844 = math.exp %843 : vector<2x64xf32>
    %cst_183 = arith.constant 1.000000e+00 : f32
    %845 = vector.broadcast %cst_183 : f32 to vector<2x64xf32>
    %846 = arith.addf %845, %844 : vector<2x64xf32>
    %847 = arith.divf %845, %846 : vector<2x64xf32>
    %848 = vector.extract_strided_slice %835 {offsets = [0, 128], sizes = [2, 64], strides = [1, 1]} : vector<2x256xf32> to vector<2x64xf32>
    %849 = math.tanh %848 : vector<2x64xf32>
    %850 = vector.extract_strided_slice %835 {offsets = [0, 192], sizes = [2, 64], strides = [1, 1]} : vector<2x256xf32> to vector<2x64xf32>
    %851 = arith.negf %850 : vector<2x64xf32>
    %852 = math.exp %851 : vector<2x64xf32>
    %cst_184 = arith.constant 1.000000e+00 : f32
    %853 = vector.broadcast %cst_184 : f32 to vector<2x64xf32>
    %854 = arith.addf %853, %852 : vector<2x64xf32>
    %855 = arith.divf %853, %854 : vector<2x64xf32>
    %856 = arith.mulf %847, %827 : vector<2x64xf32>
    %857 = arith.mulf %841, %849 : vector<2x64xf32>
    %858 = arith.addf %856, %857 : vector<2x64xf32>
    %859 = math.tanh %858 : vector<2x64xf32>
    %860 = arith.mulf %855, %859 : vector<2x64xf32>
    %861 = arith.select %21, %860, %643 : vector<2x64xi1>, vector<2x64xf32>
    %862 = arith.addf %311, %602 : vector<2x64xf32>
    %863 = arith.addf %862, %861 : vector<2x64xf32>
    %864 = arith.truncf %863 : vector<2x64xf32> to vector<2x64xbf16>
    %c0_185 = arith.constant 0 : index
    %c0_186 = arith.constant 0 : index
    %865 = vector.load %arg10[%c0_185, %c0_186] : memref<64x4xbf16, #tpu.memory_space<vmem>>, vector<64x4xbf16>
    %cst_187 = arith.constant dense<0.000000e+00> : vector<2x4xf32>
    %866 = tpu.matmul %864, %865, %cst_187 {dimension_numbers = #tpu.dot_dimension_numbers<[1], [0], [0], [1], [0, 0, 1, 1], [], []>} : vector<2x64xbf16>, vector<64x4xbf16>, vector<2x4xf32> -> vector<2x4xf32>
    %c0_188 = arith.constant 0 : index
    %c0_189 = arith.constant 0 : index
    %867 = vector.load %arg11[%c0_188, %c0_189] : memref<1x4xf32, #tpu.memory_space<vmem>>, vector<1x4xf32>
    %868 = vector.broadcast %867 : vector<1x4xf32> to vector<2x4xf32>
    %869 = arith.addf %866, %868 : vector<2x4xf32>
    %c0_190 = arith.constant 0 : index
    %c0_191 = arith.constant 0 : index
    %870 = vector.load %arg12[%c0_190, %c0_191] : memref<2x4xf32, #tpu.memory_space<vmem>>, vector<2x4xf32>
    tpu.vector_store %arg12[%c0_190, %c0_191], %869 {strides = array<i32>} : memref<2x4xf32, #tpu.memory_space<vmem>>, vector<2x4xf32>,
    return
  }
}

</mosaic_0001>

<llo_original>
// kernel: bilstm_dense_forward.1
$region0: #{bilstm_dense_forward.1}
  #allocation0 [shape = 'u32[]', space=smem, size = 0x4, offset = 0x4, fixed_abs, tag = 'smem constant byte address 0x4 - core index']
  #allocation1 [shape = 'u32[144,128]{1,0:T(1,128)}', space=vmem, size = 0x12000, scoped, tag = 'internal scratch']
  #allocation2 [shape = 'f32[16,128]{1,0:T(8,128)}', space=vmem, size = 0x2000, scoped, tag = 'scratch operand']
  %s0 = inlined_call_operand.vmem [shape: bf16[16,16], index: 0, kind: input, shape index: {}]
  %s1 = inlined_call_operand.vmem [shape: bf16[16,256], index: 1, kind: input, shape index: {}]
  %s2 = inlined_call_operand.vmem [shape: f32[1,256], index: 2, kind: input, shape index: {}]
  %s3 = inlined_call_operand.vmem [shape: bf16[64,256], index: 3, kind: input, shape index: {}]
  %s4 = inlined_call_operand.vmem [shape: bf16[64,256], index: 4, kind: input, shape index: {}]
  %s5 = inlined_call_operand.vmem [shape: f32[1,256], index: 5, kind: input, shape index: {}]
  %s6 = inlined_call_operand.vmem [shape: bf16[64,256], index: 6, kind: input, shape index: {}]
  %s7 = inlined_call_operand.vmem [shape: bf16[128,256], index: 7, kind: input, shape index: {}]
  %s8 = inlined_call_operand.vmem [shape: f32[1,256], index: 8, kind: input, shape index: {}]
  %s9 = inlined_call_operand.vmem [shape: bf16[64,256], index: 9, kind: input, shape index: {}]
  %s10 = inlined_call_operand.vmem [shape: bf16[64,4], index: 10, kind: input, shape index: {}]
  %s11 = inlined_call_operand.vmem [shape: f32[1,4], index: 11, kind: input, shape index: {}]
  %s12 = inlined_call_operand.hbm [shape: f32[2,4], index: 12, kind: output, shape index: {}]
  %s13 = sld [smem:[#allocation0]]
  $region58: #{bilstm_dense_forward.1} parent=0
    _
  %s15 = ssub.s32 1, %s13
  %s16 = scalar_select 0, %s15, %s13
  $region1: #{bilstm_dense_forward.1} parent=0
    #allocation3 [shape = 'u8[1024]{0}', space=vmem, size = 0x400, scoped, tag = 'output window, operand 0, single buffered']
    #allocation4 [shape = 's32[1]{0}', space=sflag, size = 0x4, scoped, tag = 'scoped memory for bilstm_dense_forward.1']
    %17 = vsyncpa [#allocation4], 0
    // Predicated region
    $region2: #{bilstm_dense_forward.1} parent=1 // pred_check
      _
    $region3: #{bilstm_dense_forward.1} parent=1 // pred_check_branch
      %19 = sbr.rel (0) target = $region5
    $region4: #{bilstm_dense_forward.1} parent=1 // pred_region
      _
    $region5: #{bilstm_dense_forward.1} parent=1 // pred_fallthru
      _
    // Predicated region
    $region6: #{bilstm_dense_forward.1} parent=1 // pred_check
      _
    $region7: #{bilstm_dense_forward.1} parent=1 // pred_check_branch
      %21 = sbr.rel (0) target = $region9
    $region8: #{bilstm_dense_forward.1} parent=1 // pred_region
      _
    $region9: #{bilstm_dense_forward.1} parent=1 // pred_fallthru
      _
    // Predicated region
    $region10: #{bilstm_dense_forward.1} parent=1 // pred_check
      _
    $region11: #{bilstm_dense_forward.1} parent=1 // pred_check_branch
      %23 = sbr.rel (0) target = $region13
    $region12: #{bilstm_dense_forward.1} parent=1 // pred_region
      _
    $region13: #{bilstm_dense_forward.1} parent=1 // pred_fallthru
      _
    // Predicated region
    $region14: #{bilstm_dense_forward.1} parent=1 // pred_check
      _
    $region15: #{bilstm_dense_forward.1} parent=1 // pred_check_branch
      %25 = sbr.rel (0) target = $region17
    $region16: #{bilstm_dense_forward.1} parent=1 // pred_region
      _
    $region17: #{bilstm_dense_forward.1} parent=1 // pred_fallthru
      _
    // Predicated region
    $region18: #{bilstm_dense_forward.1} parent=1 // pred_check
      _
    $region19: #{bilstm_dense_forward.1} parent=1 // pred_check_branch
      %27 = sbr.rel (0) target = $region21
    $region20: #{bilstm_dense_forward.1} parent=1 // pred_region
      _
    $region21: #{bilstm_dense_forward.1} parent=1 // pred_fallthru
      _
    // Predicated region
    $region22: #{bilstm_dense_forward.1} parent=1 // pred_check
      _
    $region23: #{bilstm_dense_forward.1} parent=1 // pred_check_branch
      %29 = sbr.rel (0) target = $region25
    $region24: #{bilstm_dense_forward.1} parent=1 // pred_region
      _
    $region25: #{bilstm_dense_forward.1} parent=1 // pred_fallthru
      _
    // Predicated region
    $region26: #{bilstm_dense_forward.1} parent=1 // pred_check
      _
    $region27: #{bilstm_dense_forward.1} parent=1 // pred_check_branch
      %31 = sbr.rel (0) target = $region29
    $region28: #{bilstm_dense_forward.1} parent=1 // pred_region
      _
    $region29: #{bilstm_dense_forward.1} parent=1 // pred_fallthru
      _
    // Predicated region
    $region30: #{bilstm_dense_forward.1} parent=1 // pred_check
      _
    $region31: #{bilstm_dense_forward.1} parent=1 // pred_check_branch
      %33 = sbr.rel (0) target = $region33
    $region32: #{bilstm_dense_forward.1} parent=1 // pred_region
      _
    $region33: #{bilstm_dense_forward.1} parent=1 // pred_fallthru
      _
    // Predicated region
    $region34: #{bilstm_dense_forward.1} parent=1 // pred_check
      _
    $region35: #{bilstm_dense_forward.1} parent=1 // pred_check_branch
      %35 = sbr.rel (0) target = $region37
    $region36: #{bilstm_dense_forward.1} parent=1 // pred_region
      _
    $region37: #{bilstm_dense_forward.1} parent=1 // pred_fallthru
      _
    // Predicated region
    $region38: #{bilstm_dense_forward.1} parent=1 // pred_check
      _
    $region39: #{bilstm_dense_forward.1} parent=1 // pred_check_branch
      %37 = sbr.rel (0) target = $region41
    $region40: #{bilstm_dense_forward.1} parent=1 // pred_region
      _
    $region41: #{bilstm_dense_forward.1} parent=1 // pred_fallthru
      _
    // Predicated region
    $region42: #{bilstm_dense_forward.1} parent=1 // pred_check
      _
    $region43: #{bilstm_dense_forward.1} parent=1 // pred_check_branch
      %39 = sbr.rel (0) target = $region45
    $region44: #{bilstm_dense_forward.1} parent=1 // pred_region
      _
    $region45: #{bilstm_dense_forward.1} parent=1 // pred_fallthru
      _
    // Predicated region
    $region46: #{bilstm_dense_forward.1} parent=1 // pred_check
      _
    $region47: #{bilstm_dense_forward.1} parent=1 // pred_check_branch
      %41 = sbr.rel (0) target = $region49
    $region48: #{bilstm_dense_forward.1} parent=1 // pred_region
      _
    $region49: #{bilstm_dense_forward.1} parent=1 // pred_fallthru
      _
    %v43 = vlaneseq
    %v44 = vand.u32 %v43, 127
    %v45 = vadd.s32 %v44, 128
    %vm46 = vcmp.lt.s32.totalorder %v44, 0
    %v47 = vsub.s32 0, %v44
    %v48 = vsel %vm46, %v47, %v44
    %v49 = vshrl.u32 %v48, 6
    %v50 = vand.u32 %v48, 63
    %v51 = vsub.s32 0, %v50
    %v52 = vsel %vm46, %v51, %v50
    %vm53 = vcmp.lt.s32.totalorder %v45, 0
    %v54 = vsub.s32 0, %v45
    %v55 = vsel %vm53, %v54, %v45
    %v56 = vshrl.u32 %v55, 6
    %v57 = vand.u32 %v55, 63
    %v58 = vsub.s32 0, %v57
    %v59 = vsel %vm53, %v58, %v57
    %vm60 = vcmp.ne.s32.totalorder %v52, 0
    %vm61 = vcmp.ne.s32.totalorder %v59, 0
    %vm62 = vcmp.lt.s32.totalorder %v52, 0
    %vm63 = vcmp.lt.s32.totalorder %v59, 0
    %vm64 = vmand %vm62, %vm60
    %vm65 = vmand %vm63, %vm61
    %v66 = vadd.s32 %v52, 64
    %v67 = vadd.s32 %v59, 64
    %v68 = vsel %vm64, %v66, %v52
    %v69 = vsel %vm65, %v67, %v59
    %vm70 = vcmp.lt.s32.totalorder %v68, 32
    %vm71 = vcmp.lt.s32.totalorder %v69, 32
    %vm72 = vcmp.lt.s32.totalorder %v44, 32
    %v73 = vld [vmem:[%s0] sm:$0xf]
    %v74 = vld [vmem:[%s0 + $0x4] sm:$0xf]
    %v75 = vld [vmem:[%s1] sm:$0xff]
    %v76 = vld [vmem:[%s1 + $0x8] sm:$0xff]
    %v77 = vld [vmem:[%s2] sm:$0x3]
    %v79 = vlaneseq
    %v80 = vshrl.u32 %v79, 7
    %v81 = vsub.s32 0, %v80
    %v82 = vrot.slane %v77, %v81
    %v83 = vlaneseq
    %v84 = vshrl.u32 %v83, 7
    %v85 = vsub.s32 1, %v84
    %v86 = vrot.slane %v77, %v85
    %v91 = vunpack.c.l.b16 %v73
    %v92 = vunpack.c.l.b16 %v74
    %v93 = vpack.c.b16 %v92, %v91
    %v96 = vunpack.c.l.b16 %v75
    %v97 = vunpack.c.h.b16 %v75
    %v98 = vunpack.c.l.b16 %v76
    %v99 = vunpack.c.h.b16 %v76
    %v100 = vpack.c.b16 %v98, %v96
    %v101 = vpack.c.b16 %v99, %v97
    %vm104 = vcmask 130048
    %v106 = vsel %vm104, %v93, 0
    %108 = vmatprep.subr.bf16.mxu0 %v101
    %109 = vmatpush1.bf16.msra.mxu0 %v100
    %110 = vmatprep.subr.bf16.mxu0 0
    %111 = vmatpush1.bf16.msra.mxu0 0
    %112 = vmatprep.subr.bf16.mxu0 0
    %113 = vmatpush1.bf16.msra.mxu0 0
    %114 = vmatprep.subr.bf16.mxu0 0
    %115 = vmatpush1.bf16.msra.mxu0 0
    %116 = vmatprep.subr.bf16.mxu0 0
    %117 = vmatpush1.bf16.msra.mxu0 0
    %118 = vmatprep.subr.bf16.mxu0 0
    %119 = vmatpush1.bf16.msra.mxu0 0
    %120 = vmatprep.subr.bf16.mxu0 0
    %121 = vmatpush1.bf16.msra.mxu0 0
    %122 = vmatprep.subr.bf16.mxu0 0
    %123 = vmatpush1.bf16.msra.mxu0 0
    %124 = vmatprep.subr.bf16.mxu0 0
    %125 = vmatpush1.bf16.msra.mxu0 0
    %126 = vmatprep.subr.bf16.mxu0 0
    %127 = vmatpush1.bf16.msra.mxu0 0
    %128 = vmatprep.subr.bf16.mxu0 0
    %129 = vmatpush1.bf16.msra.mxu0 0
    %130 = vmatprep.subr.bf16.mxu0 0
    %131 = vmatpush1.bf16.msra.mxu0 0
    %132 = vmatprep.subr.bf16.mxu0 0
    %133 = vmatpush1.bf16.msra.mxu0 0
    %134 = vmatprep.subr.bf16.mxu0 0
    %135 = vmatpush1.bf16.msra.mxu0 0
    %136 = vmatprep.subr.bf16.mxu0 0
    %137 = vmatpush1.bf16.msra.mxu0 0
    %138 = vmatprep.subr.bf16.mxu0 0
    %139 = vmatpush1.bf16.msra.mxu0 0
    %140 = vmatprep.mubr.bf16.mxu0 0
    %141 = vmatmul.mubr.bf16.gmra.mrb[0].mxu0 %v106
    %v142 = vpop.f32.mrb[0].mxu0
    %v143 = vadd.f32 %v82, %v142
    %v144 = vpop.f32.mrb[0].mxu0
    %v145 = vadd.f32 %v86, %v144
    %v146 = vpop.f32.mrb[0].mxu0
    %v147 = vadd.f32 %v82, %v146
    %v148 = vpop.f32.mrb[0].mxu0
    %v149 = vadd.f32 %v86, %v148
    %150 = vdwg.mxu0
    %v151 = vld [vmem:[%s3] sm:$0xff]
    %v152 = vld [vmem:[%s3 + $0x8] sm:$0xff]
    %v153 = vld [vmem:[%s3 + $0x10] sm:$0xff]
    %v154 = vld [vmem:[%s3 + $0x18] sm:$0xff]
    %v155 = vld [vmem:[%s3 + $0x20] sm:$0xff]
    %v156 = vld [vmem:[%s3 + $0x28] sm:$0xff]
    %v157 = vld [vmem:[%s3 + $0x30] sm:$0xff]
    %v158 = vld [vmem:[%s3 + $0x38] sm:$0xff]
    %v161 = vrot.slane %v147, 6
    %v162 = vrot.slane %v149, 6
    %v165 = vsel %vm70, %v143, %v161
    %v166 = vsel %vm71, %v145, %v162
    %v175 = vunpack.c.l.b16 %v151
    %v176 = vunpack.c.h.b16 %v151
    %v177 = vunpack.c.l.b16 %v152
    %v178 = vunpack.c.h.b16 %v152
    %v179 = vunpack.c.l.b16 %v153
    %v180 = vunpack.c.h.b16 %v153
    %v181 = vunpack.c.l.b16 %v154
    %v182 = vunpack.c.h.b16 %v154
    %v183 = vunpack.c.l.b16 %v155
    %v184 = vunpack.c.h.b16 %v155
    %v185 = vunpack.c.l.b16 %v156
    %v186 = vunpack.c.h.b16 %v156
    %v187 = vunpack.c.l.b16 %v157
    %v188 = vunpack.c.h.b16 %v157
    %v189 = vunpack.c.l.b16 %v158
    %v190 = vunpack.c.h.b16 %v158
    %v191 = vpack.c.b16 %v177, %v175
    %v192 = vpack.c.b16 %v178, %v176
    %v193 = vpack.c.b16 %v181, %v179
    %v194 = vpack.c.b16 %v182, %v180
    %v195 = vpack.c.b16 %v185, %v183
    %v196 = vpack.c.b16 %v186, %v184
    %v197 = vpack.c.b16 %v189, %v187
    %v198 = vpack.c.b16 %v190, %v188
    %vm207 = vcmask 523264
    %v209 = vsel %vm207, 0, 0
    %211 = vmatprep.subr.bf16.mxu0 %v192
    %212 = vmatpush1.bf16.msra.mxu0 %v191
    %213 = vmatprep.subr.bf16.mxu0 %v194
    %214 = vmatpush1.bf16.msra.mxu0 %v193
    %215 = vmatprep.subr.bf16.mxu0 %v196
    %216 = vmatpush1.bf16.msra.mxu0 %v195
    %217 = vmatprep.subr.bf16.mxu0 %v198
    %218 = vmatpush1.bf16.msra.mxu0 %v197
    %219 = vmatprep.subr.bf16.mxu0 0
    %220 = vmatpush1.bf16.msra.mxu0 0
    %221 = vmatprep.subr.bf16.mxu0 0
    %222 = vmatpush1.bf16.msra.mxu0 0
    %223 = vmatprep.subr.bf16.mxu0 0
    %224 = vmatpush1.bf16.msra.mxu0 0
    %225 = vmatprep.subr.bf16.mxu0 0
    %226 = vmatpush1.bf16.msra.mxu0 0
    %227 = vmatprep.subr.bf16.mxu0 0
    %228 = vmatpush1.bf16.msra.mxu0 0
    %229 = vmatprep.subr.bf16.mxu0 0
    %230 = vmatpush1.bf16.msra.mxu0 0
    %231 = vmatprep.subr.bf16.mxu0 0
    %232 = vmatpush1.bf16.msra.mxu0 0
    %233 = vmatprep.subr.bf16.mxu0 0
    %234 = vmatpush1.bf16.msra.mxu0 0
    %235 = vmatprep.subr.bf16.mxu0 0
    %236 = vmatpush1.bf16.msra.mxu0 0
    %237 = vmatprep.subr.bf16.mxu0 0
    %238 = vmatpush1.bf16.msra.mxu0 0
    %239 = vmatprep.subr.bf16.mxu0 0
    %240 = vmatpush1.bf16.msra.mxu0 0
    %241 = vmatprep.subr.bf16.mxu0 0
    %242 = vmatpush1.bf16.msra.mxu0 0
    %243 = vmatprep.mubr.bf16.mxu0 0
    %244 = vmatmul.mubr.bf16.gmra.mrb[0].mxu0 %v209
    %v245 = vpop.f32.mrb[0].mxu0
    %v246 = vadd.f32 0.0, %v245
    %v247 = vpop.f32.mrb[0].mxu0
    %v248 = vadd.f32 0.0, %v247
    %v249 = vpop.f32.mrb[0].mxu0
    %v250 = vpop.f32.mrb[0].mxu0
    %251 = vdwg.mxu0
    %v252 = vadd.f32 %v165, %v246
    %v253 = vadd.f32 %v166, %v248
    %v254 = vxor.u32 %v252, 2147483648
    %v255 = vmul.f32 %v254, 1.442695
    %v256 = vpow.pop %v255
    %v257 = vadd.f32 %v256, 1.0
    %v258 = vrcp.pop %v257
    %v259 = vmul.f32 1.0, %v258
    %v260 = vtanh.pop %v253
    %v261 = vxor.u32 %v253, 2147483648
    %v262 = vmul.f32 %v261, 1.442695
    %v263 = vpow.pop %v262
    %v264 = vadd.f32 %v263, 1.0
    %v265 = vrcp.pop %v264
    %v266 = vmul.f32 1.0, %v265
    %v267 = vmul.f32 %v259, 0.0
    %v268 = vmul.f32 %v259, %v260
    %270 = vrot.lane.b32.xlu0 %v268, 64
    %v271 = vpop.permute.xlu0 %270
    %v273 = vadd.f32 %v267, %v271
    %v274 = vtanh.pop %v273
    %v275 = vmul.f32 %v266, %v274
    %277 = vrot.lane.b32.xlu0 %v275, 64
    %v278 = vpop.permute.xlu0 %277
    %vm280 = vcmask 254976
    %281 = vst.msk [vmem:[#allocation2] sm:$0x3] %vm280, %v278
    %vm282 = vcmask 517376
    %283 = vst.msk [vmem:[#allocation2 + $0xe] sm:$0x3] %vm282, %v278
    %v284 = vrot.slane %v147, 2
    %v285 = vrot.slane %v149, 2
    %v288 = vsel %vm70, %v143, %v284
    %v289 = vsel %vm71, %v145, %v285
    %v290 = vpack.c.bf16 %v275, %v275
    %292 = vrot.lane.b32.xlu0 %v290, 64
    %v293 = vpop.permute.xlu0 %292
    %v295 = vsel %vm207, %v293, 0
    %297 = vmatprep.subr.bf16.mxu0 %v192
    %298 = vmatpush1.bf16.msra.mxu0 %v191
    %299 = vmatprep.subr.bf16.mxu0 %v194
    %300 = vmatpush1.bf16.msra.mxu0 %v193
    %301 = vmatprep.subr.bf16.mxu0 %v196
    %302 = vmatpush1.bf16.msra.mxu0 %v195
    %303 = vmatprep.subr.bf16.mxu0 %v198
    %304 = vmatpush1.bf16.msra.mxu0 %v197
    %305 = vmatprep.subr.bf16.mxu0 0
    %306 = vmatpush1.bf16.msra.mxu0 0
    %307 = vmatprep.subr.bf16.mxu0 0
    %308 = vmatpush1.bf16.msra.mxu0 0
    %309 = vmatprep.subr.bf16.mxu0 0
    %310 = vmatpush1.bf16.msra.mxu0 0
    %311 = vmatprep.subr.bf16.mxu0 0
    %312 = vmatpush1.bf16.msra.mxu0 0
    %313 = vmatprep.subr.bf16.mxu0 0
    %314 = vmatpush1.bf16.msra.mxu0 0
    %315 = vmatprep.subr.bf16.mxu0 0
    %316 = vmatpush1.bf16.msra.mxu0 0
    %317 = vmatprep.subr.bf16.mxu0 0
    %318 = vmatpush1.bf16.msra.mxu0 0
    %319 = vmatprep.subr.bf16.mxu0 0
    %320 = vmatpush1.bf16.msra.mxu0 0
    %321 = vmatprep.subr.bf16.mxu0 0
    %322 = vmatpush1.bf16.msra.mxu0 0
    %323 = vmatprep.subr.bf16.mxu0 0
    %324 = vmatpush1.bf16.msra.mxu0 0
    %325 = vmatprep.subr.bf16.mxu0 0
    %326 = vmatpush1.bf16.msra.mxu0 0
    %327 = vmatprep.subr.bf16.mxu0 0
    %328 = vmatpush1.bf16.msra.mxu0 0
    %329 = vmatprep.mubr.bf16.mxu0 0
    %330 = vmatmul.mubr.bf16.gmra.mrb[0].mxu0 %v295
    %v331 = vpop.f32.mrb[0].mxu0
    %v332 = vadd.f32 0.0, %v331
    %v333 = vpop.f32.mrb[0].mxu0
    %v334 = vadd.f32 0.0, %v333
    %v335 = vpop.f32.mrb[0].mxu0
    %v336 = vpop.f32.mrb[0].mxu0
    %337 = vdwg.mxu0
    %v340 = vrot.slane %v332, 6
    %v341 = vrot.slane %v334, 6
    %v344 = vadd.f32 %v288, %v340
    %v345 = vadd.f32 %v289, %v341
    %v346 = vxor.u32 %v344, 2147483648
    %v347 = vmul.f32 %v346, 1.442695
    %v348 = vpow.pop %v347
    %v349 = vadd.f32 %v348, 1.0
    %v350 = vrcp.pop %v349
    %v351 = vmul.f32 1.0, %v350
    %v352 = vtanh.pop %v345
    %v353 = vxor.u32 %v345, 2147483648
    %v354 = vmul.f32 %v353, 1.442695
    %v355 = vpow.pop %v354
    %v356 = vadd.f32 %v355, 1.0
    %v357 = vrcp.pop %v356
    %v358 = vmul.f32 1.0, %v357
    %v360 = vrot.slane %v273, 6
    %v362 = vmul.f32 %v351, %v360
    %v363 = vmul.f32 %v351, %v352
    %365 = vrot.lane.b32.xlu0 %v363, 64
    %v366 = vpop.permute.xlu0 %365
    %v368 = vadd.f32 %v362, %v366
    %v369 = vtanh.pop %v368
    %v370 = vmul.f32 %v358, %v369
    %372 = vrot.lane.b32.xlu0 %v370, 64
    %v373 = vpop.permute.xlu0 %372
    %vm375 = vcmask 257026
    %376 = vst.msk [vmem:[#allocation2] sm:$0xc] %vm375, %v373
    %vm377 = vcmask 519426
    %378 = vst.msk [vmem:[#allocation2 + $0xa] sm:$0xc] %vm377, %v373
    %v379 = vpack.c.bf16 %v370, %v370
    %v381 = vrot.slane %v379, 1
    %382 = vrot.lane.b32.xlu0 %v381, 64
    %v383 = vpop.permute.xlu0 %382
    %v385 = vsel %vm207, %v383, 0
    %387 = vmatprep.subr.bf16.mxu0 %v192
    %388 = vmatpush1.bf16.msra.mxu0 %v191
    %389 = vmatprep.subr.bf16.mxu0 %v194
    %390 = vmatpush1.bf16.msra.mxu0 %v193
    %391 = vmatprep.subr.bf16.mxu0 %v196
    %392 = vmatpush1.bf16.msra.mxu0 %v195
    %393 = vmatprep.subr.bf16.mxu0 %v198
    %394 = vmatpush1.bf16.msra.mxu0 %v197
    %395 = vmatprep.subr.bf16.mxu0 0
    %396 = vmatpush1.bf16.msra.mxu0 0
    %397 = vmatprep.subr.bf16.mxu0 0
    %398 = vmatpush1.bf16.msra.mxu0 0
    %399 = vmatprep.subr.bf16.mxu0 0
    %400 = vmatpush1.bf16.msra.mxu0 0
    %401 = vmatprep.subr.bf16.mxu0 0
    %402 = vmatpush1.bf16.msra.mxu0 0
    %403 = vmatprep.subr.bf16.mxu0 0
    %404 = vmatpush1.bf16.msra.mxu0 0
    %405 = vmatprep.subr.bf16.mxu0 0
    %406 = vmatpush1.bf16.msra.mxu0 0
    %407 = vmatprep.subr.bf16.mxu0 0
    %408 = vmatpush1.bf16.msra.mxu0 0
    %409 = vmatprep.subr.bf16.mxu0 0
    %410 = vmatpush1.bf16.msra.mxu0 0
    %411 = vmatprep.subr.bf16.mxu0 0
    %412 = vmatpush1.bf16.msra.mxu0 0
    %413 = vmatprep.subr.bf16.mxu0 0
    %414 = vmatpush1.bf16.msra.mxu0 0
    %415 = vmatprep.subr.bf16.mxu0 0
    %416 = vmatpush1.bf16.msra.mxu0 0
    %417 = vmatprep.subr.bf16.mxu0 0
    %418 = vmatpush1.bf16.msra.mxu0 0
    %419 = vmatprep.mubr.bf16.mxu0 0
    %420 = vmatmul.mubr.bf16.gmra.mrb[0].mxu0 %v385
    %v421 = vpop.f32.mrb[0].mxu0
    %v422 = vadd.f32 0.0, %v421
    %v423 = vpop.f32.mrb[0].mxu0
    %v424 = vadd.f32 0.0, %v423
    %v425 = vpop.f32.mrb[0].mxu0
    %v426 = vpop.f32.mrb[0].mxu0
    %427 = vdwg.mxu0
    %v430 = vrot.slane %v422, 4
    %v431 = vrot.slane %v424, 4
    %v434 = vadd.f32 %v165, %v430
    %v435 = vadd.f32 %v166, %v431
    %v436 = vxor.u32 %v434, 2147483648
    %v437 = vmul.f32 %v436, 1.442695
    %v438 = vpow.pop %v437
    %v439 = vadd.f32 %v438, 1.0
    %v440 = vrcp.pop %v439
    %v441 = vmul.f32 1.0, %v440
    %v442 = vtanh.pop %v435
    %v443 = vxor.u32 %v435, 2147483648
    %v444 = vmul.f32 %v443, 1.442695
    %v445 = vpow.pop %v444
    %v446 = vadd.f32 %v445, 1.0
    %v447 = vrcp.pop %v446
    %v448 = vmul.f32 1.0, %v447
    %v450 = vrot.slane %v368, 6
    %v452 = vmul.f32 %v441, %v450
    %v453 = vmul.f32 %v441, %v442
    %455 = vrot.lane.b32.xlu0 %v453, 64
    %v456 = vpop.permute.xlu0 %455
    %v458 = vadd.f32 %v452, %v456
    %v459 = vtanh.pop %v458
    %v460 = vmul.f32 %v448, %v459
    %462 = vrot.lane.b32.xlu0 %v460, 64
    %v463 = vpop.permute.xlu0 %462
    %vm465 = vcmask 259076
    %466 = vst.msk [vmem:[#allocation2] sm:$0x30] %vm465, %v463
    %vm467 = vcmask 521476
    %468 = vst.msk [vmem:[#allocation2 + $0x6] sm:$0x30] %vm467, %v463
    %v469 = vpack.c.bf16 %v460, %v460
    %v471 = vrot.slane %v469, 2
    %472 = vrot.lane.b32.xlu0 %v471, 64
    %v473 = vpop.permute.xlu0 %472
    %v475 = vsel %vm207, %v473, 0
    %477 = vmatprep.subr.bf16.mxu0 %v192
    %478 = vmatpush1.bf16.msra.mxu0 %v191
    %479 = vmatprep.subr.bf16.mxu0 %v194
    %480 = vmatpush1.bf16.msra.mxu0 %v193
    %481 = vmatprep.subr.bf16.mxu0 %v196
    %482 = vmatpush1.bf16.msra.mxu0 %v195
    %483 = vmatprep.subr.bf16.mxu0 %v198
    %484 = vmatpush1.bf16.msra.mxu0 %v197
    %485 = vmatprep.subr.bf16.mxu0 0
    %486 = vmatpush1.bf16.msra.mxu0 0
    %487 = vmatprep.subr.bf16.mxu0 0
    %488 = vmatpush1.bf16.msra.mxu0 0
    %489 = vmatprep.subr.bf16.mxu0 0
    %490 = vmatpush1.bf16.msra.mxu0 0
    %491 = vmatprep.subr.bf16.mxu0 0
    %492 = vmatpush1.bf16.msra.mxu0 0
    %493 = vmatprep.subr.bf16.mxu0 0
    %494 = vmatpush1.bf16.msra.mxu0 0
    %495 = vmatprep.subr.bf16.mxu0 0
    %496 = vmatpush1.bf16.msra.mxu0 0
    %497 = vmatprep.subr.bf16.mxu0 0
    %498 = vmatpush1.bf16.msra.mxu0 0
    %499 = vmatprep.subr.bf16.mxu0 0
    %500 = vmatpush1.bf16.msra.mxu0 0
    %501 = vmatprep.subr.bf16.mxu0 0
    %502 = vmatpush1.bf16.msra.mxu0 0
    %503 = vmatprep.subr.bf16.mxu0 0
    %504 = vmatpush1.bf16.msra.mxu0 0
    %505 = vmatprep.subr.bf16.mxu0 0
    %506 = vmatpush1.bf16.msra.mxu0 0
    %507 = vmatprep.subr.bf16.mxu0 0
    %508 = vmatpush1.bf16.msra.mxu0 0
    %509 = vmatprep.mubr.bf16.mxu0 0
    %510 = vmatmul.mubr.bf16.gmra.mrb[0].mxu0 %v475
    %v511 = vpop.f32.mrb[0].mxu0
    %v512 = vadd.f32 0.0, %v511
    %v513 = vpop.f32.mrb[0].mxu0
    %v514 = vadd.f32 0.0, %v513
    %v515 = vpop.f32.mrb[0].mxu0
    %v516 = vpop.f32.mrb[0].mxu0
    %517 = vdwg.mxu0
    %v520 = vrot.slane %v512, 2
    %v521 = vrot.slane %v514, 2
    %v524 = vadd.f32 %v288, %v520
    %v525 = vadd.f32 %v289, %v521
    %v526 = vxor.u32 %v524, 2147483648
    %v527 = vmul.f32 %v526, 1.442695
    %v528 = vpow.pop %v527
    %v529 = vadd.f32 %v528, 1.0
    %v530 = vrcp.pop %v529
    %v531 = vmul.f32 1.0, %v530
    %v532 = vtanh.pop %v525
    %v533 = vxor.u32 %v525, 2147483648
    %v534 = vmul.f32 %v533, 1.442695
    %v535 = vpow.pop %v534
    %v536 = vadd.f32 %v535, 1.0
    %v537 = vrcp.pop %v536
    %v538 = vmul.f32 1.0, %v537
    %v540 = vrot.slane %v458, 6
    %v542 = vmul.f32 %v531, %v540
    %v543 = vmul.f32 %v531, %v532
    %545 = vrot.lane.b32.xlu0 %v543, 64
    %v546 = vpop.permute.xlu0 %545
    %v548 = vadd.f32 %v542, %v546
    %v549 = vtanh.pop %v548
    %v550 = vmul.f32 %v538, %v549
    %552 = vrot.lane.b32.xlu0 %v550, 64
    %v553 = vpop.permute.xlu0 %552
    %vm555 = vcmask 261126
    %556 = vst.msk [vmem:[#allocation2] sm:$0xc0] %vm555, %v553
    %vm557 = vcmask 523526
    %558 = vst.msk [vmem:[#allocation2 + $0x2] sm:$0xc0] %vm557, %v553
    %v561 = vrot.slane %v143, 6
    %v562 = vrot.slane %v145, 6
    %v565 = vsel %vm70, %v147, %v561
    %v566 = vsel %vm71, %v149, %v562
    %v567 = vpack.c.bf16 %v550, %v550
    %v569 = vrot.slane %v567, 3
    %570 = vrot.lane.b32.xlu0 %v569, 64
    %v571 = vpop.permute.xlu0 %570
    %v573 = vsel %vm207, %v571, 0
    %575 = vmatprep.subr.bf16.mxu0 %v192
    %576 = vmatpush1.bf16.msra.mxu0 %v191
    %577 = vmatprep.subr.bf16.mxu0 %v194
    %578 = vmatpush1.bf16.msra.mxu0 %v193
    %579 = vmatprep.subr.bf16.mxu0 %v196
    %580 = vmatpush1.bf16.msra.mxu0 %v195
    %581 = vmatprep.subr.bf16.mxu0 %v198
    %582 = vmatpush1.bf16.msra.mxu0 %v197
    %583 = vmatprep.subr.bf16.mxu0 0
    %584 = vmatpush1.bf16.msra.mxu0 0
    %585 = vmatprep.subr.bf16.mxu0 0
    %586 = vmatpush1.bf16.msra.mxu0 0
    %587 = vmatprep.subr.bf16.mxu0 0
    %588 = vmatpush1.bf16.msra.mxu0 0
    %589 = vmatprep.subr.bf16.mxu0 0
    %590 = vmatpush1.bf16.msra.mxu0 0
    %591 = vmatprep.subr.bf16.mxu0 0
    %592 = vmatpush1.bf16.msra.mxu0 0
    %593 = vmatprep.subr.bf16.mxu0 0
    %594 = vmatpush1.bf16.msra.mxu0 0
    %595 = vmatprep.subr.bf16.mxu0 0
    %596 = vmatpush1.bf16.msra.mxu0 0
    %597 = vmatprep.subr.bf16.mxu0 0
    %598 = vmatpush1.bf16.msra.mxu0 0
    %599 = vmatprep.subr.bf16.mxu0 0
    %600 = vmatpush1.bf16.msra.mxu0 0
    %601 = vmatprep.subr.bf16.mxu0 0
    %602 = vmatpush1.bf16.msra.mxu0 0
    %603 = vmatprep.subr.bf16.mxu0 0
    %604 = vmatpush1.bf16.msra.mxu0 0
    %605 = vmatprep.subr.bf16.mxu0 0
    %606 = vmatpush1.bf16.msra.mxu0 0
    %607 = vmatprep.mubr.bf16.mxu0 0
    %608 = vmatmul.mubr.bf16.gmra.mrb[0].mxu0 %v573
    %v609 = vpop.f32.mrb[0].mxu0
    %v610 = vadd.f32 0.0, %v609
    %v611 = vpop.f32.mrb[0].mxu0
    %v612 = vadd.f32 0.0, %v611
    %v613 = vpop.f32.mrb[0].mxu0
    %v614 = vpop.f32.mrb[0].mxu0
    %615 = vdwg.mxu0
    %v616 = vadd.f32 %v565, %v610
    %v617 = vadd.f32 %v566, %v612
    %v618 = vxor.u32 %v616, 2147483648
    %v619 = vmul.f32 %v618, 1.442695
    %v620 = vpow.pop %v619
    %v621 = vadd.f32 %v620, 1.0
    %v622 = vrcp.pop %v621
    %v623 = vmul.f32 1.0, %v622
    %v624 = vtanh.pop %v617
    %v625 = vxor.u32 %v617, 2147483648
    %v626 = vmul.f32 %v625, 1.442695
    %v627 = vpow.pop %v626
    %v628 = vadd.f32 %v627, 1.0
    %v629 = vrcp.pop %v628
    %v630 = vmul.f32 1.0, %v629
    %v632 = vrot.slane %v548, 6
    %v634 = vmul.f32 %v623, %v632
    %v635 = vmul.f32 %v623, %v624
    %637 = vrot.lane.b32.xlu0 %v635, 64
    %v638 = vpop.permute.xlu0 %637
    %v640 = vadd.f32 %v634, %v638
    %v641 = vtanh.pop %v640
    %v642 = vmul.f32 %v630, %v641
    %644 = vrot.lane.b32.xlu0 %v642, 64
    %v645 = vpop.permute.xlu0 %644
    %647 = vst.msk [vmem:[#allocation2 + $0x8] sm:$0x3] %vm280, %v645
    %648 = vst.msk [vmem:[#allocation2 + $0x6] sm:$0x3] %vm282, %v645
    %v649 = vrot.slane %v143, 2
    %v650 = vrot.slane %v145, 2
    %v653 = vsel %vm70, %v147, %v649
    %v654 = vsel %vm71, %v149, %v650
    %v655 = vpack.c.bf16 %v642, %v642
    %657 = vrot.lane.b32.xlu0 %v655, 64
    %v658 = vpop.permute.xlu0 %657
    %v660 = vsel %vm207, %v658, 0
    %662 = vmatprep.subr.bf16.mxu0 %v192
    %663 = vmatpush1.bf16.msra.mxu0 %v191
    %664 = vmatprep.subr.bf16.mxu0 %v194
    %665 = vmatpush1.bf16.msra.mxu0 %v193
    %666 = vmatprep.subr.bf16.mxu0 %v196
    %667 = vmatpush1.bf16.msra.mxu0 %v195
    %668 = vmatprep.subr.bf16.mxu0 %v198
    %669 = vmatpush1.bf16.msra.mxu0 %v197
    %670 = vmatprep.subr.bf16.mxu0 0
    %671 = vmatpush1.bf16.msra.mxu0 0
    %672 = vmatprep.subr.bf16.mxu0 0
    %673 = vmatpush1.bf16.msra.mxu0 0
    %674 = vmatprep.subr.bf16.mxu0 0
    %675 = vmatpush1.bf16.msra.mxu0 0
    %676 = vmatprep.subr.bf16.mxu0 0
    %677 = vmatpush1.bf16.msra.mxu0 0
    %678 = vmatprep.subr.bf16.mxu0 0
    %679 = vmatpush1.bf16.msra.mxu0 0
    %680 = vmatprep.subr.bf16.mxu0 0
    %681 = vmatpush1.bf16.msra.mxu0 0
    %682 = vmatprep.subr.bf16.mxu0 0
    %683 = vmatpush1.bf16.msra.mxu0 0
    %684 = vmatprep.subr.bf16.mxu0 0
    %685 = vmatpush1.bf16.msra.mxu0 0
    %686 = vmatprep.subr.bf16.mxu0 0
    %687 = vmatpush1.bf16.msra.mxu0 0
    %688 = vmatprep.subr.bf16.mxu0 0
    %689 = vmatpush1.bf16.msra.mxu0 0
    %690 = vmatprep.subr.bf16.mxu0 0
    %691 = vmatpush1.bf16.msra.mxu0 0
    %692 = vmatprep.subr.bf16.mxu0 0
    %693 = vmatpush1.bf16.msra.mxu0 0
    %694 = vmatprep.mubr.bf16.mxu0 0
    %695 = vmatmul.mubr.bf16.gmra.mrb[0].mxu0 %v660
    %v696 = vpop.f32.mrb[0].mxu0
    %v697 = vadd.f32 0.0, %v696
    %v698 = vpop.f32.mrb[0].mxu0
    %v699 = vadd.f32 0.0, %v698
    %v700 = vpop.f32.mrb[0].mxu0
    %v701 = vpop.f32.mrb[0].mxu0
    %702 = vdwg.mxu0
    %v705 = vrot.slane %v697, 6
    %v706 = vrot.slane %v699, 6
    %v709 = vadd.f32 %v653, %v705
    %v710 = vadd.f32 %v654, %v706
    %v711 = vxor.u32 %v709, 2147483648
    %v712 = vmul.f32 %v711, 1.442695
    %v713 = vpow.pop %v712
    %v714 = vadd.f32 %v713, 1.0
    %v715 = vrcp.pop %v714
    %v716 = vmul.f32 1.0, %v715
    %v717 = vtanh.pop %v710
    %v718 = vxor.u32 %v710, 2147483648
    %v719 = vmul.f32 %v718, 1.442695
    %v720 = vpow.pop %v719
    %v721 = vadd.f32 %v720, 1.0
    %v722 = vrcp.pop %v721
    %v723 = vmul.f32 1.0, %v722
    %v725 = vrot.slane %v640, 6
    %v727 = vmul.f32 %v716, %v725
    %v728 = vmul.f32 %v716, %v717
    %730 = vrot.lane.b32.xlu0 %v728, 64
    %v731 = vpop.permute.xlu0 %730
    %v733 = vadd.f32 %v727, %v731
    %v734 = vtanh.pop %v733
    %v735 = vmul.f32 %v723, %v734
    %737 = vrot.lane.b32.xlu0 %v735, 64
    %v738 = vpop.permute.xlu0 %737
    %740 = vst.msk [vmem:[#allocation2 + $0x8] sm:$0xc] %vm375, %v738
    %741 = vst.msk [vmem:[#allocation2 + $0x2] sm:$0xc] %vm377, %v738
    %v742 = vpack.c.bf16 %v735, %v735
    %v744 = vrot.slane %v742, 1
    %745 = vrot.lane.b32.xlu0 %v744, 64
    %v746 = vpop.permute.xlu0 %745
    %v748 = vsel %vm207, %v746, 0
    %750 = vmatprep.subr.bf16.mxu0 %v192
    %751 = vmatpush1.bf16.msra.mxu0 %v191
    %752 = vmatprep.subr.bf16.mxu0 %v194
    %753 = vmatpush1.bf16.msra.mxu0 %v193
    %754 = vmatprep.subr.bf16.mxu0 %v196
    %755 = vmatpush1.bf16.msra.mxu0 %v195
    %756 = vmatprep.subr.bf16.mxu0 %v198
    %757 = vmatpush1.bf16.msra.mxu0 %v197
    %758 = vmatprep.subr.bf16.mxu0 0
    %759 = vmatpush1.bf16.msra.mxu0 0
    %760 = vmatprep.subr.bf16.mxu0 0
    %761 = vmatpush1.bf16.msra.mxu0 0
    %762 = vmatprep.subr.bf16.mxu0 0
    %763 = vmatpush1.bf16.msra.mxu0 0
    %764 = vmatprep.subr.bf16.mxu0 0
    %765 = vmatpush1.bf16.msra.mxu0 0
    %766 = vmatprep.subr.bf16.mxu0 0
    %767 = vmatpush1.bf16.msra.mxu0 0
    %768 = vmatprep.subr.bf16.mxu0 0
    %769 = vmatpush1.bf16.msra.mxu0 0
    %770 = vmatprep.subr.bf16.mxu0 0
    %771 = vmatpush1.bf16.msra.mxu0 0
    %772 = vmatprep.subr.bf16.mxu0 0
    %773 = vmatpush1.bf16.msra.mxu0 0
    %774 = vmatprep.subr.bf16.mxu0 0
    %775 = vmatpush1.bf16.msra.mxu0 0
    %776 = vmatprep.subr.bf16.mxu0 0
    %777 = vmatpush1.bf16.msra.mxu0 0
    %778 = vmatprep.subr.bf16.mxu0 0
    %779 = vmatpush1.bf16.msra.mxu0 0
    %780 = vmatprep.subr.bf16.mxu0 0
    %781 = vmatpush1.bf16.msra.mxu0 0
    %782 = vmatprep.mubr.bf16.mxu0 0
    %783 = vmatmul.mubr.bf16.gmra.mrb[0].mxu0 %v748
    %v784 = vpop.f32.mrb[0].mxu0
    %v785 = vadd.f32 0.0, %v784
    %v786 = vpop.f32.mrb[0].mxu0
    %v787 = vadd.f32 0.0, %v786
    %v788 = vpop.f32.mrb[0].mxu0
    %v789 = vpop.f32.mrb[0].mxu0
    %790 = vdwg.mxu0
    %v793 = vrot.slane %v785, 4
    %v794 = vrot.slane %v787, 4
    %v797 = vadd.f32 %v565, %v793
    %v798 = vadd.f32 %v566, %v794
    %v799 = vxor.u32 %v797, 2147483648
    %v800 = vmul.f32 %v799, 1.442695
    %v801 = vpow.pop %v800
    %v802 = vadd.f32 %v801, 1.0
    %v803 = vrcp.pop %v802
    %v804 = vmul.f32 1.0, %v803
    %v805 = vtanh.pop %v798
    %v806 = vxor.u32 %v798, 2147483648
    %v807 = vmul.f32 %v806, 1.442695
    %v808 = vpow.pop %v807
    %v809 = vadd.f32 %v808, 1.0
    %v810 = vrcp.pop %v809
    %v811 = vmul.f32 1.0, %v810
    %v813 = vrot.slane %v733, 6
    %v815 = vmul.f32 %v804, %v813
    %v816 = vmul.f32 %v804, %v805
    %818 = vrot.lane.b32.xlu0 %v816, 64
    %v819 = vpop.permute.xlu0 %818
    %v821 = vadd.f32 %v815, %v819
    %v822 = vtanh.pop %v821
    %v823 = vmul.f32 %v811, %v822
    %825 = vrot.lane.b32.xlu0 %v823, 64
    %v826 = vpop.permute.xlu0 %825
    %828 = vst.msk [vmem:[#allocation2 + $0x8] sm:$0x30] %vm465, %v826
    %829 = vst.msk [vmem:[#allocation2 - $0x2] sm:$0x30] %vm467, %v826
    %v830 = vpack.c.bf16 %v823, %v823
    %v832 = vrot.slane %v830, 2
    %833 = vrot.lane.b32.xlu0 %v832, 64
    %v834 = vpop.permute.xlu0 %833
    %v836 = vsel %vm207, %v834, 0
    %838 = vmatprep.subr.bf16.mxu0 %v192
    %839 = vmatpush1.bf16.msra.mxu0 %v191
    %840 = vmatprep.subr.bf16.mxu0 %v194
    %841 = vmatpush1.bf16.msra.mxu0 %v193
    %842 = vmatprep.subr.bf16.mxu0 %v196
    %843 = vmatpush1.bf16.msra.mxu0 %v195
    %844 = vmatprep.subr.bf16.mxu0 %v198
    %845 = vmatpush1.bf16.msra.mxu0 %v197
    %846 = vmatprep.subr.bf16.mxu0 0
    %847 = vmatpush1.bf16.msra.mxu0 0
    %848 = vmatprep.subr.bf16.mxu0 0
    %849 = vmatpush1.bf16.msra.mxu0 0
    %850 = vmatprep.subr.bf16.mxu0 0
    %851 = vmatpush1.bf16.msra.mxu0 0
    %852 = vmatprep.subr.bf16.mxu0 0
    %853 = vmatpush1.bf16.msra.mxu0 0
    %854 = vmatprep.subr.bf16.mxu0 0
    %855 = vmatpush1.bf16.msra.mxu0 0
    %856 = vmatprep.subr.bf16.mxu0 0
    %857 = vmatpush1.bf16.msra.mxu0 0
    %858 = vmatprep.subr.bf16.mxu0 0
    %859 = vmatpush1.bf16.msra.mxu0 0
    %860 = vmatprep.subr.bf16.mxu0 0
    %861 = vmatpush1.bf16.msra.mxu0 0
    %862 = vmatprep.subr.bf16.mxu0 0
    %863 = vmatpush1.bf16.msra.mxu0 0
    %864 = vmatprep.subr.bf16.mxu0 0
    %865 = vmatpush1.bf16.msra.mxu0 0
    %866 = vmatprep.subr.bf16.mxu0 0
    %867 = vmatpush1.bf16.msra.mxu0 0
    %868 = vmatprep.subr.bf16.mxu0 0
    %869 = vmatpush1.bf16.msra.mxu0 0
    %870 = vmatprep.mubr.bf16.mxu0 0
    %871 = vmatmul.mubr.bf16.gmra.mrb[0].mxu0 %v836
    %v872 = vpop.f32.mrb[0].mxu0
    %v873 = vadd.f32 0.0, %v872
    %v874 = vpop.f32.mrb[0].mxu0
    %v875 = vadd.f32 0.0, %v874
    %v876 = vpop.f32.mrb[0].mxu0
    %v877 = vpop.f32.mrb[0].mxu0
    %878 = vdwg.mxu0
    %v881 = vrot.slane %v873, 2
    %v882 = vrot.slane %v875, 2
    %v885 = vadd.f32 %v653, %v881
    %v886 = vadd.f32 %v654, %v882
    %v887 = vxor.u32 %v885, 2147483648
    %v888 = vmul.f32 %v887, 1.442695
    %v889 = vpow.pop %v888
    %v890 = vadd.f32 %v889, 1.0
    %v891 = vrcp.pop %v890
    %v892 = vmul.f32 1.0, %v891
    %v893 = vtanh.pop %v886
    %v894 = vxor.u32 %v886, 2147483648
    %v895 = vmul.f32 %v894, 1.442695
    %v896 = vpow.pop %v895
    %v897 = vadd.f32 %v896, 1.0
    %v898 = vrcp.pop %v897
    %v899 = vmul.f32 1.0, %v898
    %v901 = vrot.slane %v821, 6
    %v903 = vmul.f32 %v892, %v901
    %v904 = vmul.f32 %v892, %v893
    %906 = vrot.lane.b32.xlu0 %v904, 64
    %v907 = vpop.permute.xlu0 %906
    %v909 = vadd.f32 %v903, %v907
    %v910 = vtanh.pop %v909
    %v911 = vmul.f32 %v899, %v910
    %913 = vrot.lane.b32.xlu0 %v911, 64
    %v914 = vpop.permute.xlu0 %913
    %916 = vst.msk [vmem:[#allocation2 + $0x8] sm:$0xc0] %vm555, %v914
    %917 = vst.msk [vmem:[#allocation2 - $0x6] sm:$0xc0] %vm557, %v914
    %v918 = vrot.slane %v911, 6
    %919 = vrot.lane.b32.xlu0 %v918, 64
    %v920 = vpop.permute.xlu0 %919
    %v922 = vsel %vm72, %v920, %v278
    %v923 = vld [vmem:[#allocation2] sm:$0xff]
    %v924 = vld [vmem:[#allocation2 + $0x8] sm:$0xff]
    %v925 = vpack.c.bf16 %v924, %v923
    %v926 = vld [vmem:[%s4] sm:$0xff]
    %v927 = vld [vmem:[%s4 + $0x8] sm:$0xff]
    %v928 = vld [vmem:[%s4 + $0x10] sm:$0xff]
    %v929 = vld [vmem:[%s4 + $0x18] sm:$0xff]
    %v930 = vld [vmem:[%s4 + $0x20] sm:$0xff]
    %v931 = vld [vmem:[%s4 + $0x28] sm:$0xff]
    %v932 = vld [vmem:[%s4 + $0x30] sm:$0xff]
    %v933 = vld [vmem:[%s4 + $0x38] sm:$0xff]
    %v934 = vld [vmem:[%s5] sm:$0x3]
    %v936 = vlaneseq
    %v937 = vshrl.u32 %v936, 7
    %v938 = vsub.s32 0, %v937
    %v939 = vrot.slane %v934, %v938
    %v940 = vlaneseq
    %v941 = vshrl.u32 %v940, 7
    %v942 = vsub.s32 1, %v941
    %v943 = vrot.slane %v934, %v942
    %v954 = vunpack.c.l.b16 %v926
    %v955 = vunpack.c.h.b16 %v926
    %v956 = vunpack.c.l.b16 %v927
    %v957 = vunpack.c.h.b16 %v927
    %v958 = vunpack.c.l.b16 %v928
    %v959 = vunpack.c.h.b16 %v928
    %v960 = vunpack.c.l.b16 %v929
    %v961 = vunpack.c.h.b16 %v929
    %v962 = vunpack.c.l.b16 %v930
    %v963 = vunpack.c.h.b16 %v930
    %v964 = vunpack.c.l.b16 %v931
    %v965 = vunpack.c.h.b16 %v931
    %v966 = vunpack.c.l.b16 %v932
    %v967 = vunpack.c.h.b16 %v932
    %v968 = vunpack.c.l.b16 %v933
    %v969 = vunpack.c.h.b16 %v933
    %v970 = vpack.c.b16 %v956, %v954
    %v971 = vpack.c.b16 %v957, %v955
    %v972 = vpack.c.b16 %v960, %v958
    %v973 = vpack.c.b16 %v961, %v959
    %v974 = vpack.c.b16 %v964, %v962
    %v975 = vpack.c.b16 %v965, %v963
    %v976 = vpack.c.b16 %v968, %v966
    %v977 = vpack.c.b16 %v969, %v967
    %v987 = vsel %vm207, %v925, 0
    %989 = vmatprep.subr.bf16.mxu0 %v971
    %990 = vmatpush1.bf16.msra.mxu0 %v970
    %991 = vmatprep.subr.bf16.mxu0 %v973
    %992 = vmatpush1.bf16.msra.mxu0 %v972
    %993 = vmatprep.subr.bf16.mxu0 %v975
    %994 = vmatpush1.bf16.msra.mxu0 %v974
    %995 = vmatprep.subr.bf16.mxu0 %v977
    %996 = vmatpush1.bf16.msra.mxu0 %v976
    %997 = vmatprep.subr.bf16.mxu0 0
    %998 = vmatpush1.bf16.msra.mxu0 0
    %999 = vmatprep.subr.bf16.mxu0 0
    %1000 = vmatpush1.bf16.msra.mxu0 0
    %1001 = vmatprep.subr.bf16.mxu0 0
    %1002 = vmatpush1.bf16.msra.mxu0 0
    %1003 = vmatprep.subr.bf16.mxu0 0
    %1004 = vmatpush1.bf16.msra.mxu0 0
    %1005 = vmatprep.subr.bf16.mxu0 0
    %1006 = vmatpush1.bf16.msra.mxu0 0
    %1007 = vmatprep.subr.bf16.mxu0 0
    %1008 = vmatpush1.bf16.msra.mxu0 0
    %1009 = vmatprep.subr.bf16.mxu0 0
    %1010 = vmatpush1.bf16.msra.mxu0 0
    %1011 = vmatprep.subr.bf16.mxu0 0
    %1012 = vmatpush1.bf16.msra.mxu0 0
    %1013 = vmatprep.subr.bf16.mxu0 0
    %1014 = vmatpush1.bf16.msra.mxu0 0
    %1015 = vmatprep.subr.bf16.mxu0 0
    %1016 = vmatpush1.bf16.msra.mxu0 0
    %1017 = vmatprep.subr.bf16.mxu0 0
    %1018 = vmatpush1.bf16.msra.mxu0 0
    %1019 = vmatprep.subr.bf16.mxu0 0
    %1020 = vmatpush1.bf16.msra.mxu0 0
    %1021 = vmatprep.mubr.bf16.mxu0 0
    %1022 = vmatmul.mubr.bf16.gmra.mrb[0].mxu0 %v987
    %v1023 = vpop.f32.mrb[0].mxu0
    %v1024 = vadd.f32 %v939, %v1023
    %v1025 = vpop.f32.mrb[0].mxu0
    %v1026 = vadd.f32 %v943, %v1025
    %v1027 = vpop.f32.mrb[0].mxu0
    %v1028 = vadd.f32 %v939, %v1027
    %v1029 = vpop.f32.mrb[0].mxu0
    %v1030 = vadd.f32 %v943, %v1029
    %1031 = vdwg.mxu0
    %v1032 = vld [vmem:[%s6] sm:$0xff]
    %v1033 = vld [vmem:[%s6 + $0x8] sm:$0xff]
    %v1034 = vld [vmem:[%s6 + $0x10] sm:$0xff]
    %v1035 = vld [vmem:[%s6 + $0x18] sm:$0xff]
    %v1036 = vld [vmem:[%s6 + $0x20] sm:$0xff]
    %v1037 = vld [vmem:[%s6 + $0x28] sm:$0xff]
    %v1038 = vld [vmem:[%s6 + $0x30] sm:$0xff]
    %v1039 = vld [vmem:[%s6 + $0x38] sm:$0xff]
    %v1042 = vrot.slane %v1028, 6
    %v1043 = vrot.slane %v1030, 6
    %v1046 = vsel %vm70, %v1024, %v1042
    %v1047 = vsel %vm71, %v1026, %v1043
    %v1056 = vunpack.c.l.b16 %v1032
    %v1057 = vunpack.c.h.b16 %v1032
    %v1058 = vunpack.c.l.b16 %v1033
    %v1059 = vunpack.c.h.b16 %v1033
    %v1060 = vunpack.c.l.b16 %v1034
    %v1061 = vunpack.c.h.b16 %v1034
    %v1062 = vunpack.c.l.b16 %v1035
    %v1063 = vunpack.c.h.b16 %v1035
    %v1064 = vunpack.c.l.b16 %v1036
    %v1065 = vunpack.c.h.b16 %v1036
    %v1066 = vunpack.c.l.b16 %v1037
    %v1067 = vunpack.c.h.b16 %v1037
    %v1068 = vunpack.c.l.b16 %v1038
    %v1069 = vunpack.c.h.b16 %v1038
    %v1070 = vunpack.c.l.b16 %v1039
    %v1071 = vunpack.c.h.b16 %v1039
    %v1072 = vpack.c.b16 %v1058, %v1056
    %v1073 = vpack.c.b16 %v1059, %v1057
    %v1074 = vpack.c.b16 %v1062, %v1060
    %v1075 = vpack.c.b16 %v1063, %v1061
    %v1076 = vpack.c.b16 %v1066, %v1064
    %v1077 = vpack.c.b16 %v1067, %v1065
    %v1078 = vpack.c.b16 %v1070, %v1068
    %v1079 = vpack.c.b16 %v1071, %v1069
    %1088 = vmatprep.subr.bf16.mxu0 %v1073
    %1089 = vmatpush1.bf16.msra.mxu0 %v1072
    %1090 = vmatprep.subr.bf16.mxu0 %v1075
    %1091 = vmatpush1.bf16.msra.mxu0 %v1074
    %1092 = vmatprep.subr.bf16.mxu0 %v1077
    %1093 = vmatpush1.bf16.msra.mxu0 %v1076
    %1094 = vmatprep.subr.bf16.mxu0 %v1079
    %1095 = vmatpush1.bf16.msra.mxu0 %v1078
    %1096 = vmatprep.subr.bf16.mxu0 0
    %1097 = vmatpush1.bf16.msra.mxu0 0
    %1098 = vmatprep.subr.bf16.mxu0 0
    %1099 = vmatpush1.bf16.msra.mxu0 0
    %1100 = vmatprep.subr.bf16.mxu0 0
    %1101 = vmatpush1.bf16.msra.mxu0 0
    %1102 = vmatprep.subr.bf16.mxu0 0
    %1103 = vmatpush1.bf16.msra.mxu0 0
    %1104 = vmatprep.subr.bf16.mxu0 0
    %1105 = vmatpush1.bf16.msra.mxu0 0
    %1106 = vmatprep.subr.bf16.mxu0 0
    %1107 = vmatpush1.bf16.msra.mxu0 0
    %1108 = vmatprep.subr.bf16.mxu0 0
    %1109 = vmatpush1.bf16.msra.mxu0 0
    %1110 = vmatprep.subr.bf16.mxu0 0
    %1111 = vmatpush1.bf16.msra.mxu0 0
    %1112 = vmatprep.subr.bf16.mxu0 0
    %1113 = vmatpush1.bf16.msra.mxu0 0
    %1114 = vmatprep.subr.bf16.mxu0 0
    %1115 = vmatpush1.bf16.msra.mxu0 0
    %1116 = vmatprep.subr.bf16.mxu0 0
    %1117 = vmatpush1.bf16.msra.mxu0 0
    %1118 = vmatprep.subr.bf16.mxu0 0
    %1119 = vmatpush1.bf16.msra.mxu0 0
    %1120 = vmatprep.mubr.bf16.mxu0 0
    %1121 = vmatmul.mubr.bf16.gmra.mrb[0].mxu0 %v209
    %v1122 = vpop.f32.mrb[0].mxu0
    %v1123 = vadd.f32 0.0, %v1122
    %v1124 = vpop.f32.mrb[0].mxu0
    %v1125 = vadd.f32 0.0, %v1124
    %v1126 = vpop.f32.mrb[0].mxu0
    %v1127 = vpop.f32.mrb[0].mxu0
    %1128 = vdwg.mxu0
    %v1129 = vadd.f32 %v1046, %v1123
    %v1130 = vadd.f32 %v1047, %v1125
    %v1131 = vxor.u32 %v1129, 2147483648
    %v1132 = vmul.f32 %v1131, 1.442695
    %v1133 = vpow.pop %v1132
    %v1134 = vadd.f32 %v1133, 1.0
    %v1135 = vrcp.pop %v1134
    %v1136 = vmul.f32 1.0, %v1135
    %v1137 = vtanh.pop %v1130
    %v1138 = vxor.u32 %v1130, 2147483648
    %v1139 = vmul.f32 %v1138, 1.442695
    %v1140 = vpow.pop %v1139
    %v1141 = vadd.f32 %v1140, 1.0
    %v1142 = vrcp.pop %v1141
    %v1143 = vmul.f32 1.0, %v1142
    %v1144 = vmul.f32 %v1136, 0.0
    %v1145 = vmul.f32 %v1136, %v1137
    %1147 = vrot.lane.b32.xlu0 %v1145, 64
    %v1148 = vpop.permute.xlu0 %1147
    %v1150 = vadd.f32 %v1144, %v1148
    %v1151 = vtanh.pop %v1150
    %v1152 = vmul.f32 %v1143, %v1151
    %vm1153 = vcmask 779776
    %1154 = vst.msk [vmem:[#allocation2] sm:$0x3] %vm1153, %v1152
    %vm1155 = vcmask 1042176
    %1156 = vst.msk [vmem:[#allocation2 + $0xe] sm:$0x3] %vm1155, %v1152
    %v1157 = vrot.slane %v1028, 2
    %v1158 = vrot.slane %v1030, 2
    %v1161 = vsel %vm70, %v1024, %v1157
    %v1162 = vsel %vm71, %v1026, %v1158
    %v1163 = vpack.c.bf16 %v1152, %v1152
    %1165 = vrot.lane.b32.xlu0 %v1163, 64
    %v1166 = vpop.permute.xlu0 %1165
    %v1168 = vsel %vm207, %v1166, 0
    %1170 = vmatprep.subr.bf16.mxu0 %v1073
    %1171 = vmatpush1.bf16.msra.mxu0 %v1072
    %1172 = vmatprep.subr.bf16.mxu0 %v1075
    %1173 = vmatpush1.bf16.msra.mxu0 %v1074
    %1174 = vmatprep.subr.bf16.mxu0 %v1077
    %1175 = vmatpush1.bf16.msra.mxu0 %v1076
    %1176 = vmatprep.subr.bf16.mxu0 %v1079
    %1177 = vmatpush1.bf16.msra.mxu0 %v1078
    %1178 = vmatprep.subr.bf16.mxu0 0
    %1179 = vmatpush1.bf16.msra.mxu0 0
    %1180 = vmatprep.subr.bf16.mxu0 0
    %1181 = vmatpush1.bf16.msra.mxu0 0
    %1182 = vmatprep.subr.bf16.mxu0 0
    %1183 = vmatpush1.bf16.msra.mxu0 0
    %1184 = vmatprep.subr.bf16.mxu0 0
    %1185 = vmatpush1.bf16.msra.mxu0 0
    %1186 = vmatprep.subr.bf16.mxu0 0
    %1187 = vmatpush1.bf16.msra.mxu0 0
    %1188 = vmatprep.subr.bf16.mxu0 0
    %1189 = vmatpush1.bf16.msra.mxu0 0
    %1190 = vmatprep.subr.bf16.mxu0 0
    %1191 = vmatpush1.bf16.msra.mxu0 0
    %1192 = vmatprep.subr.bf16.mxu0 0
    %1193 = vmatpush1.bf16.msra.mxu0 0
    %1194 = vmatprep.subr.bf16.mxu0 0
    %1195 = vmatpush1.bf16.msra.mxu0 0
    %1196 = vmatprep.subr.bf16.mxu0 0
    %1197 = vmatpush1.bf16.msra.mxu0 0
    %1198 = vmatprep.subr.bf16.mxu0 0
    %1199 = vmatpush1.bf16.msra.mxu0 0
    %1200 = vmatprep.subr.bf16.mxu0 0
    %1201 = vmatpush1.bf16.msra.mxu0 0
    %1202 = vmatprep.mubr.bf16.mxu0 0
    %1203 = vmatmul.mubr.bf16.gmra.mrb[0].mxu0 %v1168
    %v1204 = vpop.f32.mrb[0].mxu0
    %v1205 = vadd.f32 0.0, %v1204
    %v1206 = vpop.f32.mrb[0].mxu0
    %v1207 = vadd.f32 0.0, %v1206
    %v1208 = vpop.f32.mrb[0].mxu0
    %v1209 = vpop.f32.mrb[0].mxu0
    %1210 = vdwg.mxu0
    %v1213 = vrot.slane %v1205, 6
    %v1214 = vrot.slane %v1207, 6
    %v1217 = vadd.f32 %v1161, %v1213
    %v1218 = vadd.f32 %v1162, %v1214
    %v1219 = vxor.u32 %v1217, 2147483648
    %v1220 = vmul.f32 %v1219, 1.442695
    %v1221 = vpow.pop %v1220
    %v1222 = vadd.f32 %v1221, 1.0
    %v1223 = vrcp.pop %v1222
    %v1224 = vmul.f32 1.0, %v1223
    %v1225 = vtanh.pop %v1218
    %v1226 = vxor.u32 %v1218, 2147483648
    %v1227 = vmul.f32 %v1226, 1.442695
    %v1228 = vpow.pop %v1227
    %v1229 = vadd.f32 %v1228, 1.0
    %v1230 = vrcp.pop %v1229
    %v1231 = vmul.f32 1.0, %v1230
    %v1233 = vrot.slane %v1150, 6
    %v1235 = vmul.f32 %v1224, %v1233
    %v1236 = vmul.f32 %v1224, %v1225
    %1238 = vrot.lane.b32.xlu0 %v1236, 64
    %v1239 = vpop.permute.xlu0 %1238
    %v1241 = vadd.f32 %v1235, %v1239
    %v1242 = vtanh.pop %v1241
    %v1243 = vmul.f32 %v1231, %v1242
    %vm1244 = vcmask 781826
    %1245 = vst.msk [vmem:[#allocation2] sm:$0xc] %vm1244, %v1243
    %vm1246 = vcmask 1044226
    %1247 = vst.msk [vmem:[#allocation2 + $0xa] sm:$0xc] %vm1246, %v1243
    %v1248 = vpack.c.bf16 %v1243, %v1243
    %v1250 = vrot.slane %v1248, 1
    %1251 = vrot.lane.b32.xlu0 %v1250, 64
    %v1252 = vpop.permute.xlu0 %1251
    %v1254 = vsel %vm207, %v1252, 0
    %1256 = vmatprep.subr.bf16.mxu0 %v1073
    %1257 = vmatpush1.bf16.msra.mxu0 %v1072
    %1258 = vmatprep.subr.bf16.mxu0 %v1075
    %1259 = vmatpush1.bf16.msra.mxu0 %v1074
    %1260 = vmatprep.subr.bf16.mxu0 %v1077
    %1261 = vmatpush1.bf16.msra.mxu0 %v1076
    %1262 = vmatprep.subr.bf16.mxu0 %v1079
    %1263 = vmatpush1.bf16.msra.mxu0 %v1078
    %1264 = vmatprep.subr.bf16.mxu0 0
    %1265 = vmatpush1.bf16.msra.mxu0 0
    %1266 = vmatprep.subr.bf16.mxu0 0
    %1267 = vmatpush1.bf16.msra.mxu0 0
    %1268 = vmatprep.subr.bf16.mxu0 0
    %1269 = vmatpush1.bf16.msra.mxu0 0
    %1270 = vmatprep.subr.bf16.mxu0 0
    %1271 = vmatpush1.bf16.msra.mxu0 0
    %1272 = vmatprep.subr.bf16.mxu0 0
    %1273 = vmatpush1.bf16.msra.mxu0 0
    %1274 = vmatprep.subr.bf16.mxu0 0
    %1275 = vmatpush1.bf16.msra.mxu0 0
    %1276 = vmatprep.subr.bf16.mxu0 0
    %1277 = vmatpush1.bf16.msra.mxu0 0
    %1278 = vmatprep.subr.bf16.mxu0 0
    %1279 = vmatpush1.bf16.msra.mxu0 0
    %1280 = vmatprep.subr.bf16.mxu0 0
    %1281 = vmatpush1.bf16.msra.mxu0 0
    %1282 = vmatprep.subr.bf16.mxu0 0
    %1283 = vmatpush1.bf16.msra.mxu0 0
    %1284 = vmatprep.subr.bf16.mxu0 0
    %1285 = vmatpush1.bf16.msra.mxu0 0
    %1286 = vmatprep.subr.bf16.mxu0 0
    %1287 = vmatpush1.bf16.msra.mxu0 0
    %1288 = vmatprep.mubr.bf16.mxu0 0
    %1289 = vmatmul.mubr.bf16.gmra.mrb[0].mxu0 %v1254
    %v1290 = vpop.f32.mrb[0].mxu0
    %v1291 = vadd.f32 0.0, %v1290
    %v1292 = vpop.f32.mrb[0].mxu0
    %v1293 = vadd.f32 0.0, %v1292
    %v1294 = vpop.f32.mrb[0].mxu0
    %v1295 = vpop.f32.mrb[0].mxu0
    %1296 = vdwg.mxu0
    %v1299 = vrot.slane %v1291, 4
    %v1300 = vrot.slane %v1293, 4
    %v1303 = vadd.f32 %v1046, %v1299
    %v1304 = vadd.f32 %v1047, %v1300
    %v1305 = vxor.u32 %v1303, 2147483648
    %v1306 = vmul.f32 %v1305, 1.442695
    %v1307 = vpow.pop %v1306
    %v1308 = vadd.f32 %v1307, 1.0
    %v1309 = vrcp.pop %v1308
    %v1310 = vmul.f32 1.0, %v1309
    %v1311 = vtanh.pop %v1304
    %v1312 = vxor.u32 %v1304, 2147483648
    %v1313 = vmul.f32 %v1312, 1.442695
    %v1314 = vpow.pop %v1313
    %v1315 = vadd.f32 %v1314, 1.0
    %v1316 = vrcp.pop %v1315
    %v1317 = vmul.f32 1.0, %v1316
    %v1319 = vrot.slane %v1241, 6
    %v1321 = vmul.f32 %v1310, %v1319
    %v1322 = vmul.f32 %v1310, %v1311
    %1324 = vrot.lane.b32.xlu0 %v1322, 64
    %v1325 = vpop.permute.xlu0 %1324
    %v1327 = vadd.f32 %v1321, %v1325
    %v1328 = vtanh.pop %v1327
    %v1329 = vmul.f32 %v1317, %v1328
    %vm1330 = vcmask 783876
    %1331 = vst.msk [vmem:[#allocation2] sm:$0x30] %vm1330, %v1329
    %vm1332 = vcmask 1046276
    %1333 = vst.msk [vmem:[#allocation2 + $0x6] sm:$0x30] %vm1332, %v1329
    %v1334 = vpack.c.bf16 %v1329, %v1329
    %v1336 = vrot.slane %v1334, 2
    %1337 = vrot.lane.b32.xlu0 %v1336, 64
    %v1338 = vpop.permute.xlu0 %1337
    %v1340 = vsel %vm207, %v1338, 0
    %1342 = vmatprep.subr.bf16.mxu0 %v1073
    %1343 = vmatpush1.bf16.msra.mxu0 %v1072
    %1344 = vmatprep.subr.bf16.mxu0 %v1075
    %1345 = vmatpush1.bf16.msra.mxu0 %v1074
    %1346 = vmatprep.subr.bf16.mxu0 %v1077
    %1347 = vmatpush1.bf16.msra.mxu0 %v1076
    %1348 = vmatprep.subr.bf16.mxu0 %v1079
    %1349 = vmatpush1.bf16.msra.mxu0 %v1078
    %1350 = vmatprep.subr.bf16.mxu0 0
    %1351 = vmatpush1.bf16.msra.mxu0 0
    %1352 = vmatprep.subr.bf16.mxu0 0
    %1353 = vmatpush1.bf16.msra.mxu0 0
    %1354 = vmatprep.subr.bf16.mxu0 0
    %1355 = vmatpush1.bf16.msra.mxu0 0
    %1356 = vmatprep.subr.bf16.mxu0 0
    %1357 = vmatpush1.bf16.msra.mxu0 0
    %1358 = vmatprep.subr.bf16.mxu0 0
    %1359 = vmatpush1.bf16.msra.mxu0 0
    %1360 = vmatprep.subr.bf16.mxu0 0
    %1361 = vmatpush1.bf16.msra.mxu0 0
    %1362 = vmatprep.subr.bf16.mxu0 0
    %1363 = vmatpush1.bf16.msra.mxu0 0
    %1364 = vmatprep.subr.bf16.mxu0 0
    %1365 = vmatpush1.bf16.msra.mxu0 0
    %1366 = vmatprep.subr.bf16.mxu0 0
    %1367 = vmatpush1.bf16.msra.mxu0 0
    %1368 = vmatprep.subr.bf16.mxu0 0
    %1369 = vmatpush1.bf16.msra.mxu0 0
    %1370 = vmatprep.subr.bf16.mxu0 0
    %1371 = vmatpush1.bf16.msra.mxu0 0
    %1372 = vmatprep.subr.bf16.mxu0 0
    %1373 = vmatpush1.bf16.msra.mxu0 0
    %1374 = vmatprep.mubr.bf16.mxu0 0
    %1375 = vmatmul.mubr.bf16.gmra.mrb[0].mxu0 %v1340
    %v1376 = vpop.f32.mrb[0].mxu0
    %v1377 = vadd.f32 0.0, %v1376
    %v1378 = vpop.f32.mrb[0].mxu0
    %v1379 = vadd.f32 0.0, %v1378
    %v1380 = vpop.f32.mrb[0].mxu0
    %v1381 = vpop.f32.mrb[0].mxu0
    %1382 = vdwg.mxu0
    %v1385 = vrot.slane %v1377, 2
    %v1386 = vrot.slane %v1379, 2
    %v1389 = vadd.f32 %v1161, %v1385
    %v1390 = vadd.f32 %v1162, %v1386
    %v1391 = vxor.u32 %v1389, 2147483648
    %v1392 = vmul.f32 %v1391, 1.442695
    %v1393 = vpow.pop %v1392
    %v1394 = vadd.f32 %v1393, 1.0
    %v1395 = vrcp.pop %v1394
    %v1396 = vmul.f32 1.0, %v1395
    %v1397 = vtanh.pop %v1390
    %v1398 = vxor.u32 %v1390, 2147483648
    %v1399 = vmul.f32 %v1398, 1.442695
    %v1400 = vpow.pop %v1399
    %v1401 = vadd.f32 %v1400, 1.0
    %v1402 = vrcp.pop %v1401
    %v1403 = vmul.f32 1.0, %v1402
    %v1405 = vrot.slane %v1327, 6
    %v1407 = vmul.f32 %v1396, %v1405
    %v1408 = vmul.f32 %v1396, %v1397
    %1410 = vrot.lane.b32.xlu0 %v1408, 64
    %v1411 = vpop.permute.xlu0 %1410
    %v1413 = vadd.f32 %v1407, %v1411
    %v1414 = vtanh.pop %v1413
    %v1415 = vmul.f32 %v1403, %v1414
    %vm1416 = vcmask 785926
    %1417 = vst.msk [vmem:[#allocation2] sm:$0xc0] %vm1416, %v1415
    %vm1418 = vcmask 1048326
    %1419 = vst.msk [vmem:[#allocation2 + $0x2] sm:$0xc0] %vm1418, %v1415
    %v1422 = vrot.slane %v1024, 6
    %v1423 = vrot.slane %v1026, 6
    %v1426 = vsel %vm70, %v1028, %v1422
    %v1427 = vsel %vm71, %v1030, %v1423
    %v1428 = vpack.c.bf16 %v1415, %v1415
    %v1430 = vrot.slane %v1428, 3
    %1431 = vrot.lane.b32.xlu0 %v1430, 64
    %v1432 = vpop.permute.xlu0 %1431
    %v1434 = vsel %vm207, %v1432, 0
    %1436 = vmatprep.subr.bf16.mxu0 %v1073
    %1437 = vmatpush1.bf16.msra.mxu0 %v1072
    %1438 = vmatprep.subr.bf16.mxu0 %v1075
    %1439 = vmatpush1.bf16.msra.mxu0 %v1074
    %1440 = vmatprep.subr.bf16.mxu0 %v1077
    %1441 = vmatpush1.bf16.msra.mxu0 %v1076
    %1442 = vmatprep.subr.bf16.mxu0 %v1079
    %1443 = vmatpush1.bf16.msra.mxu0 %v1078
    %1444 = vmatprep.subr.bf16.mxu0 0
    %1445 = vmatpush1.bf16.msra.mxu0 0
    %1446 = vmatprep.subr.bf16.mxu0 0
    %1447 = vmatpush1.bf16.msra.mxu0 0
    %1448 = vmatprep.subr.bf16.mxu0 0
    %1449 = vmatpush1.bf16.msra.mxu0 0
    %1450 = vmatprep.subr.bf16.mxu0 0
    %1451 = vmatpush1.bf16.msra.mxu0 0
    %1452 = vmatprep.subr.bf16.mxu0 0
    %1453 = vmatpush1.bf16.msra.mxu0 0
    %1454 = vmatprep.subr.bf16.mxu0 0
    %1455 = vmatpush1.bf16.msra.mxu0 0
    %1456 = vmatprep.subr.bf16.mxu0 0
    %1457 = vmatpush1.bf16.msra.mxu0 0
    %1458 = vmatprep.subr.bf16.mxu0 0
    %1459 = vmatpush1.bf16.msra.mxu0 0
    %1460 = vmatprep.subr.bf16.mxu0 0
    %1461 = vmatpush1.bf16.msra.mxu0 0
    %1462 = vmatprep.subr.bf16.mxu0 0
    %1463 = vmatpush1.bf16.msra.mxu0 0
    %1464 = vmatprep.subr.bf16.mxu0 0
    %1465 = vmatpush1.bf16.msra.mxu0 0
    %1466 = vmatprep.subr.bf16.mxu0 0
    %1467 = vmatpush1.bf16.msra.mxu0 0
    %1468 = vmatprep.mubr.bf16.mxu0 0
    %1469 = vmatmul.mubr.bf16.gmra.mrb[0].mxu0 %v1434
    %v1470 = vpop.f32.mrb[0].mxu0
    %v1471 = vadd.f32 0.0, %v1470
    %v1472 = vpop.f32.mrb[0].mxu0
    %v1473 = vadd.f32 0.0, %v1472
    %v1474 = vpop.f32.mrb[0].mxu0
    %v1475 = vpop.f32.mrb[0].mxu0
    %1476 = vdwg.mxu0
    %v1477 = vadd.f32 %v1426, %v1471
    %v1478 = vadd.f32 %v1427, %v1473
    %v1479 = vxor.u32 %v1477, 2147483648
    %v1480 = vmul.f32 %v1479, 1.442695
    %v1481 = vpow.pop %v1480
    %v1482 = vadd.f32 %v1481, 1.0
    %v1483 = vrcp.pop %v1482
    %v1484 = vmul.f32 1.0, %v1483
    %v1485 = vtanh.pop %v1478
    %v1486 = vxor.u32 %v1478, 2147483648
    %v1487 = vmul.f32 %v1486, 1.442695
    %v1488 = vpow.pop %v1487
    %v1489 = vadd.f32 %v1488, 1.0
    %v1490 = vrcp.pop %v1489
    %v1491 = vmul.f32 1.0, %v1490
    %v1493 = vrot.slane %v1413, 6
    %v1495 = vmul.f32 %v1484, %v1493
    %v1496 = vmul.f32 %v1484, %v1485
    %1498 = vrot.lane.b32.xlu0 %v1496, 64
    %v1499 = vpop.permute.xlu0 %1498
    %v1501 = vadd.f32 %v1495, %v1499
    %v1502 = vtanh.pop %v1501
    %v1503 = vmul.f32 %v1491, %v1502
    %1504 = vst.msk [vmem:[#allocation2 + $0x8] sm:$0x3] %vm1153, %v1503
    %1505 = vst.msk [vmem:[#allocation2 + $0x6] sm:$0x3] %vm1155, %v1503
    %v1506 = vrot.slane %v1024, 2
    %v1507 = vrot.slane %v1026, 2
    %v1510 = vsel %vm70, %v1028, %v1506
    %v1511 = vsel %vm71, %v1030, %v1507
    %v1512 = vpack.c.bf16 %v1503, %v1503
    %1514 = vrot.lane.b32.xlu0 %v1512, 64
    %v1515 = vpop.permute.xlu0 %1514
    %v1517 = vsel %vm207, %v1515, 0
    %1519 = vmatprep.subr.bf16.mxu0 %v1073
    %1520 = vmatpush1.bf16.msra.mxu0 %v1072
    %1521 = vmatprep.subr.bf16.mxu0 %v1075
    %1522 = vmatpush1.bf16.msra.mxu0 %v1074
    %1523 = vmatprep.subr.bf16.mxu0 %v1077
    %1524 = vmatpush1.bf16.msra.mxu0 %v1076
    %1525 = vmatprep.subr.bf16.mxu0 %v1079
    %1526 = vmatpush1.bf16.msra.mxu0 %v1078
    %1527 = vmatprep.subr.bf16.mxu0 0
    %1528 = vmatpush1.bf16.msra.mxu0 0
    %1529 = vmatprep.subr.bf16.mxu0 0
    %1530 = vmatpush1.bf16.msra.mxu0 0
    %1531 = vmatprep.subr.bf16.mxu0 0
    %1532 = vmatpush1.bf16.msra.mxu0 0
    %1533 = vmatprep.subr.bf16.mxu0 0
    %1534 = vmatpush1.bf16.msra.mxu0 0
    %1535 = vmatprep.subr.bf16.mxu0 0
    %1536 = vmatpush1.bf16.msra.mxu0 0
    %1537 = vmatprep.subr.bf16.mxu0 0
    %1538 = vmatpush1.bf16.msra.mxu0 0
    %1539 = vmatprep.subr.bf16.mxu0 0
    %1540 = vmatpush1.bf16.msra.mxu0 0
    %1541 = vmatprep.subr.bf16.mxu0 0
    %1542 = vmatpush1.bf16.msra.mxu0 0
    %1543 = vmatprep.subr.bf16.mxu0 0
    %1544 = vmatpush1.bf16.msra.mxu0 0
    %1545 = vmatprep.subr.bf16.mxu0 0
    %1546 = vmatpush1.bf16.msra.mxu0 0
    %1547 = vmatprep.subr.bf16.mxu0 0
    %1548 = vmatpush1.bf16.msra.mxu0 0
    %1549 = vmatprep.subr.bf16.mxu0 0
    %1550 = vmatpush1.bf16.msra.mxu0 0
    %1551 = vmatprep.mubr.bf16.mxu0 0
    %1552 = vmatmul.mubr.bf16.gmra.mrb[0].mxu0 %v1517
    %v1553 = vpop.f32.mrb[0].mxu0
    %v1554 = vadd.f32 0.0, %v1553
    %v1555 = vpop.f32.mrb[0].mxu0
    %v1556 = vadd.f32 0.0, %v1555
    %v1557 = vpop.f32.mrb[0].mxu0
    %v1558 = vpop.f32.mrb[0].mxu0
    %1559 = vdwg.mxu0
    %v1562 = vrot.slane %v1554, 6
    %v1563 = vrot.slane %v1556, 6
    %v1566 = vadd.f32 %v1510, %v1562
    %v1567 = vadd.f32 %v1511, %v1563
    %v1568 = vxor.u32 %v1566, 2147483648
    %v1569 = vmul.f32 %v1568, 1.442695
    %v1570 = vpow.pop %v1569
    %v1571 = vadd.f32 %v1570, 1.0
    %v1572 = vrcp.pop %v1571
    %v1573 = vmul.f32 1.0, %v1572
    %v1574 = vtanh.pop %v1567
    %v1575 = vxor.u32 %v1567, 2147483648
    %v1576 = vmul.f32 %v1575, 1.442695
    %v1577 = vpow.pop %v1576
    %v1578 = vadd.f32 %v1577, 1.0
    %v1579 = vrcp.pop %v1578
    %v1580 = vmul.f32 1.0, %v1579
    %v1582 = vrot.slane %v1501, 6
    %v1584 = vmul.f32 %v1573, %v1582
    %v1585 = vmul.f32 %v1573, %v1574
    %1587 = vrot.lane.b32.xlu0 %v1585, 64
    %v1588 = vpop.permute.xlu0 %1587
    %v1590 = vadd.f32 %v1584, %v1588
    %v1591 = vtanh.pop %v1590
    %v1592 = vmul.f32 %v1580, %v1591
    %1593 = vst.msk [vmem:[#allocation2 + $0x8] sm:$0xc] %vm1244, %v1592
    %1594 = vst.msk [vmem:[#allocation2 + $0x2] sm:$0xc] %vm1246, %v1592
    %v1595 = vpack.c.bf16 %v1592, %v1592
    %v1597 = vrot.slane %v1595, 1
    %1598 = vrot.lane.b32.xlu0 %v1597, 64
    %v1599 = vpop.permute.xlu0 %1598
    %v1601 = vsel %vm207, %v1599, 0
    %1603 = vmatprep.subr.bf16.mxu0 %v1073
    %1604 = vmatpush1.bf16.msra.mxu0 %v1072
    %1605 = vmatprep.subr.bf16.mxu0 %v1075
    %1606 = vmatpush1.bf16.msra.mxu0 %v1074
    %1607 = vmatprep.subr.bf16.mxu0 %v1077
    %1608 = vmatpush1.bf16.msra.mxu0 %v1076
    %1609 = vmatprep.subr.bf16.mxu0 %v1079
    %1610 = vmatpush1.bf16.msra.mxu0 %v1078
    %1611 = vmatprep.subr.bf16.mxu0 0
    %1612 = vmatpush1.bf16.msra.mxu0 0
    %1613 = vmatprep.subr.bf16.mxu0 0
    %1614 = vmatpush1.bf16.msra.mxu0 0
    %1615 = vmatprep.subr.bf16.mxu0 0
    %1616 = vmatpush1.bf16.msra.mxu0 0
    %1617 = vmatprep.subr.bf16.mxu0 0
    %1618 = vmatpush1.bf16.msra.mxu0 0
    %1619 = vmatprep.subr.bf16.mxu0 0
    %1620 = vmatpush1.bf16.msra.mxu0 0
    %1621 = vmatprep.subr.bf16.mxu0 0
    %1622 = vmatpush1.bf16.msra.mxu0 0
    %1623 = vmatprep.subr.bf16.mxu0 0
    %1624 = vmatpush1.bf16.msra.mxu0 0
    %1625 = vmatprep.subr.bf16.mxu0 0
    %1626 = vmatpush1.bf16.msra.mxu0 0
    %1627 = vmatprep.subr.bf16.mxu0 0
    %1628 = vmatpush1.bf16.msra.mxu0 0
    %1629 = vmatprep.subr.bf16.mxu0 0
    %1630 = vmatpush1.bf16.msra.mxu0 0
    %1631 = vmatprep.subr.bf16.mxu0 0
    %1632 = vmatpush1.bf16.msra.mxu0 0
    %1633 = vmatprep.subr.bf16.mxu0 0
    %1634 = vmatpush1.bf16.msra.mxu0 0
    %1635 = vmatprep.mubr.bf16.mxu0 0
    %1636 = vmatmul.mubr.bf16.gmra.mrb[0].mxu0 %v1601
    %v1637 = vpop.f32.mrb[0].mxu0
    %v1638 = vadd.f32 0.0, %v1637
    %v1639 = vpop.f32.mrb[0].mxu0
    %v1640 = vadd.f32 0.0, %v1639
    %v1641 = vpop.f32.mrb[0].mxu0
    %v1642 = vpop.f32.mrb[0].mxu0
    %1643 = vdwg.mxu0
    %v1646 = vrot.slane %v1638, 4
    %v1647 = vrot.slane %v1640, 4
    %v1650 = vadd.f32 %v1426, %v1646
    %v1651 = vadd.f32 %v1427, %v1647
    %v1652 = vxor.u32 %v1650, 2147483648
    %v1653 = vmul.f32 %v1652, 1.442695
    %v1654 = vpow.pop %v1653
    %v1655 = vadd.f32 %v1654, 1.0
    %v1656 = vrcp.pop %v1655
    %v1657 = vmul.f32 1.0, %v1656
    %v1658 = vtanh.pop %v1651
    %v1659 = vxor.u32 %v1651, 2147483648
    %v1660 = vmul.f32 %v1659, 1.442695
    %v1661 = vpow.pop %v1660
    %v1662 = vadd.f32 %v1661, 1.0
    %v1663 = vrcp.pop %v1662
    %v1664 = vmul.f32 1.0, %v1663
    %v1666 = vrot.slane %v1590, 6
    %v1668 = vmul.f32 %v1657, %v1666
    %v1669 = vmul.f32 %v1657, %v1658
    %1671 = vrot.lane.b32.xlu0 %v1669, 64
    %v1672 = vpop.permute.xlu0 %1671
    %v1674 = vadd.f32 %v1668, %v1672
    %v1675 = vtanh.pop %v1674
    %v1676 = vmul.f32 %v1664, %v1675
    %1677 = vst.msk [vmem:[#allocation2 + $0x8] sm:$0x30] %vm1330, %v1676
    %1678 = vst.msk [vmem:[#allocation2 - $0x2] sm:$0x30] %vm1332, %v1676
    %v1679 = vpack.c.bf16 %v1676, %v1676
    %v1681 = vrot.slane %v1679, 2
    %1682 = vrot.lane.b32.xlu0 %v1681, 64
    %v1683 = vpop.permute.xlu0 %1682
    %v1685 = vsel %vm207, %v1683, 0
    %1687 = vmatprep.subr.bf16.mxu0 %v1073
    %1688 = vmatpush1.bf16.msra.mxu0 %v1072
    %1689 = vmatprep.subr.bf16.mxu0 %v1075
    %1690 = vmatpush1.bf16.msra.mxu0 %v1074
    %1691 = vmatprep.subr.bf16.mxu0 %v1077
    %1692 = vmatpush1.bf16.msra.mxu0 %v1076
    %1693 = vmatprep.subr.bf16.mxu0 %v1079
    %1694 = vmatpush1.bf16.msra.mxu0 %v1078
    %1695 = vmatprep.subr.bf16.mxu0 0
    %1696 = vmatpush1.bf16.msra.mxu0 0
    %1697 = vmatprep.subr.bf16.mxu0 0
    %1698 = vmatpush1.bf16.msra.mxu0 0
    %1699 = vmatprep.subr.bf16.mxu0 0
    %1700 = vmatpush1.bf16.msra.mxu0 0
    %1701 = vmatprep.subr.bf16.mxu0 0
    %1702 = vmatpush1.bf16.msra.mxu0 0
    %1703 = vmatprep.subr.bf16.mxu0 0
    %1704 = vmatpush1.bf16.msra.mxu0 0
    %1705 = vmatprep.subr.bf16.mxu0 0
    %1706 = vmatpush1.bf16.msra.mxu0 0
    %1707 = vmatprep.subr.bf16.mxu0 0
    %1708 = vmatpush1.bf16.msra.mxu0 0
    %1709 = vmatprep.subr.bf16.mxu0 0
    %1710 = vmatpush1.bf16.msra.mxu0 0
    %1711 = vmatprep.subr.bf16.mxu0 0
    %1712 = vmatpush1.bf16.msra.mxu0 0
    %1713 = vmatprep.subr.bf16.mxu0 0
    %1714 = vmatpush1.bf16.msra.mxu0 0
    %1715 = vmatprep.subr.bf16.mxu0 0
    %1716 = vmatpush1.bf16.msra.mxu0 0
    %1717 = vmatprep.subr.bf16.mxu0 0
    %1718 = vmatpush1.bf16.msra.mxu0 0
    %1719 = vmatprep.mubr.bf16.mxu0 0
    %1720 = vmatmul.mubr.bf16.gmra.mrb[0].mxu0 %v1685
    %v1721 = vpop.f32.mrb[0].mxu0
    %v1722 = vadd.f32 0.0, %v1721
    %v1723 = vpop.f32.mrb[0].mxu0
    %v1724 = vadd.f32 0.0, %v1723
    %v1725 = vpop.f32.mrb[0].mxu0
    %v1726 = vpop.f32.mrb[0].mxu0
    %1727 = vdwg.mxu0
    %v1730 = vrot.slane %v1722, 2
    %v1731 = vrot.slane %v1724, 2
    %v1734 = vadd.f32 %v1510, %v1730
    %v1735 = vadd.f32 %v1511, %v1731
    %v1736 = vxor.u32 %v1734, 2147483648
    %v1737 = vmul.f32 %v1736, 1.442695
    %v1738 = vpow.pop %v1737
    %v1739 = vadd.f32 %v1738, 1.0
    %v1740 = vrcp.pop %v1739
    %v1741 = vmul.f32 1.0, %v1740
    %v1742 = vtanh.pop %v1735
    %v1743 = vxor.u32 %v1735, 2147483648
    %v1744 = vmul.f32 %v1743, 1.442695
    %v1745 = vpow.pop %v1744
    %v1746 = vadd.f32 %v1745, 1.0
    %v1747 = vrcp.pop %v1746
    %v1748 = vmul.f32 1.0, %v1747
    %v1750 = vrot.slane %v1674, 6
    %v1752 = vmul.f32 %v1741, %v1750
    %v1753 = vmul.f32 %v1741, %v1742
    %1755 = vrot.lane.b32.xlu0 %v1753, 64
    %v1756 = vpop.permute.xlu0 %1755
    %v1758 = vadd.f32 %v1752, %v1756
    %v1759 = vtanh.pop %v1758
    %v1760 = vmul.f32 %v1748, %v1759
    %1761 = vst.msk [vmem:[#allocation2 + $0x8] sm:$0xc0] %vm1416, %v1760
    %1762 = vst.msk [vmem:[#allocation2 - $0x6] sm:$0xc0] %vm1418, %v1760
    %v1764 = vrot.slane %v1760, 6
    %1765 = vrot.lane.b32.xlu0 %v1764, 64
    %v1766 = vpop.permute.xlu0 %1765
    %1769 = vrot.lane.b32.xlu0 %v1152, 64
    %v1770 = vpop.permute.xlu0 %1769
    %v1772 = vsel %vm72, %v1766, %v1770
    %v1773 = vld [vmem:[#allocation2] sm:$0xff]
    %v1774 = vld [vmem:[#allocation2 + $0x8] sm:$0xff]
    %v1775 = vpack.c.bf16 %v1774, %v1773
    %v1776 = vld [vmem:[%s7] sm:$0xff]
    %v1777 = vld [vmem:[%s7 + $0x8] sm:$0xff]
    %v1778 = vld [vmem:[%s7 + $0x10] sm:$0xff]
    %v1779 = vld [vmem:[%s7 + $0x18] sm:$0xff]
    %v1780 = vld [vmem:[%s7 + $0x20] sm:$0xff]
    %v1781 = vld [vmem:[%s7 + $0x28] sm:$0xff]
    %v1782 = vld [vmem:[%s7 + $0x30] sm:$0xff]
    %v1783 = vld [vmem:[%s7 + $0x38] sm:$0xff]
    %v1784 = vld [vmem:[%s7 + $0x40] sm:$0xff]
    %v1785 = vld [vmem:[%s7 + $0x48] sm:$0xff]
    %v1786 = vld [vmem:[%s7 + $0x50] sm:$0xff]
    %v1787 = vld [vmem:[%s7 + $0x58] sm:$0xff]
    %v1788 = vld [vmem:[%s7 + $0x60] sm:$0xff]
    %v1789 = vld [vmem:[%s7 + $0x68] sm:$0xff]
    %v1790 = vld [vmem:[%s7 + $0x70] sm:$0xff]
    %v1791 = vld [vmem:[%s7 + $0x78] sm:$0xff]
    %v1792 = vld [vmem:[%s8] sm:$0x3]
    %v1794 = vlaneseq
    %v1795 = vshrl.u32 %v1794, 7
    %v1796 = vsub.s32 0, %v1795
    %v1797 = vrot.slane %v1792, %v1796
    %v1798 = vlaneseq
    %v1799 = vshrl.u32 %v1798, 7
    %v1800 = vsub.s32 1, %v1799
    %v1801 = vrot.slane %v1792, %v1800
    %v1820 = vunpack.c.l.b16 %v1776
    %v1821 = vunpack.c.h.b16 %v1776
    %v1822 = vunpack.c.l.b16 %v1777
    %v1823 = vunpack.c.h.b16 %v1777
    %v1824 = vunpack.c.l.b16 %v1778
    %v1825 = vunpack.c.h.b16 %v1778
    %v1826 = vunpack.c.l.b16 %v1779
    %v1827 = vunpack.c.h.b16 %v1779
    %v1828 = vunpack.c.l.b16 %v1780
    %v1829 = vunpack.c.h.b16 %v1780
    %v1830 = vunpack.c.l.b16 %v1781
    %v1831 = vunpack.c.h.b16 %v1781
    %v1832 = vunpack.c.l.b16 %v1782
    %v1833 = vunpack.c.h.b16 %v1782
    %v1834 = vunpack.c.l.b16 %v1783
    %v1835 = vunpack.c.h.b16 %v1783
    %v1836 = vunpack.c.l.b16 %v1784
    %v1837 = vunpack.c.h.b16 %v1784
    %v1838 = vunpack.c.l.b16 %v1785
    %v1839 = vunpack.c.h.b16 %v1785
    %v1840 = vunpack.c.l.b16 %v1786
    %v1841 = vunpack.c.h.b16 %v1786
    %v1842 = vunpack.c.l.b16 %v1787
    %v1843 = vunpack.c.h.b16 %v1787
    %v1844 = vunpack.c.l.b16 %v1788
    %v1845 = vunpack.c.h.b16 %v1788
    %v1846 = vunpack.c.l.b16 %v1789
    %v1847 = vunpack.c.h.b16 %v1789
    %v1848 = vunpack.c.l.b16 %v1790
    %v1849 = vunpack.c.h.b16 %v1790
    %v1850 = vunpack.c.l.b16 %v1791
    %v1851 = vunpack.c.h.b16 %v1791
    %v1852 = vpack.c.b16 %v1822, %v1820
    %v1853 = vpack.c.b16 %v1823, %v1821
    %v1854 = vpack.c.b16 %v1826, %v1824
    %v1855 = vpack.c.b16 %v1827, %v1825
    %v1856 = vpack.c.b16 %v1830, %v1828
    %v1857 = vpack.c.b16 %v1831, %v1829
    %v1858 = vpack.c.b16 %v1834, %v1832
    %v1859 = vpack.c.b16 %v1835, %v1833
    %v1860 = vpack.c.b16 %v1838, %v1836
    %v1861 = vpack.c.b16 %v1839, %v1837
    %v1862 = vpack.c.b16 %v1842, %v1840
    %v1863 = vpack.c.b16 %v1843, %v1841
    %v1864 = vpack.c.b16 %v1846, %v1844
    %v1865 = vpack.c.b16 %v1847, %v1845
    %v1866 = vpack.c.b16 %v1850, %v1848
    %v1867 = vpack.c.b16 %v1851, %v1849
    %1884 = vmatprep.subr.bf16.mxu0 %v1853
    %1885 = vmatpush1.bf16.msra.mxu0 %v1852
    %1886 = vmatprep.subr.bf16.mxu0 %v1855
    %1887 = vmatpush1.bf16.msra.mxu0 %v1854
    %1888 = vmatprep.subr.bf16.mxu0 %v1857
    %1889 = vmatpush1.bf16.msra.mxu0 %v1856
    %1890 = vmatprep.subr.bf16.mxu0 %v1859
    %1891 = vmatpush1.bf16.msra.mxu0 %v1858
    %1892 = vmatprep.subr.bf16.mxu0 %v1861
    %1893 = vmatpush1.bf16.msra.mxu0 %v1860
    %1894 = vmatprep.subr.bf16.mxu0 %v1863
    %1895 = vmatpush1.bf16.msra.mxu0 %v1862
    %1896 = vmatprep.subr.bf16.mxu0 %v1865
    %1897 = vmatpush1.bf16.msra.mxu0 %v1864
    %1898 = vmatprep.subr.bf16.mxu0 %v1867
    %1899 = vmatpush1.bf16.msra.mxu0 %v1866
    %1900 = vmatprep.subr.bf16.mxu0 0
    %1901 = vmatpush1.bf16.msra.mxu0 0
    %1902 = vmatprep.subr.bf16.mxu0 0
    %1903 = vmatpush1.bf16.msra.mxu0 0
    %1904 = vmatprep.subr.bf16.mxu0 0
    %1905 = vmatpush1.bf16.msra.mxu0 0
    %1906 = vmatprep.subr.bf16.mxu0 0
    %1907 = vmatpush1.bf16.msra.mxu0 0
    %1908 = vmatprep.subr.bf16.mxu0 0
    %1909 = vmatpush1.bf16.msra.mxu0 0
    %1910 = vmatprep.subr.bf16.mxu0 0
    %1911 = vmatpush1.bf16.msra.mxu0 0
    %1912 = vmatprep.subr.bf16.mxu0 0
    %1913 = vmatpush1.bf16.msra.mxu0 0
    %1914 = vmatprep.subr.bf16.mxu0 0
    %1915 = vmatpush1.bf16.msra.mxu0 0
    %1916 = vmatprep.mubr.bf16.mxu0 0
    %1917 = vmatmul.mubr.bf16.gmra.mrb[0].mxu0 %v1775
    %v1918 = vpop.f32.mrb[0].mxu0
    %v1919 = vadd.f32 %v1797, %v1918
    %v1920 = vpop.f32.mrb[0].mxu0
    %v1921 = vadd.f32 %v1801, %v1920
    %v1922 = vpop.f32.mrb[0].mxu0
    %v1923 = vadd.f32 %v1797, %v1922
    %v1924 = vpop.f32.mrb[0].mxu0
    %v1925 = vadd.f32 %v1801, %v1924
    %1926 = vdwg.mxu0
    %v1927 = vld [vmem:[%s9] sm:$0xff]
    %v1928 = vld [vmem:[%s9 + $0x8] sm:$0xff]
    %v1929 = vld [vmem:[%s9 + $0x10] sm:$0xff]
    %v1930 = vld [vmem:[%s9 + $0x18] sm:$0xff]
    %v1931 = vld [vmem:[%s9 + $0x20] sm:$0xff]
    %v1932 = vld [vmem:[%s9 + $0x28] sm:$0xff]
    %v1933 = vld [vmem:[%s9 + $0x30] sm:$0xff]
    %v1934 = vld [vmem:[%s9 + $0x38] sm:$0xff]
    %v1937 = vrot.slane %v1923, 6
    %v1938 = vrot.slane %v1925, 6
    %v1941 = vsel %vm70, %v1919, %v1937
    %v1942 = vsel %vm71, %v1921, %v1938
    %v1951 = vunpack.c.l.b16 %v1927
    %v1952 = vunpack.c.h.b16 %v1927
    %v1953 = vunpack.c.l.b16 %v1928
    %v1954 = vunpack.c.h.b16 %v1928
    %v1955 = vunpack.c.l.b16 %v1929
    %v1956 = vunpack.c.h.b16 %v1929
    %v1957 = vunpack.c.l.b16 %v1930
    %v1958 = vunpack.c.h.b16 %v1930
    %v1959 = vunpack.c.l.b16 %v1931
    %v1960 = vunpack.c.h.b16 %v1931
    %v1961 = vunpack.c.l.b16 %v1932
    %v1962 = vunpack.c.h.b16 %v1932
    %v1963 = vunpack.c.l.b16 %v1933
    %v1964 = vunpack.c.h.b16 %v1933
    %v1965 = vunpack.c.l.b16 %v1934
    %v1966 = vunpack.c.h.b16 %v1934
    %v1967 = vpack.c.b16 %v1953, %v1951
    %v1968 = vpack.c.b16 %v1954, %v1952
    %v1969 = vpack.c.b16 %v1957, %v1955
    %v1970 = vpack.c.b16 %v1958, %v1956
    %v1971 = vpack.c.b16 %v1961, %v1959
    %v1972 = vpack.c.b16 %v1962, %v1960
    %v1973 = vpack.c.b16 %v1965, %v1963
    %v1974 = vpack.c.b16 %v1966, %v1964
    %1983 = vmatprep.subr.bf16.mxu0 %v1968
    %1984 = vmatpush1.bf16.msra.mxu0 %v1967
    %1985 = vmatprep.subr.bf16.mxu0 %v1970
    %1986 = vmatpush1.bf16.msra.mxu0 %v1969
    %1987 = vmatprep.subr.bf16.mxu0 %v1972
    %1988 = vmatpush1.bf16.msra.mxu0 %v1971
    %1989 = vmatprep.subr.bf16.mxu0 %v1974
    %1990 = vmatpush1.bf16.msra.mxu0 %v1973
    %1991 = vmatprep.subr.bf16.mxu0 0
    %1992 = vmatpush1.bf16.msra.mxu0 0
    %1993 = vmatprep.subr.bf16.mxu0 0
    %1994 = vmatpush1.bf16.msra.mxu0 0
    %1995 = vmatprep.subr.bf16.mxu0 0
    %1996 = vmatpush1.bf16.msra.mxu0 0
    %1997 = vmatprep.subr.bf16.mxu0 0
    %1998 = vmatpush1.bf16.msra.mxu0 0
    %1999 = vmatprep.subr.bf16.mxu0 0
    %2000 = vmatpush1.bf16.msra.mxu0 0
    %2001 = vmatprep.subr.bf16.mxu0 0
    %2002 = vmatpush1.bf16.msra.mxu0 0
    %2003 = vmatprep.subr.bf16.mxu0 0
    %2004 = vmatpush1.bf16.msra.mxu0 0
    %2005 = vmatprep.subr.bf16.mxu0 0
    %2006 = vmatpush1.bf16.msra.mxu0 0
    %2007 = vmatprep.subr.bf16.mxu0 0
    %2008 = vmatpush1.bf16.msra.mxu0 0
    %2009 = vmatprep.subr.bf16.mxu0 0
    %2010 = vmatpush1.bf16.msra.mxu0 0
    %2011 = vmatprep.subr.bf16.mxu0 0
    %2012 = vmatpush1.bf16.msra.mxu0 0
    %2013 = vmatprep.subr.bf16.mxu0 0
    %2014 = vmatpush1.bf16.msra.mxu0 0
    %2015 = vmatprep.mubr.bf16.mxu0 0
    %2016 = vmatmul.mubr.bf16.gmra.mrb[0].mxu0 %v209
    %v2017 = vpop.f32.mrb[0].mxu0
    %v2018 = vadd.f32 0.0, %v2017
    %v2019 = vpop.f32.mrb[0].mxu0
    %v2020 = vadd.f32 0.0, %v2019
    %v2021 = vpop.f32.mrb[0].mxu0
    %v2022 = vpop.f32.mrb[0].mxu0
    %2023 = vdwg.mxu0
    %v2024 = vadd.f32 %v1941, %v2018
    %v2025 = vadd.f32 %v1942, %v2020
    %v2026 = vxor.u32 %v2024, 2147483648
    %v2027 = vmul.f32 %v2026, 1.442695
    %v2028 = vpow.pop %v2027
    %v2029 = vadd.f32 %v2028, 1.0
    %v2030 = vrcp.pop %v2029
    %v2031 = vmul.f32 1.0, %v2030
    %v2032 = vtanh.pop %v2025
    %v2033 = vxor.u32 %v2025, 2147483648
    %v2034 = vmul.f32 %v2033, 1.442695
    %v2035 = vpow.pop %v2034
    %v2036 = vadd.f32 %v2035, 1.0
    %v2037 = vrcp.pop %v2036
    %v2038 = vmul.f32 1.0, %v2037
    %v2039 = vmul.f32 %v2031, 0.0
    %v2040 = vmul.f32 %v2031, %v2032
    %2042 = vrot.lane.b32.xlu0 %v2040, 64
    %v2043 = vpop.permute.xlu0 %2042
    %v2045 = vadd.f32 %v2039, %v2043
    %v2046 = vtanh.pop %v2045
    %v2047 = vmul.f32 %v2038, %v2046
    %v2048 = vrot.slane %v1923, 2
    %v2049 = vrot.slane %v1925, 2
    %v2052 = vsel %vm70, %v1919, %v2048
    %v2053 = vsel %vm71, %v1921, %v2049
    %v2054 = vpack.c.bf16 %v2047, %v2047
    %2056 = vrot.lane.b32.xlu0 %v2054, 64
    %v2057 = vpop.permute.xlu0 %2056
    %v2059 = vsel %vm207, %v2057, 0
    %2061 = vmatprep.subr.bf16.mxu0 %v1968
    %2062 = vmatpush1.bf16.msra.mxu0 %v1967
    %2063 = vmatprep.subr.bf16.mxu0 %v1970
    %2064 = vmatpush1.bf16.msra.mxu0 %v1969
    %2065 = vmatprep.subr.bf16.mxu0 %v1972
    %2066 = vmatpush1.bf16.msra.mxu0 %v1971
    %2067 = vmatprep.subr.bf16.mxu0 %v1974
    %2068 = vmatpush1.bf16.msra.mxu0 %v1973
    %2069 = vmatprep.subr.bf16.mxu0 0
    %2070 = vmatpush1.bf16.msra.mxu0 0
    %2071 = vmatprep.subr.bf16.mxu0 0
    %2072 = vmatpush1.bf16.msra.mxu0 0
    %2073 = vmatprep.subr.bf16.mxu0 0
    %2074 = vmatpush1.bf16.msra.mxu0 0
    %2075 = vmatprep.subr.bf16.mxu0 0
    %2076 = vmatpush1.bf16.msra.mxu0 0
    %2077 = vmatprep.subr.bf16.mxu0 0
    %2078 = vmatpush1.bf16.msra.mxu0 0
    %2079 = vmatprep.subr.bf16.mxu0 0
    %2080 = vmatpush1.bf16.msra.mxu0 0
    %2081 = vmatprep.subr.bf16.mxu0 0
    %2082 = vmatpush1.bf16.msra.mxu0 0
    %2083 = vmatprep.subr.bf16.mxu0 0
    %2084 = vmatpush1.bf16.msra.mxu0 0
    %2085 = vmatprep.subr.bf16.mxu0 0
    %2086 = vmatpush1.bf16.msra.mxu0 0
    %2087 = vmatprep.subr.bf16.mxu0 0
    %2088 = vmatpush1.bf16.msra.mxu0 0
    %2089 = vmatprep.subr.bf16.mxu0 0
    %2090 = vmatpush1.bf16.msra.mxu0 0
    %2091 = vmatprep.subr.bf16.mxu0 0
    %2092 = vmatpush1.bf16.msra.mxu0 0
    %2093 = vmatprep.mubr.bf16.mxu0 0
    %2094 = vmatmul.mubr.bf16.gmra.mrb[0].mxu0 %v2059
    %v2095 = vpop.f32.mrb[0].mxu0
    %v2096 = vadd.f32 0.0, %v2095
    %v2097 = vpop.f32.mrb[0].mxu0
    %v2098 = vadd.f32 0.0, %v2097
    %v2099 = vpop.f32.mrb[0].mxu0
    %v2100 = vpop.f32.mrb[0].mxu0
    %2101 = vdwg.mxu0
    %v2104 = vrot.slane %v2096, 6
    %v2105 = vrot.slane %v2098, 6
    %v2108 = vadd.f32 %v2052, %v2104
    %v2109 = vadd.f32 %v2053, %v2105
    %v2110 = vxor.u32 %v2108, 2147483648
    %v2111 = vmul.f32 %v2110, 1.442695
    %v2112 = vpow.pop %v2111
    %v2113 = vadd.f32 %v2112, 1.0
    %v2114 = vrcp.pop %v2113
    %v2115 = vmul.f32 1.0, %v2114
    %v2116 = vtanh.pop %v2109
    %v2117 = vxor.u32 %v2109, 2147483648
    %v2118 = vmul.f32 %v2117, 1.442695
    %v2119 = vpow.pop %v2118
    %v2120 = vadd.f32 %v2119, 1.0
    %v2121 = vrcp.pop %v2120
    %v2122 = vmul.f32 1.0, %v2121
    %v2124 = vrot.slane %v2045, 6
    %v2126 = vmul.f32 %v2115, %v2124
    %v2127 = vmul.f32 %v2115, %v2116
    %2129 = vrot.lane.b32.xlu0 %v2127, 64
    %v2130 = vpop.permute.xlu0 %2129
    %v2132 = vadd.f32 %v2126, %v2130
    %v2133 = vtanh.pop %v2132
    %v2134 = vmul.f32 %v2122, %v2133
    %v2135 = vpack.c.bf16 %v2134, %v2134
    %v2137 = vrot.slane %v2135, 1
    %2138 = vrot.lane.b32.xlu0 %v2137, 64
    %v2139 = vpop.permute.xlu0 %2138
    %v2141 = vsel %vm207, %v2139, 0
    %2143 = vmatprep.subr.bf16.mxu0 %v1968
    %2144 = vmatpush1.bf16.msra.mxu0 %v1967
    %2145 = vmatprep.subr.bf16.mxu0 %v1970
    %2146 = vmatpush1.bf16.msra.mxu0 %v1969
    %2147 = vmatprep.subr.bf16.mxu0 %v1972
    %2148 = vmatpush1.bf16.msra.mxu0 %v1971
    %2149 = vmatprep.subr.bf16.mxu0 %v1974
    %2150 = vmatpush1.bf16.msra.mxu0 %v1973
    %2151 = vmatprep.subr.bf16.mxu0 0
    %2152 = vmatpush1.bf16.msra.mxu0 0
    %2153 = vmatprep.subr.bf16.mxu0 0
    %2154 = vmatpush1.bf16.msra.mxu0 0
    %2155 = vmatprep.subr.bf16.mxu0 0
    %2156 = vmatpush1.bf16.msra.mxu0 0
    %2157 = vmatprep.subr.bf16.mxu0 0
    %2158 = vmatpush1.bf16.msra.mxu0 0
    %2159 = vmatprep.subr.bf16.mxu0 0
    %2160 = vmatpush1.bf16.msra.mxu0 0
    %2161 = vmatprep.subr.bf16.mxu0 0
    %2162 = vmatpush1.bf16.msra.mxu0 0
    %2163 = vmatprep.subr.bf16.mxu0 0
    %2164 = vmatpush1.bf16.msra.mxu0 0
    %2165 = vmatprep.subr.bf16.mxu0 0
    %2166 = vmatpush1.bf16.msra.mxu0 0
    %2167 = vmatprep.subr.bf16.mxu0 0
    %2168 = vmatpush1.bf16.msra.mxu0 0
    %2169 = vmatprep.subr.bf16.mxu0 0
    %2170 = vmatpush1.bf16.msra.mxu0 0
    %2171 = vmatprep.subr.bf16.mxu0 0
    %2172 = vmatpush1.bf16.msra.mxu0 0
    %2173 = vmatprep.subr.bf16.mxu0 0
    %2174 = vmatpush1.bf16.msra.mxu0 0
    %2175 = vmatprep.mubr.bf16.mxu0 0
    %2176 = vmatmul.mubr.bf16.gmra.mrb[0].mxu0 %v2141
    %v2177 = vpop.f32.mrb[0].mxu0
    %v2178 = vadd.f32 0.0, %v2177
    %v2179 = vpop.f32.mrb[0].mxu0
    %v2180 = vadd.f32 0.0, %v2179
    %v2181 = vpop.f32.mrb[0].mxu0
    %v2182 = vpop.f32.mrb[0].mxu0
    %2183 = vdwg.mxu0
    %v2186 = vrot.slane %v2178, 4
    %v2187 = vrot.slane %v2180, 4
    %v2190 = vadd.f32 %v1941, %v2186
    %v2191 = vadd.f32 %v1942, %v2187
    %v2192 = vxor.u32 %v2190, 2147483648
    %v2193 = vmul.f32 %v2192, 1.442695
    %v2194 = vpow.pop %v2193
    %v2195 = vadd.f32 %v2194, 1.0
    %v2196 = vrcp.pop %v2195
    %v2197 = vmul.f32 1.0, %v2196
    %v2198 = vtanh.pop %v2191
    %v2199 = vxor.u32 %v2191, 2147483648
    %v2200 = vmul.f32 %v2199, 1.442695
    %v2201 = vpow.pop %v2200
    %v2202 = vadd.f32 %v2201, 1.0
    %v2203 = vrcp.pop %v2202
    %v2204 = vmul.f32 1.0, %v2203
    %v2206 = vrot.slane %v2132, 6
    %v2208 = vmul.f32 %v2197, %v2206
    %v2209 = vmul.f32 %v2197, %v2198
    %2211 = vrot.lane.b32.xlu0 %v2209, 64
    %v2212 = vpop.permute.xlu0 %2211
    %v2214 = vadd.f32 %v2208, %v2212
    %v2215 = vtanh.pop %v2214
    %v2216 = vmul.f32 %v2204, %v2215
    %v2217 = vpack.c.bf16 %v2216, %v2216
    %v2219 = vrot.slane %v2217, 2
    %2220 = vrot.lane.b32.xlu0 %v2219, 64
    %v2221 = vpop.permute.xlu0 %2220
    %v2223 = vsel %vm207, %v2221, 0
    %2225 = vmatprep.subr.bf16.mxu0 %v1968
    %2226 = vmatpush1.bf16.msra.mxu0 %v1967
    %2227 = vmatprep.subr.bf16.mxu0 %v1970
    %2228 = vmatpush1.bf16.msra.mxu0 %v1969
    %2229 = vmatprep.subr.bf16.mxu0 %v1972
    %2230 = vmatpush1.bf16.msra.mxu0 %v1971
    %2231 = vmatprep.subr.bf16.mxu0 %v1974
    %2232 = vmatpush1.bf16.msra.mxu0 %v1973
    %2233 = vmatprep.subr.bf16.mxu0 0
    %2234 = vmatpush1.bf16.msra.mxu0 0
    %2235 = vmatprep.subr.bf16.mxu0 0
    %2236 = vmatpush1.bf16.msra.mxu0 0
    %2237 = vmatprep.subr.bf16.mxu0 0
    %2238 = vmatpush1.bf16.msra.mxu0 0
    %2239 = vmatprep.subr.bf16.mxu0 0
    %2240 = vmatpush1.bf16.msra.mxu0 0
    %2241 = vmatprep.subr.bf16.mxu0 0
    %2242 = vmatpush1.bf16.msra.mxu0 0
    %2243 = vmatprep.subr.bf16.mxu0 0
    %2244 = vmatpush1.bf16.msra.mxu0 0
    %2245 = vmatprep.subr.bf16.mxu0 0
    %2246 = vmatpush1.bf16.msra.mxu0 0
    %2247 = vmatprep.subr.bf16.mxu0 0
    %2248 = vmatpush1.bf16.msra.mxu0 0
    %2249 = vmatprep.subr.bf16.mxu0 0
    %2250 = vmatpush1.bf16.msra.mxu0 0
    %2251 = vmatprep.subr.bf16.mxu0 0
    %2252 = vmatpush1.bf16.msra.mxu0 0
    %2253 = vmatprep.subr.bf16.mxu0 0
    %2254 = vmatpush1.bf16.msra.mxu0 0
    %2255 = vmatprep.subr.bf16.mxu0 0
    %2256 = vmatpush1.bf16.msra.mxu0 0
    %2257 = vmatprep.mubr.bf16.mxu0 0
    %2258 = vmatmul.mubr.bf16.gmra.mrb[0].mxu0 %v2223
    %v2259 = vpop.f32.mrb[0].mxu0
    %v2260 = vadd.f32 0.0, %v2259
    %v2261 = vpop.f32.mrb[0].mxu0
    %v2262 = vadd.f32 0.0, %v2261
    %v2263 = vpop.f32.mrb[0].mxu0
    %v2264 = vpop.f32.mrb[0].mxu0
    %2265 = vdwg.mxu0
    %v2268 = vrot.slane %v2260, 2
    %v2269 = vrot.slane %v2262, 2
    %v2272 = vadd.f32 %v2052, %v2268
    %v2273 = vadd.f32 %v2053, %v2269
    %v2274 = vxor.u32 %v2272, 2147483648
    %v2275 = vmul.f32 %v2274, 1.442695
    %v2276 = vpow.pop %v2275
    %v2277 = vadd.f32 %v2276, 1.0
    %v2278 = vrcp.pop %v2277
    %v2279 = vmul.f32 1.0, %v2278
    %v2280 = vtanh.pop %v2273
    %v2281 = vxor.u32 %v2273, 2147483648
    %v2282 = vmul.f32 %v2281, 1.442695
    %v2283 = vpow.pop %v2282
    %v2284 = vadd.f32 %v2283, 1.0
    %v2285 = vrcp.pop %v2284
    %v2286 = vmul.f32 1.0, %v2285
    %v2288 = vrot.slane %v2214, 6
    %v2290 = vmul.f32 %v2279, %v2288
    %v2291 = vmul.f32 %v2279, %v2280
    %2293 = vrot.lane.b32.xlu0 %v2291, 64
    %v2294 = vpop.permute.xlu0 %2293
    %v2296 = vadd.f32 %v2290, %v2294
    %v2297 = vtanh.pop %v2296
    %v2298 = vmul.f32 %v2286, %v2297
    %v2301 = vrot.slane %v1919, 6
    %v2302 = vrot.slane %v1921, 6
    %v2305 = vsel %vm70, %v1923, %v2301
    %v2306 = vsel %vm71, %v1925, %v2302
    %v2307 = vpack.c.bf16 %v2298, %v2298
    %v2309 = vrot.slane %v2307, 3
    %2310 = vrot.lane.b32.xlu0 %v2309, 64
    %v2311 = vpop.permute.xlu0 %2310
    %v2313 = vsel %vm207, %v2311, 0
    %2315 = vmatprep.subr.bf16.mxu0 %v1968
    %2316 = vmatpush1.bf16.msra.mxu0 %v1967
    %2317 = vmatprep.subr.bf16.mxu0 %v1970
    %2318 = vmatpush1.bf16.msra.mxu0 %v1969
    %2319 = vmatprep.subr.bf16.mxu0 %v1972
    %2320 = vmatpush1.bf16.msra.mxu0 %v1971
    %2321 = vmatprep.subr.bf16.mxu0 %v1974
    %2322 = vmatpush1.bf16.msra.mxu0 %v1973
    %2323 = vmatprep.subr.bf16.mxu0 0
    %2324 = vmatpush1.bf16.msra.mxu0 0
    %2325 = vmatprep.subr.bf16.mxu0 0
    %2326 = vmatpush1.bf16.msra.mxu0 0
    %2327 = vmatprep.subr.bf16.mxu0 0
    %2328 = vmatpush1.bf16.msra.mxu0 0
    %2329 = vmatprep.subr.bf16.mxu0 0
    %2330 = vmatpush1.bf16.msra.mxu0 0
    %2331 = vmatprep.subr.bf16.mxu0 0
    %2332 = vmatpush1.bf16.msra.mxu0 0
    %2333 = vmatprep.subr.bf16.mxu0 0
    %2334 = vmatpush1.bf16.msra.mxu0 0
    %2335 = vmatprep.subr.bf16.mxu0 0
    %2336 = vmatpush1.bf16.msra.mxu0 0
    %2337 = vmatprep.subr.bf16.mxu0 0
    %2338 = vmatpush1.bf16.msra.mxu0 0
    %2339 = vmatprep.subr.bf16.mxu0 0
    %2340 = vmatpush1.bf16.msra.mxu0 0
    %2341 = vmatprep.subr.bf16.mxu0 0
    %2342 = vmatpush1.bf16.msra.mxu0 0
    %2343 = vmatprep.subr.bf16.mxu0 0
    %2344 = vmatpush1.bf16.msra.mxu0 0
    %2345 = vmatprep.subr.bf16.mxu0 0
    %2346 = vmatpush1.bf16.msra.mxu0 0
    %2347 = vmatprep.mubr.bf16.mxu0 0
    %2348 = vmatmul.mubr.bf16.gmra.mrb[0].mxu0 %v2313
    %v2349 = vpop.f32.mrb[0].mxu0
    %v2350 = vadd.f32 0.0, %v2349
    %v2351 = vpop.f32.mrb[0].mxu0
    %v2352 = vadd.f32 0.0, %v2351
    %v2353 = vpop.f32.mrb[0].mxu0
    %v2354 = vpop.f32.mrb[0].mxu0
    %2355 = vdwg.mxu0
    %v2356 = vadd.f32 %v2305, %v2350
    %v2357 = vadd.f32 %v2306, %v2352
    %v2358 = vxor.u32 %v2356, 2147483648
    %v2359 = vmul.f32 %v2358, 1.442695
    %v2360 = vpow.pop %v2359
    %v2361 = vadd.f32 %v2360, 1.0
    %v2362 = vrcp.pop %v2361
    %v2363 = vmul.f32 1.0, %v2362
    %v2364 = vtanh.pop %v2357
    %v2365 = vxor.u32 %v2357, 2147483648
    %v2366 = vmul.f32 %v2365, 1.442695
    %v2367 = vpow.pop %v2366
    %v2368 = vadd.f32 %v2367, 1.0
    %v2369 = vrcp.pop %v2368
    %v2370 = vmul.f32 1.0, %v2369
    %v2372 = vrot.slane %v2296, 6
    %v2374 = vmul.f32 %v2363, %v2372
    %v2375 = vmul.f32 %v2363, %v2364
    %2377 = vrot.lane.b32.xlu0 %v2375, 64
    %v2378 = vpop.permute.xlu0 %2377
    %v2380 = vadd.f32 %v2374, %v2378
    %v2381 = vtanh.pop %v2380
    %v2382 = vmul.f32 %v2370, %v2381
    %v2383 = vrot.slane %v1919, 2
    %v2384 = vrot.slane %v1921, 2
    %v2387 = vsel %vm70, %v1923, %v2383
    %v2388 = vsel %vm71, %v1925, %v2384
    %v2389 = vpack.c.bf16 %v2382, %v2382
    %2391 = vrot.lane.b32.xlu0 %v2389, 64
    %v2392 = vpop.permute.xlu0 %2391
    %v2394 = vsel %vm207, %v2392, 0
    %2396 = vmatprep.subr.bf16.mxu0 %v1968
    %2397 = vmatpush1.bf16.msra.mxu0 %v1967
    %2398 = vmatprep.subr.bf16.mxu0 %v1970
    %2399 = vmatpush1.bf16.msra.mxu0 %v1969
    %2400 = vmatprep.subr.bf16.mxu0 %v1972
    %2401 = vmatpush1.bf16.msra.mxu0 %v1971
    %2402 = vmatprep.subr.bf16.mxu0 %v1974
    %2403 = vmatpush1.bf16.msra.mxu0 %v1973
    %2404 = vmatprep.subr.bf16.mxu0 0
    %2405 = vmatpush1.bf16.msra.mxu0 0
    %2406 = vmatprep.subr.bf16.mxu0 0
    %2407 = vmatpush1.bf16.msra.mxu0 0
    %2408 = vmatprep.subr.bf16.mxu0 0
    %2409 = vmatpush1.bf16.msra.mxu0 0
    %2410 = vmatprep.subr.bf16.mxu0 0
    %2411 = vmatpush1.bf16.msra.mxu0 0
    %2412 = vmatprep.subr.bf16.mxu0 0
    %2413 = vmatpush1.bf16.msra.mxu0 0
    %2414 = vmatprep.subr.bf16.mxu0 0
    %2415 = vmatpush1.bf16.msra.mxu0 0
    %2416 = vmatprep.subr.bf16.mxu0 0
    %2417 = vmatpush1.bf16.msra.mxu0 0
    %2418 = vmatprep.subr.bf16.mxu0 0
    %2419 = vmatpush1.bf16.msra.mxu0 0
    %2420 = vmatprep.subr.bf16.mxu0 0
    %2421 = vmatpush1.bf16.msra.mxu0 0
    %2422 = vmatprep.subr.bf16.mxu0 0
    %2423 = vmatpush1.bf16.msra.mxu0 0
    %2424 = vmatprep.subr.bf16.mxu0 0
    %2425 = vmatpush1.bf16.msra.mxu0 0
    %2426 = vmatprep.subr.bf16.mxu0 0
    %2427 = vmatpush1.bf16.msra.mxu0 0
    %2428 = vmatprep.mubr.bf16.mxu0 0
    %2429 = vmatmul.mubr.bf16.gmra.mrb[0].mxu0 %v2394
    %v2430 = vpop.f32.mrb[0].mxu0
    %v2431 = vadd.f32 0.0, %v2430
    %v2432 = vpop.f32.mrb[0].mxu0
    %v2433 = vadd.f32 0.0, %v2432
    %v2434 = vpop.f32.mrb[0].mxu0
    %v2435 = vpop.f32.mrb[0].mxu0
    %2436 = vdwg.mxu0
    %v2439 = vrot.slane %v2431, 6
    %v2440 = vrot.slane %v2433, 6
    %v2443 = vadd.f32 %v2387, %v2439
    %v2444 = vadd.f32 %v2388, %v2440
    %v2445 = vxor.u32 %v2443, 2147483648
    %v2446 = vmul.f32 %v2445, 1.442695
    %v2447 = vpow.pop %v2446
    %v2448 = vadd.f32 %v2447, 1.0
    %v2449 = vrcp.pop %v2448
    %v2450 = vmul.f32 1.0, %v2449
    %v2451 = vtanh.pop %v2444
    %v2452 = vxor.u32 %v2444, 2147483648
    %v2453 = vmul.f32 %v2452, 1.442695
    %v2454 = vpow.pop %v2453
    %v2455 = vadd.f32 %v2454, 1.0
    %v2456 = vrcp.pop %v2455
    %v2457 = vmul.f32 1.0, %v2456
    %v2459 = vrot.slane %v2380, 6
    %v2461 = vmul.f32 %v2450, %v2459
    %v2462 = vmul.f32 %v2450, %v2451
    %2464 = vrot.lane.b32.xlu0 %v2462, 64
    %v2465 = vpop.permute.xlu0 %2464
    %v2467 = vadd.f32 %v2461, %v2465
    %v2468 = vtanh.pop %v2467
    %v2469 = vmul.f32 %v2457, %v2468
    %v2470 = vpack.c.bf16 %v2469, %v2469
    %v2472 = vrot.slane %v2470, 1
    %2473 = vrot.lane.b32.xlu0 %v2472, 64
    %v2474 = vpop.permute.xlu0 %2473
    %v2476 = vsel %vm207, %v2474, 0
    %2478 = vmatprep.subr.bf16.mxu0 %v1968
    %2479 = vmatpush1.bf16.msra.mxu0 %v1967
    %2480 = vmatprep.subr.bf16.mxu0 %v1970
    %2481 = vmatpush1.bf16.msra.mxu0 %v1969
    %2482 = vmatprep.subr.bf16.mxu0 %v1972
    %2483 = vmatpush1.bf16.msra.mxu0 %v1971
    %2484 = vmatprep.subr.bf16.mxu0 %v1974
    %2485 = vmatpush1.bf16.msra.mxu0 %v1973
    %2486 = vmatprep.subr.bf16.mxu0 0
    %2487 = vmatpush1.bf16.msra.mxu0 0
    %2488 = vmatprep.subr.bf16.mxu0 0
    %2489 = vmatpush1.bf16.msra.mxu0 0
    %2490 = vmatprep.subr.bf16.mxu0 0
    %2491 = vmatpush1.bf16.msra.mxu0 0
    %2492 = vmatprep.subr.bf16.mxu0 0
    %2493 = vmatpush1.bf16.msra.mxu0 0
    %2494 = vmatprep.subr.bf16.mxu0 0
    %2495 = vmatpush1.bf16.msra.mxu0 0
    %2496 = vmatprep.subr.bf16.mxu0 0
    %2497 = vmatpush1.bf16.msra.mxu0 0
    %2498 = vmatprep.subr.bf16.mxu0 0
    %2499 = vmatpush1.bf16.msra.mxu0 0
    %2500 = vmatprep.subr.bf16.mxu0 0
    %2501 = vmatpush1.bf16.msra.mxu0 0
    %2502 = vmatprep.subr.bf16.mxu0 0
    %2503 = vmatpush1.bf16.msra.mxu0 0
    %2504 = vmatprep.subr.bf16.mxu0 0
    %2505 = vmatpush1.bf16.msra.mxu0 0
    %2506 = vmatprep.subr.bf16.mxu0 0
    %2507 = vmatpush1.bf16.msra.mxu0 0
    %2508 = vmatprep.subr.bf16.mxu0 0
    %2509 = vmatpush1.bf16.msra.mxu0 0
    %2510 = vmatprep.mubr.bf16.mxu0 0
    %2511 = vmatmul.mubr.bf16.gmra.mrb[0].mxu0 %v2476
    %v2512 = vpop.f32.mrb[0].mxu0
    %v2513 = vadd.f32 0.0, %v2512
    %v2514 = vpop.f32.mrb[0].mxu0
    %v2515 = vadd.f32 0.0, %v2514
    %v2516 = vpop.f32.mrb[0].mxu0
    %v2517 = vpop.f32.mrb[0].mxu0
    %2518 = vdwg.mxu0
    %v2521 = vrot.slane %v2513, 4
    %v2522 = vrot.slane %v2515, 4
    %v2525 = vadd.f32 %v2305, %v2521
    %v2526 = vadd.f32 %v2306, %v2522
    %v2527 = vxor.u32 %v2525, 2147483648
    %v2528 = vmul.f32 %v2527, 1.442695
    %v2529 = vpow.pop %v2528
    %v2530 = vadd.f32 %v2529, 1.0
    %v2531 = vrcp.pop %v2530
    %v2532 = vmul.f32 1.0, %v2531
    %v2533 = vtanh.pop %v2526
    %v2534 = vxor.u32 %v2526, 2147483648
    %v2535 = vmul.f32 %v2534, 1.442695
    %v2536 = vpow.pop %v2535
    %v2537 = vadd.f32 %v2536, 1.0
    %v2538 = vrcp.pop %v2537
    %v2539 = vmul.f32 1.0, %v2538
    %v2541 = vrot.slane %v2467, 6
    %v2543 = vmul.f32 %v2532, %v2541
    %v2544 = vmul.f32 %v2532, %v2533
    %2546 = vrot.lane.b32.xlu0 %v2544, 64
    %v2547 = vpop.permute.xlu0 %2546
    %v2549 = vadd.f32 %v2543, %v2547
    %v2550 = vtanh.pop %v2549
    %v2551 = vmul.f32 %v2539, %v2550
    %v2552 = vpack.c.bf16 %v2551, %v2551
    %v2554 = vrot.slane %v2552, 2
    %2555 = vrot.lane.b32.xlu0 %v2554, 64
    %v2556 = vpop.permute.xlu0 %2555
    %v2558 = vsel %vm207, %v2556, 0
    %2560 = vmatprep.subr.bf16.mxu0 %v1968
    %2561 = vmatpush1.bf16.msra.mxu0 %v1967
    %2562 = vmatprep.subr.bf16.mxu0 %v1970
    %2563 = vmatpush1.bf16.msra.mxu0 %v1969
    %2564 = vmatprep.subr.bf16.mxu0 %v1972
    %2565 = vmatpush1.bf16.msra.mxu0 %v1971
    %2566 = vmatprep.subr.bf16.mxu0 %v1974
    %2567 = vmatpush1.bf16.msra.mxu0 %v1973
    %2568 = vmatprep.subr.bf16.mxu0 0
    %2569 = vmatpush1.bf16.msra.mxu0 0
    %2570 = vmatprep.subr.bf16.mxu0 0
    %2571 = vmatpush1.bf16.msra.mxu0 0
    %2572 = vmatprep.subr.bf16.mxu0 0
    %2573 = vmatpush1.bf16.msra.mxu0 0
    %2574 = vmatprep.subr.bf16.mxu0 0
    %2575 = vmatpush1.bf16.msra.mxu0 0
    %2576 = vmatprep.subr.bf16.mxu0 0
    %2577 = vmatpush1.bf16.msra.mxu0 0
    %2578 = vmatprep.subr.bf16.mxu0 0
    %2579 = vmatpush1.bf16.msra.mxu0 0
    %2580 = vmatprep.subr.bf16.mxu0 0
    %2581 = vmatpush1.bf16.msra.mxu0 0
    %2582 = vmatprep.subr.bf16.mxu0 0
    %2583 = vmatpush1.bf16.msra.mxu0 0
    %2584 = vmatprep.subr.bf16.mxu0 0
    %2585 = vmatpush1.bf16.msra.mxu0 0
    %2586 = vmatprep.subr.bf16.mxu0 0
    %2587 = vmatpush1.bf16.msra.mxu0 0
    %2588 = vmatprep.subr.bf16.mxu0 0
    %2589 = vmatpush1.bf16.msra.mxu0 0
    %2590 = vmatprep.subr.bf16.mxu0 0
    %2591 = vmatpush1.bf16.msra.mxu0 0
    %2592 = vmatprep.mubr.bf16.mxu0 0
    %2593 = vmatmul.mubr.bf16.gmra.mrb[0].mxu0 %v2558
    %v2594 = vpop.f32.mrb[0].mxu0
    %v2595 = vadd.f32 0.0, %v2594
    %v2596 = vpop.f32.mrb[0].mxu0
    %v2597 = vadd.f32 0.0, %v2596
    %v2598 = vpop.f32.mrb[0].mxu0
    %v2599 = vpop.f32.mrb[0].mxu0
    %2600 = vdwg.mxu0
    %v2603 = vrot.slane %v2595, 2
    %v2604 = vrot.slane %v2597, 2
    %v2607 = vadd.f32 %v2387, %v2603
    %v2608 = vadd.f32 %v2388, %v2604
    %v2609 = vxor.u32 %v2607, 2147483648
    %v2610 = vmul.f32 %v2609, 1.442695
    %v2611 = vpow.pop %v2610
    %v2612 = vadd.f32 %v2611, 1.0
    %v2613 = vrcp.pop %v2612
    %v2614 = vmul.f32 1.0, %v2613
    %v2615 = vtanh.pop %v2608
    %v2616 = vxor.u32 %v2608, 2147483648
    %v2617 = vmul.f32 %v2616, 1.442695
    %v2618 = vpow.pop %v2617
    %v2619 = vadd.f32 %v2618, 1.0
    %v2620 = vrcp.pop %v2619
    %v2621 = vmul.f32 1.0, %v2620
    %v2623 = vrot.slane %v2549, 6
    %v2625 = vmul.f32 %v2614, %v2623
    %v2626 = vmul.f32 %v2614, %v2615
    %2628 = vrot.lane.b32.xlu0 %v2626, 64
    %v2629 = vpop.permute.xlu0 %2628
    %v2631 = vadd.f32 %v2625, %v2629
    %v2632 = vtanh.pop %v2631
    %v2633 = vmul.f32 %v2621, %v2632
    %v2635 = vrot.slane %v2633, 6
    %2636 = vrot.lane.b32.xlu0 %v2635, 64
    %v2637 = vpop.permute.xlu0 %2636
    %2640 = vrot.lane.b32.xlu0 %v2047, 64
    %v2641 = vpop.permute.xlu0 %2640
    %v2643 = vsel %vm72, %v2637, %v2641
    %v2644 = vadd.f32 %v922, %v1772
    %v2645 = vadd.f32 %v2644, %v2643
    %v2646 = vpack.c.bf16 %v2645, %v2645
    %v2647 = vld [vmem:[%s10] sm:$0xf]
    %v2648 = vld [vmem:[%s10 + $0x4] sm:$0xf]
    %v2649 = vld [vmem:[%s10 + $0x8] sm:$0xf]
    %v2650 = vld [vmem:[%s10 + $0xc] sm:$0xf]
    %v2651 = vld [vmem:[%s10 + $0x10] sm:$0xf]
    %v2652 = vld [vmem:[%s10 + $0x14] sm:$0xf]
    %v2653 = vld [vmem:[%s10 + $0x18] sm:$0xf]
    %v2654 = vld [vmem:[%s10 + $0x1c] sm:$0xf]
    %v2655 = vld [vmem:[%s11] sm:$0x1]
    %v2657 = vlaneseq
    %v2658 = vshrl.u32 %v2657, 7
    %v2659 = vsub.s32 0, %v2658
    %v2660 = vrot.slane %v2655, %v2659
    %v2670 = vunpack.c.l.b16 %v2647
    %v2671 = vunpack.c.l.b16 %v2648
    %v2672 = vunpack.c.l.b16 %v2649
    %v2673 = vunpack.c.l.b16 %v2650
    %v2674 = vunpack.c.l.b16 %v2651
    %v2675 = vunpack.c.l.b16 %v2652
    %v2676 = vunpack.c.l.b16 %v2653
    %v2677 = vunpack.c.l.b16 %v2654
    %v2678 = vpack.c.b16 %v2671, %v2670
    %v2679 = vpack.c.b16 %v2673, %v2672
    %v2680 = vpack.c.b16 %v2675, %v2674
    %v2681 = vpack.c.b16 %v2677, %v2676
    %v2687 = vsel %vm207, %v2646, 0
    %2689 = vmatprep.subr.bf16.mxu0 0
    %2690 = vmatpush1.bf16.msra.mxu0 %v2678
    %2691 = vmatprep.subr.bf16.mxu0 0
    %2692 = vmatpush1.bf16.msra.mxu0 %v2679
    %2693 = vmatprep.subr.bf16.mxu0 0
    %2694 = vmatpush1.bf16.msra.mxu0 %v2680
    %2695 = vmatprep.subr.bf16.mxu0 0
    %2696 = vmatpush1.bf16.msra.mxu0 %v2681
    %2697 = vmatprep.subr.bf16.mxu0 0
    %2698 = vmatpush1.bf16.msra.mxu0 0
    %2699 = vmatprep.subr.bf16.mxu0 0
    %2700 = vmatpush1.bf16.msra.mxu0 0
    %2701 = vmatprep.subr.bf16.mxu0 0
    %2702 = vmatpush1.bf16.msra.mxu0 0
    %2703 = vmatprep.subr.bf16.mxu0 0
    %2704 = vmatpush1.bf16.msra.mxu0 0
    %2705 = vmatprep.subr.bf16.mxu0 0
    %2706 = vmatpush1.bf16.msra.mxu0 0
    %2707 = vmatprep.subr.bf16.mxu0 0
    %2708 = vmatpush1.bf16.msra.mxu0 0
    %2709 = vmatprep.subr.bf16.mxu0 0
    %2710 = vmatpush1.bf16.msra.mxu0 0
    %2711 = vmatprep.subr.bf16.mxu0 0
    %2712 = vmatpush1.bf16.msra.mxu0 0
    %2713 = vmatprep.subr.bf16.mxu0 0
    %2714 = vmatpush1.bf16.msra.mxu0 0
    %2715 = vmatprep.subr.bf16.mxu0 0
    %2716 = vmatpush1.bf16.msra.mxu0 0
    %2717 = vmatprep.subr.bf16.mxu0 0
    %2718 = vmatpush1.bf16.msra.mxu0 0
    %2719 = vmatprep.subr.bf16.mxu0 0
    %2720 = vmatpush1.bf16.msra.mxu0 0
    %2721 = vmatprep.mubr.bf16.mxu0 0
    %2722 = vmatmul.mubr.bf16.gmra.mrb[0].mxu0 %v2687
    %v2723 = vpop.f32.mrb[0].mxu0
    %v2724 = vadd.f32 %v2660, %v2723
    %v2725 = vpop.f32.mrb[0].mxu0
    %v2726 = vpop.f32.mrb[0].mxu0
    %v2727 = vpop.f32.mrb[0].mxu0
    %2728 = vdwg.mxu0
    %vm2729 = vcmask 25600
    %2730 = vst.msk [vmem:[#allocation3] sm:$0x3] %vm2729, %v2724
    // Predicated region
    $region50: #{bilstm_dense_forward.1} parent=1 // pred_check
      _
    $region51: #{bilstm_dense_forward.1} parent=1 // pred_check_branch
      %2732 = sbr.rel (0) target = $region53
    $region52: #{bilstm_dense_forward.1} parent=1 // pred_region
      %s2734 = ssub.s32 32, 32
      %2735 = vsyncadd [#allocation4], %s2734
      %s2737 = sshll.u32 [#allocation3], 4
      %s2738 = int_to_ptr.vmem [resolvable:$true] %s2737
      %2740 = dma.vmem_to_hbm [thread:$0]  %s2738, 32, %s12, [#allocation4]
    $region53: #{bilstm_dense_forward.1} parent=1 // pred_fallthru
      _
    // Predicated region
    $region54: #{bilstm_dense_forward.1} parent=1 // pred_check
      _
    $region55: #{bilstm_dense_forward.1} parent=1 // pred_check_branch
      %2742 = sbr.rel (0) target = $region57
    $region56: #{bilstm_dense_forward.1} parent=1 // pred_region
      %2743 = dma.done [#allocation4], 32
    $region57: #{bilstm_dense_forward.1} parent=1 // pred_fallthru
      _
    %2744 = vsyncpa [#allocation4], 1

</llo_original>
